<compile_context>
chip_gen: v5e
topology: v5e:2x2
jax: 0.10.0
libtpu: 0.0.40
codegen_flags: <defaults>
</compile_context>

<pallas_src>
import functools

import numpy as np
import jax
import jax.numpy as jnp
from jax import lax
from jax.experimental import pallas as pl
from jax.experimental.pallas import tpu as pltpu

R = 28  # rows reserved per image throughout the network (28x28 MNIST input)


# --------------------------------------------------------------------------
# Single fused forward kernel
# --------------------------------------------------------------------------
def _fused_net_kernel(a0_ref, m1_ref, b1_ref, mrb1_ref, brb1_ref,
                      m2_ref, b2_ref, mrb2_ref, brb2_ref, mfc_ref, bfc_ref,
                      out_ref, xpad_ref, ppad_ref, *, batch):
    f32, bf16 = jnp.float32, jnp.bfloat16
    nr = batch * R

    def banded_conv(act, m_ref, kh, rs, pad):
        """out[r] = sum_dh act[r + rs*(dh-pad)] @ m_ref[dh] (rows zero-padded)."""
        nc = act.shape[1]
        pt = rs * pad                  # zero rows above  (spatial padding)
        pb = rs * (kh - 1 - pad)       # zero rows below
        if pt:
            xpad_ref[0:pt, 0:nc] = jnp.zeros((pt, nc), bf16)
        xpad_ref[pt:pt + nr, 0:nc] = act.astype(bf16)
        if pb:
            xpad_ref[pt + nr:pt + nr + pb, 0:nc] = jnp.zeros((pb, nc), bf16)
        acc = None
        for dh in range(kh):           # static unroll
            s = dh * rs
            part = jnp.dot(xpad_ref[s:s + nr, 0:nc], m_ref[dh],
                           preferred_element_type=f32)
            acc = part if acc is None else acc + part
        return acc

    def pool2x2(act, rd, sw):
        """2x2 max-pool: row pair differs by rd (row dilation), col pair by sw."""
        nc = act.shape[1]
        ppad_ref[0:nr, 0:nc] = act
        ppad_ref[nr:nr + rd, 0:nc] = jnp.zeros((rd, nc), f32)
        rmax = jnp.maximum(ppad_ref[0:nr, 0:nc], ppad_ref[rd:rd + nr, 0:nc])
        return jnp.maximum(rmax[:, 0:nc - sw], rmax[:, sw:nc])

    def keep_valid_rows(act, step, limit):
        """Zero non-valid (dilated/garbage) rows; required before padded convs."""
        r = lax.broadcasted_iota(jnp.int32, act.shape, 0) % R
        return jnp.where((r % step == 0) & (r < limit), act, 0.0)

    # conv1 (5x5, 1->10) + ReLU                                   -> (nr, 240)
    a1 = jnp.maximum(banded_conv(a0_ref[...], m1_ref, 5, 1, 0) + b1_ref[...], 0.0)
    # maxpool 2x2 -> 12x12x10  (rows dilated x2, col stride 20)   -> (nr, 230)
    p1 = keep_valid_rows(pool2x2(a1, 1, 10), 2, 24)
    # rb1: relu(conv(x) + x)   (3x3, pad 1, 10->10)               -> (nr, 230)
    a_rb1 = jnp.maximum(
        banded_conv(p1, mrb1_ref, 3, 2, 1) + brb1_ref[...] + p1, 0.0)
    # conv2 (5x5, 10->20) + ReLU                                  -> (nr, 160)
    a2 = jnp.maximum(banded_conv(a_rb1, m2_ref, 5, 2, 0) + b2_ref[...], 0.0)
    # maxpool 2x2 -> 4x4x20  (rows dilated x4, col stride 40)     -> (nr, 140)
    p2 = keep_valid_rows(pool2x2(a2, 2, 20), 4, 16)
    # rb2: relu(conv(x) + x)   (3x3, pad 1, 20->20)               -> (nr, 140)
    a_rb2 = jnp.maximum(
        banded_conv(p2, mrb2_ref, 3, 4, 1) + brb2_ref[...] + p2, 0.0)
    # fc (320 -> 10), expressed as a full-spatial "conv" (kh=4)   -> (nr, 10)
    zfc = banded_conv(a_rb2, mfc_ref, 4, 4, 0)
    # pick row b*R of each image block -> (batch, 10) logits
    bi = lax.broadcasted_iota(jnp.int32, (batch, nr), 0)
    ri = lax.broadcasted_iota(jnp.int32, (batch, nr), 1)
    sel = (ri == bi * R).astype(f32)
    out_ref[...] = jnp.dot(sel, zfc, preferred_element_type=f32) + bfc_ref[...]


# --------------------------------------------------------------------------
# Forward wrapper (one pallas_call; only input reshape happens in XLA)
# --------------------------------------------------------------------------
def _const_spec(shape):
    nd = len(shape)
    return pl.BlockSpec(shape, lambda i, _nd=nd: (0,) * _nd)


def net_forward(packed, x_nchw):
    """x_nchw: (B, 1, 28, 28) float32 -> logits (B, 10)."""
    batch = x_nchw.shape[0]
    assert x_nchw.shape[1:] == (1, 28, 28), x_nchw.shape
    # Tile the batch across a "parallel" grid axis when cleanly divisible
    # (megacore on v7x); otherwise a single resident block.
    block_batch = 8 if (batch % 8 == 0) else batch
    grid_n = batch // block_batch
    nr_blk = block_batch * R

    a0 = x_nchw.reshape(batch * R, R).astype(jnp.float32)   # (B*28, 28)
    operands = (a0, packed["m1"], packed["b1"], packed["mrb1"], packed["brb1"],
                packed["m2"], packed["b2"], packed["mrb2"], packed["brb2"],
                packed["mfc"], packed["bfc"])

    in_specs = [pl.BlockSpec((nr_blk, R), lambda i: (i, 0))]
    in_specs += [_const_spec(o.shape) for o in operands[1:]]

    return pl.pallas_call(
        functools.partial(_fused_net_kernel, batch=block_batch),
        out_shape=jax.ShapeDtypeStruct((batch, 10), jnp.float32),
        grid=(grid_n,),
        in_specs=in_specs,
        out_specs=pl.BlockSpec((block_batch, 10), lambda i: (i, 0)),
        scratch_shapes=[pltpu.VMEM((nr_blk + 12, 240), jnp.bfloat16),
                        pltpu.VMEM((nr_blk + 2, 240), jnp.float32)],
        compiler_params=pltpu.CompilerParams(
            dimension_semantics=("parallel",)),
    )(*operands)


# --------------------------------------------------------------------------
# Parameters: PyTorch-layout init + one-time host-side packing
# --------------------------------------------------------------------------
def init_params(key):
    def conv_init(k, cout, cin, ksz):
        k1, k2 = jax.random.split(k)
        bound = 1.0 / (cin * ksz * ksz) ** 0.5
        w = jax.random.uniform(k1, (cout, cin, ksz, ksz), jnp.float32, -bound, bound)
        b = jax.random.uniform(k2, (cout,), jnp.float32, -bound, bound)
        return w, b

    keys = jax.random.split(key, 7)
    params = {
        "conv1": conv_init(keys[0], 10, 1, 5),
        "conv2": conv_init(keys[1], 20, 10, 5),
        # rb*.conv1 results are dead in the reference forward; kept only for
        # parameter-shape fidelity.
        "rb1_conv1": conv_init(keys[2], 10, 10, 3),
        "rb1_conv2": conv_init(keys[3], 10, 10, 3),
        "rb2_conv1": conv_init(keys[4], 20, 20, 3),
        "rb2_conv2": conv_init(keys[5], 20, 20, 3),
    }
    k1, k2 = jax.random.split(keys[6])
    bound = 1.0 / 320.0 ** 0.5
    fw = jax.random.uniform(k1, (10, 320), jnp.float32, -bound, bound)
    fb = jax.random.uniform(k2, (10,), jnp.float32, -bound, bound)
    params["fc"] = (fw, fb)
    return params


def _banded_conv_mats(w_oihw, *, s_in, w_in, s_out, w_out, pad, n_in, n_out):
    """M[dh][s_in*w_in_idx + ci, s_out*w_out_idx + co] = W[co, ci, dh, dw]."""
    w = np.asarray(w_oihw, np.float32)             # (cout, cin, kh, kw)
    cout, cin, kh, kw = w.shape
    m = np.zeros((kh, n_in, n_out), np.float32)
    for dh in range(kh):
        for dw in range(kw):
            blk = w[:, :, dh, dw].T                # (cin, cout)
            for wo in range(w_out):
                wi = wo + dw - pad
                if 0 <= wi < w_in:
                    m[dh, s_in * wi:s_in * wi + cin,
                      s_out * wo:s_out * wo + cout] = blk
    return m


def _bias_row(b, *, s_out, w_out, n_out):
    b = np.asarray(b, np.float32)
    r = np.zeros((1, n_out), np.float32)
    for wo in range(w_out):
        r[0, s_out * wo:s_out * wo + b.shape[0]] = b
    return r


def _fc_mats(w_fc, *, c, h, w, s_in, n_in):
    """fc as a full-spatial conv; NCHW flatten order c*(h*w) + dh*w + ww."""
    wf = np.asarray(w_fc, np.float32)              # (10, c*h*w)
    m = np.zeros((h, n_in, wf.shape[0]), np.float32)
    for dh in range(h):
        for ww in range(w):
            for cc in range(c):
                m[dh, s_in * ww + cc, :] = wf[:, cc * h * w + dh * w + ww]
    return m


def pack_params(params):
    """Pre-expand weights into banded matmul operands (runs once, host side)."""
    w1, b1 = params["conv1"]
    wr1, br1 = params["rb1_conv2"]
    w2, b2 = params["conv2"]
    wr2, br2 = params["rb2_conv2"]
    wfc, bfc = params["fc"]
    packed_np = {
        "m1": _banded_conv_mats(w1, s_in=1, w_in=28, s_out=10, w_out=24,
                                pad=0, n_in=28, n_out=240),
        "b1": _bias_row(b1, s_out=10, w_out=24, n_out=240),
        "mrb1": _banded_conv_mats(wr1, s_in=20, w_in=12, s_out=20, w_out=12,
                                  pad=1, n_in=230, n_out=230),
        "brb1": _bias_row(br1, s_out=20, w_out=12, n_out=230),
        "m2": _banded_conv_mats(w2, s_in=20, w_in=12, s_out=20, w_out=8,
                                pad=0, n_in=230, n_out=160),
        "b2": _bias_row(b2, s_out=20, w_out=8, n_out=160),
        "mrb2": _banded_conv_mats(wr2, s_in=40, w_in=4, s_out=40, w_out=4,
                                  pad=1, n_in=140, n_out=140),
        "brb2": _bias_row(br2, s_out=40, w_out=4, n_out=140),
        "mfc": _fc_mats(wfc, c=20, h=4, w=4, s_in=40, n_in=140),
        "bfc": np.asarray(bfc, np.float32).reshape(1, 10),
    }
    out = {}
    for k, v in packed_np.items():
        dt = jnp.bfloat16 if k.startswith("m") else jnp.float32
        out[k] = jnp.asarray(v, dt)
    return out


# --------------------------------------------------------------------------
if __name__ == "__main__":
    key = jax.random.PRNGKey(0)
    pkey, xkey = jax.random.split(key)
    params = init_params(pkey)
    packed = pack_params(params)      # one-time weight re-layout (hoisted)
    # MNIST-shaped input: 28x28 is required so that flatten == 320 (= 20*4*4).
    x = jax.random.normal(xkey, (2, 1, 28, 28), jnp.float32)
    fwd = jax.jit(net_forward)
    out = jax.block_until_ready(fwd(packed, x))
    assert out.shape == (2, 10), out.shape
    print("KERNEL_OK")
</pallas_src>

<mosaic_0001>
module attributes {stable_mosaic.version = 11 : i64} {
  func.func @_fused_net_kernel(%arg0: i32, %arg1: memref<56x28xf32, #tpu.memory_space<vmem>>, %arg2: memref<5x28x240xbf16, #tpu.memory_space<vmem>>, %arg3: memref<1x240xf32, #tpu.memory_space<vmem>>, %arg4: memref<3x230x230xbf16, #tpu.memory_space<vmem>>, %arg5: memref<1x230xf32, #tpu.memory_space<vmem>>, %arg6: memref<5x230x160xbf16, #tpu.memory_space<vmem>>, %arg7: memref<1x160xf32, #tpu.memory_space<vmem>>, %arg8: memref<3x140x140xbf16, #tpu.memory_space<vmem>>, %arg9: memref<1x140xf32, #tpu.memory_space<vmem>>, %arg10: memref<4x140x10xbf16, #tpu.memory_space<vmem>>, %arg11: memref<1x10xf32, #tpu.memory_space<vmem>>, %arg12: memref<2x10xf32, #tpu.memory_space<vmem>>, %arg13: memref<68x240xbf16, #tpu.memory_space<vmem>>, %arg14: memref<58x240xf32, #tpu.memory_space<vmem>>) attributes {dimension_semantics = [#tpu.dimension_semantics<parallel>], iteration_bounds = array<i64: 1>, scalar_prefetch = 0 : i64, scratch_operands = 2 : i64, tpu.core_type = #tpu.core_type<tc>, window_params = [{transform_indices = @transform_0, window_bounds = array<i64: 56, 28>}, {pipeline_mode = #tpu.pipeline_mode<synchronous>, transform_indices = @transform_1, window_bounds = array<i64: 5, 28, 240>}, {pipeline_mode = #tpu.pipeline_mode<synchronous>, transform_indices = @transform_2, window_bounds = array<i64: 1, 240>}, {pipeline_mode = #tpu.pipeline_mode<synchronous>, transform_indices = @transform_3, window_bounds = array<i64: 3, 230, 230>}, {pipeline_mode = #tpu.pipeline_mode<synchronous>, transform_indices = @transform_4, window_bounds = array<i64: 1, 230>}, {pipeline_mode = #tpu.pipeline_mode<synchronous>, transform_indices = @transform_5, window_bounds = array<i64: 5, 230, 160>}, {pipeline_mode = #tpu.pipeline_mode<synchronous>, transform_indices = @transform_6, window_bounds = array<i64: 1, 160>}, {pipeline_mode = #tpu.pipeline_mode<synchronous>, transform_indices = @transform_7, window_bounds = array<i64: 3, 140, 140>}, {pipeline_mode = #tpu.pipeline_mode<synchronous>, transform_indices = @transform_8, window_bounds = array<i64: 1, 140>}, {pipeline_mode = #tpu.pipeline_mode<synchronous>, transform_indices = @transform_9, window_bounds = array<i64: 4, 140, 10>}, {pipeline_mode = #tpu.pipeline_mode<synchronous>, transform_indices = @transform_10, window_bounds = array<i64: 1, 10>}, {transform_indices = @transform_11, window_bounds = array<i64: 2, 10>}]} {
    %c0 = arith.constant 0 : index
    %c0_0 = arith.constant 0 : index
    %0 = vector.load %arg1[%c0, %c0_0] : memref<56x28xf32, #tpu.memory_space<vmem>>, vector<56x28xf32>
    %1 = arith.truncf %0 : vector<56x28xf32> to vector<56x28xbf16>
    %c0_1 = arith.constant 0 : index
    %c0_2 = arith.constant 0 : index
    %2 = vector.load %arg13[%c0_1, %c0_2] : memref<68x240xbf16, #tpu.memory_space<vmem>>, vector<56x28xbf16>
    tpu.vector_store %arg13[%c0_1, %c0_2], %1 {strides = array<i32>} : memref<68x240xbf16, #tpu.memory_space<vmem>>, vector<56x28xbf16>,
    %cst = arith.constant 0.000000e+00 : bf16
    %3 = vector.broadcast %cst : bf16 to vector<4x28xbf16>
    %c56 = arith.constant 56 : index
    %c0_3 = arith.constant 0 : index
    %4 = vector.load %arg13[%c56, %c0_3] : memref<68x240xbf16, #tpu.memory_space<vmem>>, vector<4x28xbf16>
    tpu.vector_store %arg13[%c56, %c0_3], %3 {strides = array<i32>} : memref<68x240xbf16, #tpu.memory_space<vmem>>, vector<4x28xbf16>,
    %c0_4 = arith.constant 0 : index
    %c0_5 = arith.constant 0 : index
    %5 = vector.load %arg13[%c0_4, %c0_5] : memref<68x240xbf16, #tpu.memory_space<vmem>>, vector<56x28xbf16>
    %c0_6 = arith.constant 0 : index
    %c0_7 = arith.constant 0 : index
    %c0_8 = arith.constant 0 : index
    %6 = vector.load %arg2[%c0_6, %c0_7, %c0_8] : memref<5x28x240xbf16, #tpu.memory_space<vmem>>, vector<1x28x240xbf16>
    %7 = vector.shape_cast %6 : vector<1x28x240xbf16> to vector<28x240xbf16>
    %cst_9 = arith.constant dense<0.000000e+00> : vector<56x240xf32>
    %8 = tpu.matmul %5, %7, %cst_9 {dimension_numbers = #tpu.dot_dimension_numbers<[1], [0], [0], [1], [0, 0, 1, 1], [], []>} : vector<56x28xbf16>, vector<28x240xbf16>, vector<56x240xf32> -> vector<56x240xf32>
    %c1 = arith.constant 1 : index
    %c0_10 = arith.constant 0 : index
    %9 = vector.load %arg13[%c1, %c0_10] : memref<68x240xbf16, #tpu.memory_space<vmem>>, vector<56x28xbf16>
    %c1_11 = arith.constant 1 : index
    %c0_12 = arith.constant 0 : index
    %c0_13 = arith.constant 0 : index
    %10 = vector.load %arg2[%c1_11, %c0_12, %c0_13] : memref<5x28x240xbf16, #tpu.memory_space<vmem>>, vector<1x28x240xbf16>
    %11 = vector.shape_cast %10 : vector<1x28x240xbf16> to vector<28x240xbf16>
    %cst_14 = arith.constant dense<0.000000e+00> : vector<56x240xf32>
    %12 = tpu.matmul %9, %11, %cst_14 {dimension_numbers = #tpu.dot_dimension_numbers<[1], [0], [0], [1], [0, 0, 1, 1], [], []>} : vector<56x28xbf16>, vector<28x240xbf16>, vector<56x240xf32> -> vector<56x240xf32>
    %13 = arith.addf %8, %12 : vector<56x240xf32>
    %c2 = arith.constant 2 : index
    %c0_15 = arith.constant 0 : index
    %14 = vector.load %arg13[%c2, %c0_15] : memref<68x240xbf16, #tpu.memory_space<vmem>>, vector<56x28xbf16>
    %c2_16 = arith.constant 2 : index
    %c0_17 = arith.constant 0 : index
    %c0_18 = arith.constant 0 : index
    %15 = vector.load %arg2[%c2_16, %c0_17, %c0_18] : memref<5x28x240xbf16, #tpu.memory_space<vmem>>, vector<1x28x240xbf16>
    %16 = vector.shape_cast %15 : vector<1x28x240xbf16> to vector<28x240xbf16>
    %cst_19 = arith.constant dense<0.000000e+00> : vector<56x240xf32>
    %17 = tpu.matmul %14, %16, %cst_19 {dimension_numbers = #tpu.dot_dimension_numbers<[1], [0], [0], [1], [0, 0, 1, 1], [], []>} : vector<56x28xbf16>, vector<28x240xbf16>, vector<56x240xf32> -> vector<56x240xf32>
    %18 = arith.addf %13, %17 : vector<56x240xf32>
    %c3 = arith.constant 3 : index
    %c0_20 = arith.constant 0 : index
    %19 = vector.load %arg13[%c3, %c0_20] : memref<68x240xbf16, #tpu.memory_space<vmem>>, vector<56x28xbf16>
    %c3_21 = arith.constant 3 : index
    %c0_22 = arith.constant 0 : index
    %c0_23 = arith.constant 0 : index
    %20 = vector.load %arg2[%c3_21, %c0_22, %c0_23] : memref<5x28x240xbf16, #tpu.memory_space<vmem>>, vector<1x28x240xbf16>
    %21 = vector.shape_cast %20 : vector<1x28x240xbf16> to vector<28x240xbf16>
    %cst_24 = arith.constant dense<0.000000e+00> : vector<56x240xf32>
    %22 = tpu.matmul %19, %21, %cst_24 {dimension_numbers = #tpu.dot_dimension_numbers<[1], [0], [0], [1], [0, 0, 1, 1], [], []>} : vector<56x28xbf16>, vector<28x240xbf16>, vector<56x240xf32> -> vector<56x240xf32>
    %23 = arith.addf %18, %22 : vector<56x240xf32>
    %c4 = arith.constant 4 : index
    %c0_25 = arith.constant 0 : index
    %24 = vector.load %arg13[%c4, %c0_25] : memref<68x240xbf16, #tpu.memory_space<vmem>>, vector<56x28xbf16>
    %c4_26 = arith.constant 4 : index
    %c0_27 = arith.constant 0 : index
    %c0_28 = arith.constant 0 : index
    %25 = vector.load %arg2[%c4_26, %c0_27, %c0_28] : memref<5x28x240xbf16, #tpu.memory_space<vmem>>, vector<1x28x240xbf16>
    %26 = vector.shape_cast %25 : vector<1x28x240xbf16> to vector<28x240xbf16>
    %cst_29 = arith.constant dense<0.000000e+00> : vector<56x240xf32>
    %27 = tpu.matmul %24, %26, %cst_29 {dimension_numbers = #tpu.dot_dimension_numbers<[1], [0], [0], [1], [0, 0, 1, 1], [], []>} : vector<56x28xbf16>, vector<28x240xbf16>, vector<56x240xf32> -> vector<56x240xf32>
    %28 = arith.addf %23, %27 : vector<56x240xf32>
    %c0_30 = arith.constant 0 : index
    %c0_31 = arith.constant 0 : index
    %29 = vector.load %arg3[%c0_30, %c0_31] : memref<1x240xf32, #tpu.memory_space<vmem>>, vector<1x240xf32>
    %30 = vector.broadcast %29 : vector<1x240xf32> to vector<56x240xf32>
    %31 = arith.addf %28, %30 : vector<56x240xf32>
    %cst_32 = arith.constant 0.000000e+00 : f32
    %32 = vector.broadcast %cst_32 : f32 to vector<56x240xf32>
    %33 = arith.maximumf %31, %32 : vector<56x240xf32>
    %c0_33 = arith.constant 0 : index
    %c0_34 = arith.constant 0 : index
    %34 = vector.load %arg14[%c0_33, %c0_34] : memref<58x240xf32, #tpu.memory_space<vmem>>, vector<56x240xf32>
    tpu.vector_store %arg14[%c0_33, %c0_34], %33 {strides = array<i32>} : memref<58x240xf32, #tpu.memory_space<vmem>>, vector<56x240xf32>,
    %cst_35 = arith.constant 0.000000e+00 : f32
    %35 = vector.broadcast %cst_35 : f32 to vector<1x240xf32>
    %c56_36 = arith.constant 56 : index
    %c0_37 = arith.constant 0 : index
    %36 = vector.load %arg14[%c56_36, %c0_37] : memref<58x240xf32, #tpu.memory_space<vmem>>, vector<1x240xf32>
    tpu.vector_store %arg14[%c56_36, %c0_37], %35 {strides = array<i32>} : memref<58x240xf32, #tpu.memory_space<vmem>>, vector<1x240xf32>,
    %c0_38 = arith.constant 0 : index
    %c0_39 = arith.constant 0 : index
    %37 = vector.load %arg14[%c0_38, %c0_39] : memref<58x240xf32, #tpu.memory_space<vmem>>, vector<56x240xf32>
    %c1_40 = arith.constant 1 : index
    %c0_41 = arith.constant 0 : index
    %38 = vector.load %arg14[%c1_40, %c0_41] : memref<58x240xf32, #tpu.memory_space<vmem>>, vector<56x240xf32>
    %39 = arith.maximumf %37, %38 : vector<56x240xf32>
    %40 = vector.extract_strided_slice %39 {offsets = [0, 0], sizes = [56, 230], strides = [1, 1]} : vector<56x240xf32> to vector<56x230xf32>
    %41 = vector.extract_strided_slice %39 {offsets = [0, 10], sizes = [56, 230], strides = [1, 1]} : vector<56x240xf32> to vector<56x230xf32>
    %42 = arith.maximumf %40, %41 : vector<56x230xf32>
    %43 = tpu.iota {dimensions = array<i32: 0>} : vector<56x230xi32>
    %c28_i32 = arith.constant 28 : i32
    %c0_i32 = arith.constant 0 : i32
    %44 = arith.cmpi eq, %c28_i32, %c0_i32 : i32
    %c1_i32 = arith.constant 1 : i32
    %45 = arith.select %44, %c1_i32, %c28_i32 : i32
    %46 = vector.broadcast %45 : i32 to vector<56x230xi32>
    %47 = arith.remsi %43, %46 : vector<56x230xi32>
    %c0_i32_42 = arith.constant 0 : i32
    %48 = vector.broadcast %c0_i32_42 : i32 to vector<56x230xi32>
    %49 = arith.cmpi ne, %47, %48 : vector<56x230xi32>
    %c0_i32_43 = arith.constant 0 : i32
    %50 = vector.broadcast %c0_i32_43 : i32 to vector<56x230xi32>
    %51 = arith.cmpi slt, %47, %50 : vector<56x230xi32>
    %c0_i32_44 = arith.constant 0 : i32
    %52 = arith.cmpi slt, %45, %c0_i32_44 : i32
    %53 = vector.broadcast %52 : i1 to vector<56x230xi1>
    %54 = vector.broadcast %53 : vector<56x230xi1> to vector<56x230xi1>
    %55 = arith.xori %51, %54 : vector<56x230xi1>
    %56 = arith.andi %55, %49 : vector<56x230xi1>
    %57 = vector.broadcast %45 : i32 to vector<56x230xi32>
    %58 = arith.addi %47, %57 : vector<56x230xi32>
    %59 = arith.select %56, %58, %47 : vector<56x230xi1>, vector<56x230xi32>
    %c2_i32 = arith.constant 2 : i32
    %c0_i32_45 = arith.constant 0 : i32
    %60 = arith.cmpi eq, %c2_i32, %c0_i32_45 : i32
    %c1_i32_46 = arith.constant 1 : i32
    %61 = arith.select %60, %c1_i32_46, %c2_i32 : i32
    %62 = vector.broadcast %61 : i32 to vector<56x230xi32>
    %63 = arith.remsi %59, %62 : vector<56x230xi32>
    %c0_i32_47 = arith.constant 0 : i32
    %64 = vector.broadcast %c0_i32_47 : i32 to vector<56x230xi32>
    %65 = arith.cmpi ne, %63, %64 : vector<56x230xi32>
    %c0_i32_48 = arith.constant 0 : i32
    %66 = vector.broadcast %c0_i32_48 : i32 to vector<56x230xi32>
    %67 = arith.cmpi slt, %63, %66 : vector<56x230xi32>
    %c0_i32_49 = arith.constant 0 : i32
    %68 = arith.cmpi slt, %61, %c0_i32_49 : i32
    %69 = vector.broadcast %68 : i1 to vector<56x230xi1>
    %70 = vector.broadcast %69 : vector<56x230xi1> to vector<56x230xi1>
    %71 = arith.xori %67, %70 : vector<56x230xi1>
    %72 = arith.andi %71, %65 : vector<56x230xi1>
    %73 = vector.broadcast %61 : i32 to vector<56x230xi32>
    %74 = arith.addi %63, %73 : vector<56x230xi32>
    %75 = arith.select %72, %74, %63 : vector<56x230xi1>, vector<56x230xi32>
    %c0_i32_50 = arith.constant 0 : i32
    %76 = vector.broadcast %c0_i32_50 : i32 to vector<56x230xi32>
    %77 = arith.cmpi eq, %75, %76 : vector<56x230xi32>
    %c24_i32 = arith.constant 24 : i32
    %78 = vector.broadcast %c24_i32 : i32 to vector<56x230xi32>
    %79 = arith.cmpi slt, %59, %78 : vector<56x230xi32>
    %80 = arith.andi %77, %79 : vector<56x230xi1>
    %cst_51 = arith.constant 0.000000e+00 : f32
    %81 = vector.broadcast %cst_51 : f32 to vector<56x230xf32>
    %82 = arith.select %80, %42, %81 : vector<56x230xi1>, vector<56x230xf32>
    %cst_52 = arith.constant 0.000000e+00 : bf16
    %83 = vector.broadcast %cst_52 : bf16 to vector<2x230xbf16>
    %c0_53 = arith.constant 0 : index
    %c0_54 = arith.constant 0 : index
    %84 = vector.load %arg13[%c0_53, %c0_54] : memref<68x240xbf16, #tpu.memory_space<vmem>>, vector<2x230xbf16>
    tpu.vector_store %arg13[%c0_53, %c0_54], %83 {strides = array<i32>} : memref<68x240xbf16, #tpu.memory_space<vmem>>, vector<2x230xbf16>,
    %85 = arith.truncf %82 : vector<56x230xf32> to vector<56x230xbf16>
    %c2_55 = arith.constant 2 : index
    %c0_56 = arith.constant 0 : index
    %86 = vector.load %arg13[%c2_55, %c0_56] : memref<68x240xbf16, #tpu.memory_space<vmem>>, vector<56x230xbf16>
    tpu.vector_store %arg13[%c2_55, %c0_56], %85 {strides = array<i32>} : memref<68x240xbf16, #tpu.memory_space<vmem>>, vector<56x230xbf16>,
    %cst_57 = arith.constant 0.000000e+00 : bf16
    %87 = vector.broadcast %cst_57 : bf16 to vector<2x230xbf16>
    %c58 = arith.constant 58 : index
    %c0_58 = arith.constant 0 : index
    %88 = vector.load %arg13[%c58, %c0_58] : memref<68x240xbf16, #tpu.memory_space<vmem>>, vector<2x230xbf16>
    tpu.vector_store %arg13[%c58, %c0_58], %87 {strides = array<i32>} : memref<68x240xbf16, #tpu.memory_space<vmem>>, vector<2x230xbf16>,
    %c0_59 = arith.constant 0 : index
    %c0_60 = arith.constant 0 : index
    %89 = vector.load %arg13[%c0_59, %c0_60] : memref<68x240xbf16, #tpu.memory_space<vmem>>, vector<56x230xbf16>
    %c0_61 = arith.constant 0 : index
    %c0_62 = arith.constant 0 : index
    %c0_63 = arith.constant 0 : index
    %90 = vector.load %arg4[%c0_61, %c0_62, %c0_63] : memref<3x230x230xbf16, #tpu.memory_space<vmem>>, vector<1x230x230xbf16>
    %91 = vector.shape_cast %90 : vector<1x230x230xbf16> to vector<230x230xbf16>
    %cst_64 = arith.constant dense<0.000000e+00> : vector<56x230xf32>
    %92 = tpu.matmul %89, %91, %cst_64 {dimension_numbers = #tpu.dot_dimension_numbers<[1], [0], [0], [1], [0, 0, 1, 1], [], []>} : vector<56x230xbf16>, vector<230x230xbf16>, vector<56x230xf32> -> vector<56x230xf32>
    %c2_65 = arith.constant 2 : index
    %c0_66 = arith.constant 0 : index
    %93 = vector.load %arg13[%c2_65, %c0_66] : memref<68x240xbf16, #tpu.memory_space<vmem>>, vector<56x230xbf16>
    %c1_67 = arith.constant 1 : index
    %c0_68 = arith.constant 0 : index
    %c0_69 = arith.constant 0 : index
    %94 = vector.load %arg4[%c1_67, %c0_68, %c0_69] : memref<3x230x230xbf16, #tpu.memory_space<vmem>>, vector<1x230x230xbf16>
    %95 = vector.shape_cast %94 : vector<1x230x230xbf16> to vector<230x230xbf16>
    %cst_70 = arith.constant dense<0.000000e+00> : vector<56x230xf32>
    %96 = tpu.matmul %93, %95, %cst_70 {dimension_numbers = #tpu.dot_dimension_numbers<[1], [0], [0], [1], [0, 0, 1, 1], [], []>} : vector<56x230xbf16>, vector<230x230xbf16>, vector<56x230xf32> -> vector<56x230xf32>
    %97 = arith.addf %92, %96 : vector<56x230xf32>
    %c4_71 = arith.constant 4 : index
    %c0_72 = arith.constant 0 : index
    %98 = vector.load %arg13[%c4_71, %c0_72] : memref<68x240xbf16, #tpu.memory_space<vmem>>, vector<56x230xbf16>
    %c2_73 = arith.constant 2 : index
    %c0_74 = arith.constant 0 : index
    %c0_75 = arith.constant 0 : index
    %99 = vector.load %arg4[%c2_73, %c0_74, %c0_75] : memref<3x230x230xbf16, #tpu.memory_space<vmem>>, vector<1x230x230xbf16>
    %100 = vector.shape_cast %99 : vector<1x230x230xbf16> to vector<230x230xbf16>
    %cst_76 = arith.constant dense<0.000000e+00> : vector<56x230xf32>
    %101 = tpu.matmul %98, %100, %cst_76 {dimension_numbers = #tpu.dot_dimension_numbers<[1], [0], [0], [1], [0, 0, 1, 1], [], []>} : vector<56x230xbf16>, vector<230x230xbf16>, vector<56x230xf32> -> vector<56x230xf32>
    %102 = arith.addf %97, %101 : vector<56x230xf32>
    %c0_77 = arith.constant 0 : index
    %c0_78 = arith.constant 0 : index
    %103 = vector.load %arg5[%c0_77, %c0_78] : memref<1x230xf32, #tpu.memory_space<vmem>>, vector<1x230xf32>
    %104 = vector.broadcast %103 : vector<1x230xf32> to vector<56x230xf32>
    %105 = arith.addf %102, %104 : vector<56x230xf32>
    %106 = arith.addf %105, %82 : vector<56x230xf32>
    %cst_79 = arith.constant 0.000000e+00 : f32
    %107 = vector.broadcast %cst_79 : f32 to vector<56x230xf32>
    %108 = arith.maximumf %106, %107 : vector<56x230xf32>
    %109 = arith.truncf %108 : vector<56x230xf32> to vector<56x230xbf16>
    %c0_80 = arith.constant 0 : index
    %c0_81 = arith.constant 0 : index
    %110 = vector.load %arg13[%c0_80, %c0_81] : memref<68x240xbf16, #tpu.memory_space<vmem>>, vector<56x230xbf16>
    tpu.vector_store %arg13[%c0_80, %c0_81], %109 {strides = array<i32>} : memref<68x240xbf16, #tpu.memory_space<vmem>>, vector<56x230xbf16>,
    %cst_82 = arith.constant 0.000000e+00 : bf16
    %111 = vector.broadcast %cst_82 : bf16 to vector<8x230xbf16>
    %c56_83 = arith.constant 56 : index
    %c0_84 = arith.constant 0 : index
    %112 = vector.load %arg13[%c56_83, %c0_84] : memref<68x240xbf16, #tpu.memory_space<vmem>>, vector<8x230xbf16>
    tpu.vector_store %arg13[%c56_83, %c0_84], %111 {strides = array<i32>} : memref<68x240xbf16, #tpu.memory_space<vmem>>, vector<8x230xbf16>,
    %c0_85 = arith.constant 0 : index
    %c0_86 = arith.constant 0 : index
    %113 = vector.load %arg13[%c0_85, %c0_86] : memref<68x240xbf16, #tpu.memory_space<vmem>>, vector<56x230xbf16>
    %c0_87 = arith.constant 0 : index
    %c0_88 = arith.constant 0 : index
    %c0_89 = arith.constant 0 : index
    %114 = vector.load %arg6[%c0_87, %c0_88, %c0_89] : memref<5x230x160xbf16, #tpu.memory_space<vmem>>, vector<1x230x160xbf16>
    %115 = vector.shape_cast %114 : vector<1x230x160xbf16> to vector<230x160xbf16>
    %cst_90 = arith.constant dense<0.000000e+00> : vector<56x160xf32>
    %116 = tpu.matmul %113, %115, %cst_90 {dimension_numbers = #tpu.dot_dimension_numbers<[1], [0], [0], [1], [0, 0, 1, 1], [], []>} : vector<56x230xbf16>, vector<230x160xbf16>, vector<56x160xf32> -> vector<56x160xf32>
    %c2_91 = arith.constant 2 : index
    %c0_92 = arith.constant 0 : index
    %117 = vector.load %arg13[%c2_91, %c0_92] : memref<68x240xbf16, #tpu.memory_space<vmem>>, vector<56x230xbf16>
    %c1_93 = arith.constant 1 : index
    %c0_94 = arith.constant 0 : index
    %c0_95 = arith.constant 0 : index
    %118 = vector.load %arg6[%c1_93, %c0_94, %c0_95] : memref<5x230x160xbf16, #tpu.memory_space<vmem>>, vector<1x230x160xbf16>
    %119 = vector.shape_cast %118 : vector<1x230x160xbf16> to vector<230x160xbf16>
    %cst_96 = arith.constant dense<0.000000e+00> : vector<56x160xf32>
    %120 = tpu.matmul %117, %119, %cst_96 {dimension_numbers = #tpu.dot_dimension_numbers<[1], [0], [0], [1], [0, 0, 1, 1], [], []>} : vector<56x230xbf16>, vector<230x160xbf16>, vector<56x160xf32> -> vector<56x160xf32>
    %121 = arith.addf %116, %120 : vector<56x160xf32>
    %c4_97 = arith.constant 4 : index
    %c0_98 = arith.constant 0 : index
    %122 = vector.load %arg13[%c4_97, %c0_98] : memref<68x240xbf16, #tpu.memory_space<vmem>>, vector<56x230xbf16>
    %c2_99 = arith.constant 2 : index
    %c0_100 = arith.constant 0 : index
    %c0_101 = arith.constant 0 : index
    %123 = vector.load %arg6[%c2_99, %c0_100, %c0_101] : memref<5x230x160xbf16, #tpu.memory_space<vmem>>, vector<1x230x160xbf16>
    %124 = vector.shape_cast %123 : vector<1x230x160xbf16> to vector<230x160xbf16>
    %cst_102 = arith.constant dense<0.000000e+00> : vector<56x160xf32>
    %125 = tpu.matmul %122, %124, %cst_102 {dimension_numbers = #tpu.dot_dimension_numbers<[1], [0], [0], [1], [0, 0, 1, 1], [], []>} : vector<56x230xbf16>, vector<230x160xbf16>, vector<56x160xf32> -> vector<56x160xf32>
    %126 = arith.addf %121, %125 : vector<56x160xf32>
    %c6 = arith.constant 6 : index
    %c0_103 = arith.constant 0 : index
    %127 = vector.load %arg13[%c6, %c0_103] : memref<68x240xbf16, #tpu.memory_space<vmem>>, vector<56x230xbf16>
    %c3_104 = arith.constant 3 : index
    %c0_105 = arith.constant 0 : index
    %c0_106 = arith.constant 0 : index
    %128 = vector.load %arg6[%c3_104, %c0_105, %c0_106] : memref<5x230x160xbf16, #tpu.memory_space<vmem>>, vector<1x230x160xbf16>
    %129 = vector.shape_cast %128 : vector<1x230x160xbf16> to vector<230x160xbf16>
    %cst_107 = arith.constant dense<0.000000e+00> : vector<56x160xf32>
    %130 = tpu.matmul %127, %129, %cst_107 {dimension_numbers = #tpu.dot_dimension_numbers<[1], [0], [0], [1], [0, 0, 1, 1], [], []>} : vector<56x230xbf16>, vector<230x160xbf16>, vector<56x160xf32> -> vector<56x160xf32>
    %131 = arith.addf %126, %130 : vector<56x160xf32>
    %c8 = arith.constant 8 : index
    %c0_108 = arith.constant 0 : index
    %132 = vector.load %arg13[%c8, %c0_108] : memref<68x240xbf16, #tpu.memory_space<vmem>>, vector<56x230xbf16>
    %c4_109 = arith.constant 4 : index
    %c0_110 = arith.constant 0 : index
    %c0_111 = arith.constant 0 : index
    %133 = vector.load %arg6[%c4_109, %c0_110, %c0_111] : memref<5x230x160xbf16, #tpu.memory_space<vmem>>, vector<1x230x160xbf16>
    %134 = vector.shape_cast %133 : vector<1x230x160xbf16> to vector<230x160xbf16>
    %cst_112 = arith.constant dense<0.000000e+00> : vector<56x160xf32>
    %135 = tpu.matmul %132, %134, %cst_112 {dimension_numbers = #tpu.dot_dimension_numbers<[1], [0], [0], [1], [0, 0, 1, 1], [], []>} : vector<56x230xbf16>, vector<230x160xbf16>, vector<56x160xf32> -> vector<56x160xf32>
    %136 = arith.addf %131, %135 : vector<56x160xf32>
    %c0_113 = arith.constant 0 : index
    %c0_114 = arith.constant 0 : index
    %137 = vector.load %arg7[%c0_113, %c0_114] : memref<1x160xf32, #tpu.memory_space<vmem>>, vector<1x160xf32>
    %138 = vector.broadcast %137 : vector<1x160xf32> to vector<56x160xf32>
    %139 = arith.addf %136, %138 : vector<56x160xf32>
    %cst_115 = arith.constant 0.000000e+00 : f32
    %140 = vector.broadcast %cst_115 : f32 to vector<56x160xf32>
    %141 = arith.maximumf %139, %140 : vector<56x160xf32>
    %c0_116 = arith.constant 0 : index
    %c0_117 = arith.constant 0 : index
    %142 = vector.load %arg14[%c0_116, %c0_117] : memref<58x240xf32, #tpu.memory_space<vmem>>, vector<56x160xf32>
    tpu.vector_store %arg14[%c0_116, %c0_117], %141 {strides = array<i32>} : memref<58x240xf32, #tpu.memory_space<vmem>>, vector<56x160xf32>,
    %cst_118 = arith.constant 0.000000e+00 : f32
    %143 = vector.broadcast %cst_118 : f32 to vector<2x160xf32>
    %c56_119 = arith.constant 56 : index
    %c0_120 = arith.constant 0 : index
    %144 = vector.load %arg14[%c56_119, %c0_120] : memref<58x240xf32, #tpu.memory_space<vmem>>, vector<2x160xf32>
    tpu.vector_store %arg14[%c56_119, %c0_120], %143 {strides = array<i32>} : memref<58x240xf32, #tpu.memory_space<vmem>>, vector<2x160xf32>,
    %c0_121 = arith.constant 0 : index
    %c0_122 = arith.constant 0 : index
    %145 = vector.load %arg14[%c0_121, %c0_122] : memref<58x240xf32, #tpu.memory_space<vmem>>, vector<56x160xf32>
    %c2_123 = arith.constant 2 : index
    %c0_124 = arith.constant 0 : index
    %146 = vector.load %arg14[%c2_123, %c0_124] : memref<58x240xf32, #tpu.memory_space<vmem>>, vector<56x160xf32>
    %147 = arith.maximumf %145, %146 : vector<56x160xf32>
    %148 = vector.extract_strided_slice %147 {offsets = [0, 0], sizes = [56, 140], strides = [1, 1]} : vector<56x160xf32> to vector<56x140xf32>
    %149 = vector.extract_strided_slice %147 {offsets = [0, 20], sizes = [56, 140], strides = [1, 1]} : vector<56x160xf32> to vector<56x140xf32>
    %150 = arith.maximumf %148, %149 : vector<56x140xf32>
    %151 = tpu.iota {dimensions = array<i32: 0>} : vector<56x140xi32>
    %c28_i32_125 = arith.constant 28 : i32
    %c0_i32_126 = arith.constant 0 : i32
    %152 = arith.cmpi eq, %c28_i32_125, %c0_i32_126 : i32
    %c1_i32_127 = arith.constant 1 : i32
    %153 = arith.select %152, %c1_i32_127, %c28_i32_125 : i32
    %154 = vector.broadcast %153 : i32 to vector<56x140xi32>
    %155 = arith.remsi %151, %154 : vector<56x140xi32>
    %c0_i32_128 = arith.constant 0 : i32
    %156 = vector.broadcast %c0_i32_128 : i32 to vector<56x140xi32>
    %157 = arith.cmpi ne, %155, %156 : vector<56x140xi32>
    %c0_i32_129 = arith.constant 0 : i32
    %158 = vector.broadcast %c0_i32_129 : i32 to vector<56x140xi32>
    %159 = arith.cmpi slt, %155, %158 : vector<56x140xi32>
    %c0_i32_130 = arith.constant 0 : i32
    %160 = arith.cmpi slt, %153, %c0_i32_130 : i32
    %161 = vector.broadcast %160 : i1 to vector<56x140xi1>
    %162 = vector.broadcast %161 : vector<56x140xi1> to vector<56x140xi1>
    %163 = arith.xori %159, %162 : vector<56x140xi1>
    %164 = arith.andi %163, %157 : vector<56x140xi1>
    %165 = vector.broadcast %153 : i32 to vector<56x140xi32>
    %166 = arith.addi %155, %165 : vector<56x140xi32>
    %167 = arith.select %164, %166, %155 : vector<56x140xi1>, vector<56x140xi32>
    %c4_i32 = arith.constant 4 : i32
    %c0_i32_131 = arith.constant 0 : i32
    %168 = arith.cmpi eq, %c4_i32, %c0_i32_131 : i32
    %c1_i32_132 = arith.constant 1 : i32
    %169 = arith.select %168, %c1_i32_132, %c4_i32 : i32
    %170 = vector.broadcast %169 : i32 to vector<56x140xi32>
    %171 = arith.remsi %167, %170 : vector<56x140xi32>
    %c0_i32_133 = arith.constant 0 : i32
    %172 = vector.broadcast %c0_i32_133 : i32 to vector<56x140xi32>
    %173 = arith.cmpi ne, %171, %172 : vector<56x140xi32>
    %c0_i32_134 = arith.constant 0 : i32
    %174 = vector.broadcast %c0_i32_134 : i32 to vector<56x140xi32>
    %175 = arith.cmpi slt, %171, %174 : vector<56x140xi32>
    %c0_i32_135 = arith.constant 0 : i32
    %176 = arith.cmpi slt, %169, %c0_i32_135 : i32
    %177 = vector.broadcast %176 : i1 to vector<56x140xi1>
    %178 = vector.broadcast %177 : vector<56x140xi1> to vector<56x140xi1>
    %179 = arith.xori %175, %178 : vector<56x140xi1>
    %180 = arith.andi %179, %173 : vector<56x140xi1>
    %181 = vector.broadcast %169 : i32 to vector<56x140xi32>
    %182 = arith.addi %171, %181 : vector<56x140xi32>
    %183 = arith.select %180, %182, %171 : vector<56x140xi1>, vector<56x140xi32>
    %c0_i32_136 = arith.constant 0 : i32
    %184 = vector.broadcast %c0_i32_136 : i32 to vector<56x140xi32>
    %185 = arith.cmpi eq, %183, %184 : vector<56x140xi32>
    %c16_i32 = arith.constant 16 : i32
    %186 = vector.broadcast %c16_i32 : i32 to vector<56x140xi32>
    %187 = arith.cmpi slt, %167, %186 : vector<56x140xi32>
    %188 = arith.andi %185, %187 : vector<56x140xi1>
    %cst_137 = arith.constant 0.000000e+00 : f32
    %189 = vector.broadcast %cst_137 : f32 to vector<56x140xf32>
    %190 = arith.select %188, %150, %189 : vector<56x140xi1>, vector<56x140xf32>
    %cst_138 = arith.constant 0.000000e+00 : bf16
    %191 = vector.broadcast %cst_138 : bf16 to vector<4x140xbf16>
    %c0_139 = arith.constant 0 : index
    %c0_140 = arith.constant 0 : index
    %192 = vector.load %arg13[%c0_139, %c0_140] : memref<68x240xbf16, #tpu.memory_space<vmem>>, vector<4x140xbf16>
    tpu.vector_store %arg13[%c0_139, %c0_140], %191 {strides = array<i32>} : memref<68x240xbf16, #tpu.memory_space<vmem>>, vector<4x140xbf16>,
    %193 = arith.truncf %190 : vector<56x140xf32> to vector<56x140xbf16>
    %c4_141 = arith.constant 4 : index
    %c0_142 = arith.constant 0 : index
    %194 = vector.load %arg13[%c4_141, %c0_142] : memref<68x240xbf16, #tpu.memory_space<vmem>>, vector<56x140xbf16>
    tpu.vector_store %arg13[%c4_141, %c0_142], %193 {strides = array<i32>} : memref<68x240xbf16, #tpu.memory_space<vmem>>, vector<56x140xbf16>,
    %cst_143 = arith.constant 0.000000e+00 : bf16
    %195 = vector.broadcast %cst_143 : bf16 to vector<4x140xbf16>
    %c60 = arith.constant 60 : index
    %c0_144 = arith.constant 0 : index
    %196 = vector.load %arg13[%c60, %c0_144] : memref<68x240xbf16, #tpu.memory_space<vmem>>, vector<4x140xbf16>
    tpu.vector_store %arg13[%c60, %c0_144], %195 {strides = array<i32>} : memref<68x240xbf16, #tpu.memory_space<vmem>>, vector<4x140xbf16>,
    %c0_145 = arith.constant 0 : index
    %c0_146 = arith.constant 0 : index
    %197 = vector.load %arg13[%c0_145, %c0_146] : memref<68x240xbf16, #tpu.memory_space<vmem>>, vector<56x140xbf16>
    %c0_147 = arith.constant 0 : index
    %c0_148 = arith.constant 0 : index
    %c0_149 = arith.constant 0 : index
    %198 = vector.load %arg8[%c0_147, %c0_148, %c0_149] : memref<3x140x140xbf16, #tpu.memory_space<vmem>>, vector<1x140x140xbf16>
    %199 = vector.shape_cast %198 : vector<1x140x140xbf16> to vector<140x140xbf16>
    %cst_150 = arith.constant dense<0.000000e+00> : vector<56x140xf32>
    %200 = tpu.matmul %197, %199, %cst_150 {dimension_numbers = #tpu.dot_dimension_numbers<[1], [0], [0], [1], [0, 0, 1, 1], [], []>} : vector<56x140xbf16>, vector<140x140xbf16>, vector<56x140xf32> -> vector<56x140xf32>
    %c4_151 = arith.constant 4 : index
    %c0_152 = arith.constant 0 : index
    %201 = vector.load %arg13[%c4_151, %c0_152] : memref<68x240xbf16, #tpu.memory_space<vmem>>, vector<56x140xbf16>
    %c1_153 = arith.constant 1 : index
    %c0_154 = arith.constant 0 : index
    %c0_155 = arith.constant 0 : index
    %202 = vector.load %arg8[%c1_153, %c0_154, %c0_155] : memref<3x140x140xbf16, #tpu.memory_space<vmem>>, vector<1x140x140xbf16>
    %203 = vector.shape_cast %202 : vector<1x140x140xbf16> to vector<140x140xbf16>
    %cst_156 = arith.constant dense<0.000000e+00> : vector<56x140xf32>
    %204 = tpu.matmul %201, %203, %cst_156 {dimension_numbers = #tpu.dot_dimension_numbers<[1], [0], [0], [1], [0, 0, 1, 1], [], []>} : vector<56x140xbf16>, vector<140x140xbf16>, vector<56x140xf32> -> vector<56x140xf32>
    %205 = arith.addf %200, %204 : vector<56x140xf32>
    %c8_157 = arith.constant 8 : index
    %c0_158 = arith.constant 0 : index
    %206 = vector.load %arg13[%c8_157, %c0_158] : memref<68x240xbf16, #tpu.memory_space<vmem>>, vector<56x140xbf16>
    %c2_159 = arith.constant 2 : index
    %c0_160 = arith.constant 0 : index
    %c0_161 = arith.constant 0 : index
    %207 = vector.load %arg8[%c2_159, %c0_160, %c0_161] : memref<3x140x140xbf16, #tpu.memory_space<vmem>>, vector<1x140x140xbf16>
    %208 = vector.shape_cast %207 : vector<1x140x140xbf16> to vector<140x140xbf16>
    %cst_162 = arith.constant dense<0.000000e+00> : vector<56x140xf32>
    %209 = tpu.matmul %206, %208, %cst_162 {dimension_numbers = #tpu.dot_dimension_numbers<[1], [0], [0], [1], [0, 0, 1, 1], [], []>} : vector<56x140xbf16>, vector<140x140xbf16>, vector<56x140xf32> -> vector<56x140xf32>
    %210 = arith.addf %205, %209 : vector<56x140xf32>
    %c0_163 = arith.constant 0 : index
    %c0_164 = arith.constant 0 : index
    %211 = vector.load %arg9[%c0_163, %c0_164] : memref<1x140xf32, #tpu.memory_space<vmem>>, vector<1x140xf32>
    %212 = vector.broadcast %211 : vector<1x140xf32> to vector<56x140xf32>
    %213 = arith.addf %210, %212 : vector<56x140xf32>
    %214 = arith.addf %213, %190 : vector<56x140xf32>
    %cst_165 = arith.constant 0.000000e+00 : f32
    %215 = vector.broadcast %cst_165 : f32 to vector<56x140xf32>
    %216 = arith.maximumf %214, %215 : vector<56x140xf32>
    %217 = arith.truncf %216 : vector<56x140xf32> to vector<56x140xbf16>
    %c0_166 = arith.constant 0 : index
    %c0_167 = arith.constant 0 : index
    %218 = vector.load %arg13[%c0_166, %c0_167] : memref<68x240xbf16, #tpu.memory_space<vmem>>, vector<56x140xbf16>
    tpu.vector_store %arg13[%c0_166, %c0_167], %217 {strides = array<i32>} : memref<68x240xbf16, #tpu.memory_space<vmem>>, vector<56x140xbf16>,
    %cst_168 = arith.constant 0.000000e+00 : bf16
    %219 = vector.broadcast %cst_168 : bf16 to vector<12x140xbf16>
    %c56_169 = arith.constant 56 : index
    %c0_170 = arith.constant 0 : index
    %220 = vector.load %arg13[%c56_169, %c0_170] : memref<68x240xbf16, #tpu.memory_space<vmem>>, vector<12x140xbf16>
    tpu.vector_store %arg13[%c56_169, %c0_170], %219 {strides = array<i32>} : memref<68x240xbf16, #tpu.memory_space<vmem>>, vector<12x140xbf16>,
    %c0_171 = arith.constant 0 : index
    %c0_172 = arith.constant 0 : index
    %221 = vector.load %arg13[%c0_171, %c0_172] : memref<68x240xbf16, #tpu.memory_space<vmem>>, vector<56x140xbf16>
    %c0_173 = arith.constant 0 : index
    %c0_174 = arith.constant 0 : index
    %c0_175 = arith.constant 0 : index
    %222 = vector.load %arg10[%c0_173, %c0_174, %c0_175] : memref<4x140x10xbf16, #tpu.memory_space<vmem>>, vector<1x140x10xbf16>
    %223 = vector.shape_cast %222 : vector<1x140x10xbf16> to vector<140x10xbf16>
    %cst_176 = arith.constant dense<0.000000e+00> : vector<56x10xf32>
    %224 = tpu.matmul %221, %223, %cst_176 {dimension_numbers = #tpu.dot_dimension_numbers<[1], [0], [0], [1], [0, 0, 1, 1], [], []>} : vector<56x140xbf16>, vector<140x10xbf16>, vector<56x10xf32> -> vector<56x10xf32>
    %c4_177 = arith.constant 4 : index
    %c0_178 = arith.constant 0 : index
    %225 = vector.load %arg13[%c4_177, %c0_178] : memref<68x240xbf16, #tpu.memory_space<vmem>>, vector<56x140xbf16>
    %c1_179 = arith.constant 1 : index
    %c0_180 = arith.constant 0 : index
    %c0_181 = arith.constant 0 : index
    %226 = vector.load %arg10[%c1_179, %c0_180, %c0_181] : memref<4x140x10xbf16, #tpu.memory_space<vmem>>, vector<1x140x10xbf16>
    %227 = vector.shape_cast %226 : vector<1x140x10xbf16> to vector<140x10xbf16>
    %cst_182 = arith.constant dense<0.000000e+00> : vector<56x10xf32>
    %228 = tpu.matmul %225, %227, %cst_182 {dimension_numbers = #tpu.dot_dimension_numbers<[1], [0], [0], [1], [0, 0, 1, 1], [], []>} : vector<56x140xbf16>, vector<140x10xbf16>, vector<56x10xf32> -> vector<56x10xf32>
    %229 = arith.addf %224, %228 : vector<56x10xf32>
    %c8_183 = arith.constant 8 : index
    %c0_184 = arith.constant 0 : index
    %230 = vector.load %arg13[%c8_183, %c0_184] : memref<68x240xbf16, #tpu.memory_space<vmem>>, vector<56x140xbf16>
    %c2_185 = arith.constant 2 : index
    %c0_186 = arith.constant 0 : index
    %c0_187 = arith.constant 0 : index
    %231 = vector.load %arg10[%c2_185, %c0_186, %c0_187] : memref<4x140x10xbf16, #tpu.memory_space<vmem>>, vector<1x140x10xbf16>
    %232 = vector.shape_cast %231 : vector<1x140x10xbf16> to vector<140x10xbf16>
    %cst_188 = arith.constant dense<0.000000e+00> : vector<56x10xf32>
    %233 = tpu.matmul %230, %232, %cst_188 {dimension_numbers = #tpu.dot_dimension_numbers<[1], [0], [0], [1], [0, 0, 1, 1], [], []>} : vector<56x140xbf16>, vector<140x10xbf16>, vector<56x10xf32> -> vector<56x10xf32>
    %234 = arith.addf %229, %233 : vector<56x10xf32>
    %c12 = arith.constant 12 : index
    %c0_189 = arith.constant 0 : index
    %235 = vector.load %arg13[%c12, %c0_189] : memref<68x240xbf16, #tpu.memory_space<vmem>>, vector<56x140xbf16>
    %c3_190 = arith.constant 3 : index
    %c0_191 = arith.constant 0 : index
    %c0_192 = arith.constant 0 : index
    %236 = vector.load %arg10[%c3_190, %c0_191, %c0_192] : memref<4x140x10xbf16, #tpu.memory_space<vmem>>, vector<1x140x10xbf16>
    %237 = vector.shape_cast %236 : vector<1x140x10xbf16> to vector<140x10xbf16>
    %cst_193 = arith.constant dense<0.000000e+00> : vector<56x10xf32>
    %238 = tpu.matmul %235, %237, %cst_193 {dimension_numbers = #tpu.dot_dimension_numbers<[1], [0], [0], [1], [0, 0, 1, 1], [], []>} : vector<56x140xbf16>, vector<140x10xbf16>, vector<56x10xf32> -> vector<56x10xf32>
    %239 = arith.addf %234, %238 : vector<56x10xf32>
    %240 = tpu.iota {dimensions = array<i32: 0>} : vector<2x56xi32>
    %241 = tpu.iota {dimensions = array<i32: 1>} : vector<2x56xi32>
    %c28_i32_194 = arith.constant 28 : i32
    %242 = vector.broadcast %c28_i32_194 : i32 to vector<2x56xi32>
    %243 = arith.muli %240, %242 : vector<2x56xi32>
    %244 = arith.cmpi eq, %241, %243 : vector<2x56xi32>
    %245 = arith.extui %244 : vector<2x56xi1> to vector<2x56xi32>
    %246 = arith.sitofp %245 : vector<2x56xi32> to vector<2x56xf32>
    %cst_195 = arith.constant dense<0.000000e+00> : vector<2x10xf32>
    %247 = tpu.matmul %246, %239, %cst_195 {dimension_numbers = #tpu.dot_dimension_numbers<[1], [0], [0], [1], [0, 0, 1, 1], [], []>} : vector<2x56xf32>, vector<56x10xf32>, vector<2x10xf32> -> vector<2x10xf32>
    %c0_196 = arith.constant 0 : index
    %c0_197 = arith.constant 0 : index
    %248 = vector.load %arg11[%c0_196, %c0_197] : memref<1x10xf32, #tpu.memory_space<vmem>>, vector<1x10xf32>
    %249 = vector.broadcast %248 : vector<1x10xf32> to vector<2x10xf32>
    %250 = arith.addf %247, %249 : vector<2x10xf32>
    %c0_198 = arith.constant 0 : index
    %c0_199 = arith.constant 0 : index
    %251 = vector.load %arg12[%c0_198, %c0_199] : memref<2x10xf32, #tpu.memory_space<vmem>>, vector<2x10xf32>
    tpu.vector_store %arg12[%c0_198, %c0_199], %250 {strides = array<i32>} : memref<2x10xf32, #tpu.memory_space<vmem>>, vector<2x10xf32>,
    return
  }
  func.func @transform_0(%arg0: i32) -> (i32, i32) {
    %c0_i32 = arith.constant 0 : i32
    %c0_i32_0 = arith.constant 0 : i32
    return %arg0, %c0_i32 : i32, i32
  }
  func.func @transform_1(%arg0: i32) -> (i32, i32, i32) {
    %c0_i32 = arith.constant 0 : i32
    %c0_i32_0 = arith.constant 0 : i32
    %c0_i32_1 = arith.constant 0 : i32
    %c0_i32_2 = arith.constant 0 : i32
    return %c0_i32, %c0_i32_0, %c0_i32_1 : i32, i32, i32
  }
  func.func @transform_2(%arg0: i32) -> (i32, i32) {
    %c0_i32 = arith.constant 0 : i32
    %c0_i32_0 = arith.constant 0 : i32
    %c0_i32_1 = arith.constant 0 : i32
    return %c0_i32, %c0_i32_0 : i32, i32
  }
  func.func @transform_3(%arg0: i32) -> (i32, i32, i32) {
    %c0_i32 = arith.constant 0 : i32
    %c0_i32_0 = arith.constant 0 : i32
    %c0_i32_1 = arith.constant 0 : i32
    %c0_i32_2 = arith.constant 0 : i32
    return %c0_i32, %c0_i32_0, %c0_i32_1 : i32, i32, i32
  }
  func.func @transform_4(%arg0: i32) -> (i32, i32) {
    %c0_i32 = arith.constant 0 : i32
    %c0_i32_0 = arith.constant 0 : i32
    %c0_i32_1 = arith.constant 0 : i32
    return %c0_i32, %c0_i32_0 : i32, i32
  }
  func.func @transform_5(%arg0: i32) -> (i32, i32, i32) {
    %c0_i32 = arith.constant 0 : i32
    %c0_i32_0 = arith.constant 0 : i32
    %c0_i32_1 = arith.constant 0 : i32
    %c0_i32_2 = arith.constant 0 : i32
    return %c0_i32, %c0_i32_0, %c0_i32_1 : i32, i32, i32
  }
  func.func @transform_6(%arg0: i32) -> (i32, i32) {
    %c0_i32 = arith.constant 0 : i32
    %c0_i32_0 = arith.constant 0 : i32
    %c0_i32_1 = arith.constant 0 : i32
    return %c0_i32, %c0_i32_0 : i32, i32
  }
  func.func @transform_7(%arg0: i32) -> (i32, i32, i32) {
    %c0_i32 = arith.constant 0 : i32
    %c0_i32_0 = arith.constant 0 : i32
    %c0_i32_1 = arith.constant 0 : i32
    %c0_i32_2 = arith.constant 0 : i32
    return %c0_i32, %c0_i32_0, %c0_i32_1 : i32, i32, i32
  }
  func.func @transform_8(%arg0: i32) -> (i32, i32) {
    %c0_i32 = arith.constant 0 : i32
    %c0_i32_0 = arith.constant 0 : i32
    %c0_i32_1 = arith.constant 0 : i32
    return %c0_i32, %c0_i32_0 : i32, i32
  }
  func.func @transform_9(%arg0: i32) -> (i32, i32, i32) {
    %c0_i32 = arith.constant 0 : i32
    %c0_i32_0 = arith.constant 0 : i32
    %c0_i32_1 = arith.constant 0 : i32
    %c0_i32_2 = arith.constant 0 : i32
    return %c0_i32, %c0_i32_0, %c0_i32_1 : i32, i32, i32
  }
  func.func @transform_10(%arg0: i32) -> (i32, i32) {
    %c0_i32 = arith.constant 0 : i32
    %c0_i32_0 = arith.constant 0 : i32
    %c0_i32_1 = arith.constant 0 : i32
    return %c0_i32, %c0_i32_0 : i32, i32
  }
  func.func @transform_11(%arg0: i32) -> (i32, i32) {
    %c0_i32 = arith.constant 0 : i32
    %c0_i32_0 = arith.constant 0 : i32
    return %arg0, %c0_i32 : i32, i32
  }
}

</mosaic_0001>

<llo_original>
// kernel: net_forward.1
$region0: #{net_forward.1}
  #allocation0 [shape = 'u32[]', space=smem, size = 0x4, offset = 0x4, fixed_abs, tag = 'smem constant byte address 0x4 - core index']
  #allocation1 [shape = 'u32[72,128]{1,0:T(1,128)}', space=vmem, size = 0x9000, scoped, tag = 'internal scratch']
  #allocation2 [shape = 'bf16[68,240]{1,0:T(8,128)(2,1)}', space=vmem, size = 0x9000, scoped, tag = 'scratch operand']
  #allocation3 [shape = 'f32[58,240]{1,0:T(8,128)}', space=vmem, size = 0x10000, scoped, tag = 'scratch operand']
  %s0 = inlined_call_operand.vmem [shape: f32[56,28], index: 0, kind: input, shape index: {}]
  %s1 = inlined_call_operand.vmem [shape: bf16[5,28,240], index: 1, kind: input, shape index: {}]
  %s2 = inlined_call_operand.vmem [shape: f32[1,240], index: 2, kind: input, shape index: {}]
  %s3 = inlined_call_operand.vmem [shape: bf16[3,230,230], index: 3, kind: input, shape index: {}]
  %s4 = inlined_call_operand.vmem [shape: f32[1,230], index: 4, kind: input, shape index: {}]
  %s5 = inlined_call_operand.vmem [shape: bf16[5,230,160], index: 5, kind: input, shape index: {}]
  %s6 = inlined_call_operand.vmem [shape: f32[1,160], index: 6, kind: input, shape index: {}]
  %s7 = inlined_call_operand.vmem [shape: bf16[3,140,140], index: 7, kind: input, shape index: {}]
  %s8 = inlined_call_operand.vmem [shape: f32[1,140], index: 8, kind: input, shape index: {}]
  %s9 = inlined_call_operand.vmem [shape: bf16[4,140,10], index: 9, kind: input, shape index: {}]
  %s10 = inlined_call_operand.vmem [shape: f32[1,10], index: 10, kind: input, shape index: {}]
  %s11 = inlined_call_operand.hbm [shape: f32[2,10], index: 11, kind: output, shape index: {}]
  %s12 = sld [smem:[#allocation0]]
  $region54: #{net_forward.1} parent=0
    _
  %s14 = ssub.s32 1, %s12
  %s15 = scalar_select 0, %s14, %s12
  $region1: #{net_forward.1} parent=0
    #allocation4 [shape = 'u8[1024]{0}', space=vmem, size = 0x400, scoped, tag = 'output window, operand 0, single buffered']
    #allocation5 [shape = 's32[1]{0}', space=sflag, size = 0x4, scoped, tag = 'scoped memory for net_forward.1']
    %16 = vsyncpa [#allocation5], 0
    // Predicated region
    $region2: #{net_forward.1} parent=1 // pred_check
      _
    $region3: #{net_forward.1} parent=1 // pred_check_branch
      %18 = sbr.rel (0) target = $region5
    $region4: #{net_forward.1} parent=1 // pred_region
      _
    $region5: #{net_forward.1} parent=1 // pred_fallthru
      _
    // Predicated region
    $region6: #{net_forward.1} parent=1 // pred_check
      _
    $region7: #{net_forward.1} parent=1 // pred_check_branch
      %20 = sbr.rel (0) target = $region9
    $region8: #{net_forward.1} parent=1 // pred_region
      _
    $region9: #{net_forward.1} parent=1 // pred_fallthru
      _
    // Predicated region
    $region10: #{net_forward.1} parent=1 // pred_check
      _
    $region11: #{net_forward.1} parent=1 // pred_check_branch
      %22 = sbr.rel (0) target = $region13
    $region12: #{net_forward.1} parent=1 // pred_region
      _
    $region13: #{net_forward.1} parent=1 // pred_fallthru
      _
    // Predicated region
    $region14: #{net_forward.1} parent=1 // pred_check
      _
    $region15: #{net_forward.1} parent=1 // pred_check_branch
      %24 = sbr.rel (0) target = $region17
    $region16: #{net_forward.1} parent=1 // pred_region
      _
    $region17: #{net_forward.1} parent=1 // pred_fallthru
      _
    // Predicated region
    $region18: #{net_forward.1} parent=1 // pred_check
      _
    $region19: #{net_forward.1} parent=1 // pred_check_branch
      %26 = sbr.rel (0) target = $region21
    $region20: #{net_forward.1} parent=1 // pred_region
      _
    $region21: #{net_forward.1} parent=1 // pred_fallthru
      _
    // Predicated region
    $region22: #{net_forward.1} parent=1 // pred_check
      _
    $region23: #{net_forward.1} parent=1 // pred_check_branch
      %28 = sbr.rel (0) target = $region25
    $region24: #{net_forward.1} parent=1 // pred_region
      _
    $region25: #{net_forward.1} parent=1 // pred_fallthru
      _
    // Predicated region
    $region26: #{net_forward.1} parent=1 // pred_check
      _
    $region27: #{net_forward.1} parent=1 // pred_check_branch
      %30 = sbr.rel (0) target = $region29
    $region28: #{net_forward.1} parent=1 // pred_region
      _
    $region29: #{net_forward.1} parent=1 // pred_fallthru
      _
    // Predicated region
    $region30: #{net_forward.1} parent=1 // pred_check
      _
    $region31: #{net_forward.1} parent=1 // pred_check_branch
      %32 = sbr.rel (0) target = $region33
    $region32: #{net_forward.1} parent=1 // pred_region
      _
    $region33: #{net_forward.1} parent=1 // pred_fallthru
      _
    // Predicated region
    $region34: #{net_forward.1} parent=1 // pred_check
      _
    $region35: #{net_forward.1} parent=1 // pred_check_branch
      %34 = sbr.rel (0) target = $region37
    $region36: #{net_forward.1} parent=1 // pred_region
      _
    $region37: #{net_forward.1} parent=1 // pred_fallthru
      _
    // Predicated region
    $region38: #{net_forward.1} parent=1 // pred_check
      _
    $region39: #{net_forward.1} parent=1 // pred_check_branch
      %36 = sbr.rel (0) target = $region41
    $region40: #{net_forward.1} parent=1 // pred_region
      _
    $region41: #{net_forward.1} parent=1 // pred_fallthru
      _
    // Predicated region
    $region42: #{net_forward.1} parent=1 // pred_check
      _
    $region43: #{net_forward.1} parent=1 // pred_check_branch
      %38 = sbr.rel (0) target = $region45
    $region44: #{net_forward.1} parent=1 // pred_region
      _
    $region45: #{net_forward.1} parent=1 // pred_fallthru
      _
    %v40 = vld [vmem:[%s0] sm:$0xff]
    %v41 = vld [vmem:[%s0 + $0x8] sm:$0xff]
    %v42 = vld [vmem:[%s0 + $0x10] sm:$0xff]
    %v43 = vld [vmem:[%s0 + $0x18] sm:$0xff]
    %v44 = vld [vmem:[%s0 + $0x20] sm:$0xff]
    %v45 = vld [vmem:[%s0 + $0x28] sm:$0xff]
    %v46 = vld [vmem:[%s0 + $0x30] sm:$0xff]
    %v47 = vpack.c.bf16 %v40, %v40
    %v48 = vpack.c.bf16 %v41, %v41
    %v49 = vpack.c.bf16 %v42, %v42
    %v50 = vpack.c.bf16 %v43, %v43
    %v51 = vpack.c.bf16 %v44, %v44
    %v52 = vpack.c.bf16 %v45, %v45
    %v53 = vpack.c.bf16 %v46, %v46
    %vm54 = vcmask 224256
    %55 = vst.msk [vmem:[#allocation2] sm:$0xf] %vm54, %v47
    %56 = vst.msk [vmem:[#allocation2 + $0x8] sm:$0xf] %vm54, %v48
    %57 = vst.msk [vmem:[#allocation2 + $0x10] sm:$0xf] %vm54, %v49
    %58 = vst.msk [vmem:[#allocation2 + $0x18] sm:$0xf] %vm54, %v50
    %59 = vst.msk [vmem:[#allocation2 + $0x20] sm:$0xf] %vm54, %v51
    %60 = vst.msk [vmem:[#allocation2 + $0x28] sm:$0xf] %vm54, %v52
    %61 = vst.msk [vmem:[#allocation2 + $0x30] sm:$0xf] %vm54, %v53
    %vm62 = vcmask 222208
    %63 = vst.msk [vmem:[#allocation2 + $0x38] sm:$0x3] %vm62, 0
    %v64 = vld [vmem:[#allocation2] sm:$0xf]
    %v65 = vld [vmem:[#allocation2 + $0x8] sm:$0xf]
    %v66 = vld [vmem:[#allocation2 + $0x10] sm:$0xf]
    %v67 = vld [vmem:[#allocation2 + $0x18] sm:$0xf]
    %v68 = vld [vmem:[#allocation2 + $0x20] sm:$0xf]
    %v69 = vld [vmem:[#allocation2 + $0x28] sm:$0xf]
    %v70 = vld [vmem:[#allocation2 + $0x30] sm:$0xf]
    %v71 = vld [vmem:[%s1] sm:$0xff]
    %v72 = vld [vmem:[%s1 + $0x8] sm:$0xff]
    %v73 = vld [vmem:[%s1 + $0x10] sm:$0xff]
    %v74 = vld [vmem:[%s1 + $0x18] sm:$0x33]
    %v75 = vld [vmem:[#allocation2 + $0x38] sm:$0x1]
    %s76 = scalar_lea.vmem %s1, 32
    %v77 = vld [vmem:[%s76] sm:$0xff]
    %v78 = vld [vmem:[%s76 + $0x8] sm:$0xff]
    %v79 = vld [vmem:[%s76 + $0x10] sm:$0xff]
    %v80 = vld [vmem:[%s76 + $0x18] sm:$0x33]
    %v89 = vunpack.c.l.b16 %v64
    %v90 = vunpack.c.l.b16 %v65
    %v91 = vunpack.c.l.b16 %v66
    %v92 = vunpack.c.l.b16 %v67
    %v93 = vunpack.c.l.b16 %v68
    %v94 = vunpack.c.l.b16 %v69
    %v95 = vunpack.c.l.b16 %v70
    %v96 = vunpack.c.l.b16 %v75
    %v97 = vpack.c.b16 %v90, %v89
    %v98 = vpack.c.b16 %v92, %v91
    %v99 = vpack.c.b16 %v94, %v93
    %v100 = vpack.c.b16 %v96, %v95
    %vm101 = vsmask.f32 7424
    %v103 = vshrl.u32 %v97, 16
    %v105 = vshll.u32 %v97, 16
    %v107 = vrot.slane %v105, 1
    %v108 = vor.u32 %v103, %v107
    %v110 = vshll.u32 %v98, 16
    %v112 = vrot.slane %v110, 1
    %v113 = vsel %vm101, %v108, %v112
    %v114 = vshrl.u32 %v98, 16
    %v116 = vor.u32 %v114, %v112
    %v118 = vshll.u32 %v99, 16
    %v120 = vrot.slane %v118, 1
    %v121 = vsel %vm101, %v116, %v120
    %v122 = vshrl.u32 %v99, 16
    %v124 = vor.u32 %v122, %v120
    %v126 = vshll.u32 %v100, 16
    %v128 = vrot.slane %v126, 1
    %v129 = vsel %vm101, %v124, %v128
    %v130 = vshrl.u32 %v100, 16
    %v132 = vor.u32 %v130, %v128
    %v137 = vunpack.c.l.b16 %v77
    %v138 = vunpack.c.h.b16 %v77
    %v139 = vunpack.c.l.b16 %v78
    %v140 = vunpack.c.h.b16 %v78
    %v141 = vunpack.c.l.b16 %v79
    %v142 = vunpack.c.h.b16 %v79
    %v143 = vunpack.c.l.b16 %v80
    %v144 = vunpack.c.h.b16 %v80
    %v145 = vpack.c.b16 %v139, %v137
    %v146 = vpack.c.b16 %v140, %v138
    %v147 = vpack.c.b16 %v143, %v141
    %v148 = vpack.c.b16 %v144, %v142
    %vm151 = vcmask 228352
    %v153 = vsel %vm151, %v113, 0
    %v156 = vsel %vm151, %v121, 0
    %v159 = vsel %vm151, %v129, 0
    %v162 = vsel %vm151, %v132, 0
    %vm164 = vcmask 1045504
    %v166 = vsel %vm164, %v147, 0
    %v169 = vsel %vm164, %v148, 0
    %171 = vmatpush.bf16.msra.mxu0 0
    %172 = vmatpush.bf16.msra.mxu0 0
    %173 = vmatpush.bf16.msra.mxu0 0
    %174 = vmatpush.bf16.msra.mxu0 0
    %175 = vmatpush.bf16.msra.mxu0 0
    %176 = vmatpush.bf16.msra.mxu0 0
    %177 = vmatpush.bf16.msra.mxu0 %v166
    %178 = vmatpush.bf16.msra.mxu0 %v145
    %179 = vmatmul.bf16.gmra.mxu0 %v153
    %v180 = vpop.f32.mrf.mxu0
    %v181 = vadd.f32 0.0, %v180
    %v182 = vpop.f32.mrf.mxu0
    %v183 = vadd.f32 0.0, %v182
    %184 = vmatmul.bf16.gmra.mxu0 %v156
    %v185 = vpop.f32.mrf.mxu0
    %v186 = vadd.f32 0.0, %v185
    %v187 = vpop.f32.mrf.mxu0
    %v188 = vadd.f32 0.0, %v187
    %189 = vmatmul.bf16.gmra.mxu0 %v159
    %v190 = vpop.f32.mrf.mxu0
    %v191 = vadd.f32 0.0, %v190
    %v192 = vpop.f32.mrf.mxu0
    %v193 = vadd.f32 0.0, %v192
    %194 = vmatmul.bf16.gmra.mxu0 %v162
    %v195 = vpop.f32.mrf.mxu0
    %v196 = vadd.f32 0.0, %v195
    %v197 = vpop.f32.mrf.mxu0
    %198 = vdwg.mxu0
    %199 = vmatpush.bf16.msra.mxu0 0
    %200 = vmatpush.bf16.msra.mxu0 0
    %201 = vmatpush.bf16.msra.mxu0 0
    %202 = vmatpush.bf16.msra.mxu0 0
    %203 = vmatpush.bf16.msra.mxu0 0
    %204 = vmatpush.bf16.msra.mxu0 0
    %205 = vmatpush.bf16.msra.mxu0 %v169
    %206 = vmatpush.bf16.msra.mxu0 %v146
    %207 = vmatmul.bf16.gmra.mxu0 %v153
    %v208 = vpop.f32.mrf.mxu0
    %v209 = vadd.f32 0.0, %v208
    %v210 = vpop.f32.mrf.mxu0
    %v211 = vadd.f32 0.0, %v210
    %212 = vmatmul.bf16.gmra.mxu0 %v156
    %v213 = vpop.f32.mrf.mxu0
    %v214 = vadd.f32 0.0, %v213
    %v215 = vpop.f32.mrf.mxu0
    %v216 = vadd.f32 0.0, %v215
    %217 = vmatmul.bf16.gmra.mxu0 %v159
    %v218 = vpop.f32.mrf.mxu0
    %v219 = vadd.f32 0.0, %v218
    %v220 = vpop.f32.mrf.mxu0
    %v221 = vadd.f32 0.0, %v220
    %222 = vmatmul.bf16.gmra.mxu0 %v162
    %v223 = vpop.f32.mrf.mxu0
    %v224 = vadd.f32 0.0, %v223
    %v225 = vpop.f32.mrf.mxu0
    %226 = vdwg.mxu0
    %v227 = vpack.c.b16 %v95, %v95
    %v232 = vunpack.c.l.b16 %v71
    %v233 = vunpack.c.h.b16 %v71
    %v234 = vunpack.c.l.b16 %v72
    %v235 = vunpack.c.h.b16 %v72
    %v236 = vunpack.c.l.b16 %v73
    %v237 = vunpack.c.h.b16 %v73
    %v238 = vunpack.c.l.b16 %v74
    %v239 = vunpack.c.h.b16 %v74
    %v240 = vpack.c.b16 %v234, %v232
    %v241 = vpack.c.b16 %v235, %v233
    %v242 = vpack.c.b16 %v238, %v236
    %v243 = vpack.c.b16 %v239, %v237
    %v246 = vsel %vm151, %v97, 0
    %v248 = vsel %vm151, %v98, 0
    %v250 = vsel %vm151, %v99, 0
    %v253 = vsel %vm151, %v227, 0
    %v256 = vsel %vm164, %v242, 0
    %v259 = vsel %vm164, %v243, 0
    %261 = vmatpush.bf16.msra.mxu0 0
    %262 = vmatpush.bf16.msra.mxu0 0
    %263 = vmatpush.bf16.msra.mxu0 0
    %264 = vmatpush.bf16.msra.mxu0 0
    %265 = vmatpush.bf16.msra.mxu0 0
    %266 = vmatpush.bf16.msra.mxu0 0
    %267 = vmatpush.bf16.msra.mxu0 %v256
    %268 = vmatpush.bf16.msra.mxu0 %v240
    %269 = vmatmul.bf16.gmra.mxu0 %v246
    %v270 = vpop.f32.mrf.mxu0
    %v271 = vadd.f32 %v181, %v270
    %v272 = vpop.f32.mrf.mxu0
    %v273 = vadd.f32 %v183, %v272
    %274 = vmatmul.bf16.gmra.mxu0 %v248
    %v275 = vpop.f32.mrf.mxu0
    %v276 = vadd.f32 %v186, %v275
    %v277 = vpop.f32.mrf.mxu0
    %v278 = vadd.f32 %v188, %v277
    %279 = vmatmul.bf16.gmra.mxu0 %v250
    %v280 = vpop.f32.mrf.mxu0
    %v281 = vadd.f32 %v191, %v280
    %v282 = vpop.f32.mrf.mxu0
    %v283 = vadd.f32 %v193, %v282
    %284 = vmatmul.bf16.gmra.mxu0 %v253
    %v285 = vpop.f32.mrf.mxu0
    %v286 = vadd.f32 %v196, %v285
    %v287 = vpop.f32.mrf.mxu0
    %288 = vdwg.mxu0
    %289 = vmatpush.bf16.msra.mxu0 0
    %290 = vmatpush.bf16.msra.mxu0 0
    %291 = vmatpush.bf16.msra.mxu0 0
    %292 = vmatpush.bf16.msra.mxu0 0
    %293 = vmatpush.bf16.msra.mxu0 0
    %294 = vmatpush.bf16.msra.mxu0 0
    %295 = vmatpush.bf16.msra.mxu0 %v259
    %296 = vmatpush.bf16.msra.mxu0 %v241
    %297 = vmatmul.bf16.gmra.mxu0 %v246
    %v298 = vpop.f32.mrf.mxu0
    %v299 = vadd.f32 %v209, %v298
    %v300 = vpop.f32.mrf.mxu0
    %v301 = vadd.f32 %v211, %v300
    %302 = vmatmul.bf16.gmra.mxu0 %v248
    %v303 = vpop.f32.mrf.mxu0
    %v304 = vadd.f32 %v214, %v303
    %v305 = vpop.f32.mrf.mxu0
    %v306 = vadd.f32 %v216, %v305
    %307 = vmatmul.bf16.gmra.mxu0 %v250
    %v308 = vpop.f32.mrf.mxu0
    %v309 = vadd.f32 %v219, %v308
    %v310 = vpop.f32.mrf.mxu0
    %v311 = vadd.f32 %v221, %v310
    %312 = vmatmul.bf16.gmra.mxu0 %v253
    %v313 = vpop.f32.mrf.mxu0
    %v314 = vadd.f32 %v224, %v313
    %v315 = vpop.f32.mrf.mxu0
    %316 = vdwg.mxu0
    %v317 = vld [vmem:[#allocation2] sm:$0xe]
    %s318 = scalar_lea.vmem %s1, 64
    %v319 = vld [vmem:[%s318] sm:$0xff]
    %v320 = vld [vmem:[%s318 + $0x8] sm:$0xff]
    %v321 = vld [vmem:[%s318 + $0x10] sm:$0xff]
    %v322 = vld [vmem:[%s318 + $0x18] sm:$0x33]
    %v324 = vunpack.c.l.b16 %v317
    %v325 = vpack.c.b16 %v90, %v324
    %vm326 = vcmask 1046528
    %v327 = vrot.slane %v325, 1
    %v328 = vrot.slane %v98, 1
    %v329 = vsel %vm326, %v327, %v328
    %v330 = vrot.slane %v99, 1
    %v331 = vsel %vm326, %v328, %v330
    %v332 = vrot.slane %v100, 1
    %v333 = vsel %vm326, %v330, %v332
    %v338 = vunpack.c.l.b16 %v319
    %v339 = vunpack.c.h.b16 %v319
    %v340 = vunpack.c.l.b16 %v320
    %v341 = vunpack.c.h.b16 %v320
    %v342 = vunpack.c.l.b16 %v321
    %v343 = vunpack.c.h.b16 %v321
    %v344 = vunpack.c.l.b16 %v322
    %v345 = vunpack.c.h.b16 %v322
    %v346 = vpack.c.b16 %v340, %v338
    %v347 = vpack.c.b16 %v341, %v339
    %v348 = vpack.c.b16 %v344, %v342
    %v349 = vpack.c.b16 %v345, %v343
    %v353 = vsel %vm151, %v329, 0
    %v356 = vsel %vm151, %v331, 0
    %v359 = vsel %vm151, %v333, 0
    %v362 = vsel %vm151, %v332, 0
    %v365 = vsel %vm164, %v348, 0
    %v368 = vsel %vm164, %v349, 0
    %370 = vmatpush.bf16.msra.mxu0 0
    %371 = vmatpush.bf16.msra.mxu0 0
    %372 = vmatpush.bf16.msra.mxu0 0
    %373 = vmatpush.bf16.msra.mxu0 0
    %374 = vmatpush.bf16.msra.mxu0 0
    %375 = vmatpush.bf16.msra.mxu0 0
    %376 = vmatpush.bf16.msra.mxu0 %v365
    %377 = vmatpush.bf16.msra.mxu0 %v346
    %378 = vmatmul.bf16.gmra.mxu0 %v353
    %v379 = vpop.f32.mrf.mxu0
    %v380 = vadd.f32 0.0, %v379
    %v381 = vpop.f32.mrf.mxu0
    %v382 = vadd.f32 0.0, %v381
    %383 = vmatmul.bf16.gmra.mxu0 %v356
    %v384 = vpop.f32.mrf.mxu0
    %v385 = vadd.f32 0.0, %v384
    %v386 = vpop.f32.mrf.mxu0
    %v387 = vadd.f32 0.0, %v386
    %388 = vmatmul.bf16.gmra.mxu0 %v359
    %v389 = vpop.f32.mrf.mxu0
    %v390 = vadd.f32 0.0, %v389
    %v391 = vpop.f32.mrf.mxu0
    %v392 = vadd.f32 0.0, %v391
    %393 = vmatmul.bf16.gmra.mxu0 %v362
    %v394 = vpop.f32.mrf.mxu0
    %v395 = vadd.f32 0.0, %v394
    %v396 = vpop.f32.mrf.mxu0
    %397 = vdwg.mxu0
    %398 = vmatpush.bf16.msra.mxu0 0
    %399 = vmatpush.bf16.msra.mxu0 0
    %400 = vmatpush.bf16.msra.mxu0 0
    %401 = vmatpush.bf16.msra.mxu0 0
    %402 = vmatpush.bf16.msra.mxu0 0
    %403 = vmatpush.bf16.msra.mxu0 0
    %404 = vmatpush.bf16.msra.mxu0 %v368
    %405 = vmatpush.bf16.msra.mxu0 %v347
    %406 = vmatmul.bf16.gmra.mxu0 %v353
    %v407 = vpop.f32.mrf.mxu0
    %v408 = vadd.f32 0.0, %v407
    %v409 = vpop.f32.mrf.mxu0
    %v410 = vadd.f32 0.0, %v409
    %411 = vmatmul.bf16.gmra.mxu0 %v356
    %v412 = vpop.f32.mrf.mxu0
    %v413 = vadd.f32 0.0, %v412
    %v414 = vpop.f32.mrf.mxu0
    %v415 = vadd.f32 0.0, %v414
    %416 = vmatmul.bf16.gmra.mxu0 %v359
    %v417 = vpop.f32.mrf.mxu0
    %v418 = vadd.f32 0.0, %v417
    %v419 = vpop.f32.mrf.mxu0
    %v420 = vadd.f32 0.0, %v419
    %421 = vmatmul.bf16.gmra.mxu0 %v362
    %v422 = vpop.f32.mrf.mxu0
    %v423 = vadd.f32 0.0, %v422
    %v424 = vpop.f32.mrf.mxu0
    %425 = vdwg.mxu0
    %v426 = vadd.f32 %v271, %v380
    %v427 = vadd.f32 %v299, %v408
    %v428 = vadd.f32 %v273, %v382
    %v429 = vadd.f32 %v301, %v410
    %v430 = vadd.f32 %v276, %v385
    %v431 = vadd.f32 %v304, %v413
    %v432 = vadd.f32 %v278, %v387
    %v433 = vadd.f32 %v306, %v415
    %v434 = vadd.f32 %v281, %v390
    %v435 = vadd.f32 %v309, %v418
    %v436 = vadd.f32 %v283, %v392
    %v437 = vadd.f32 %v311, %v420
    %v438 = vadd.f32 %v286, %v395
    %v439 = vadd.f32 %v314, %v423
    %v440 = vld [vmem:[#allocation2 + $0x38] sm:$0x3]
    %s441 = scalar_lea.vmem %s1, 96
    %v442 = vld [vmem:[%s441] sm:$0xff]
    %v443 = vld [vmem:[%s441 + $0x8] sm:$0xff]
    %v444 = vld [vmem:[%s441 + $0x10] sm:$0xff]
    %v445 = vld [vmem:[%s441 + $0x18] sm:$0x33]
    %v447 = vunpack.c.l.b16 %v440
    %v448 = vpack.c.b16 %v447, %v95
    %vm449 = vsmask.f32 6400
    %v451 = vshrl.u32 %v325, 16
    %v453 = vrot.slane %v451, 1
    %v454 = vshll.u32 %v325, 16
    %v456 = vrot.slane %v454, 2
    %v457 = vor.u32 %v453, %v456
    %v458 = vrot.slane %v114, 1
    %v459 = vrot.slane %v110, 2
    %v460 = vor.u32 %v458, %v459
    %v461 = vsel %vm449, %v457, %v460
    %v462 = vrot.slane %v122, 1
    %v463 = vrot.slane %v118, 2
    %v464 = vor.u32 %v462, %v463
    %v465 = vsel %vm449, %v460, %v464
    %v467 = vshrl.u32 %v448, 16
    %v469 = vrot.slane %v467, 1
    %v470 = vshll.u32 %v448, 16
    %v472 = vrot.slane %v470, 2
    %v473 = vor.u32 %v469, %v472
    %v474 = vsel %vm449, %v464, %v473
    %v479 = vunpack.c.l.b16 %v442
    %v480 = vunpack.c.h.b16 %v442
    %v481 = vunpack.c.l.b16 %v443
    %v482 = vunpack.c.h.b16 %v443
    %v483 = vunpack.c.l.b16 %v444
    %v484 = vunpack.c.h.b16 %v444
    %v485 = vunpack.c.l.b16 %v445
    %v486 = vunpack.c.h.b16 %v445
    %v487 = vpack.c.b16 %v481, %v479
    %v488 = vpack.c.b16 %v482, %v480
    %v489 = vpack.c.b16 %v485, %v483
    %v490 = vpack.c.b16 %v486, %v484
    %v494 = vsel %vm151, %v461, 0
    %v497 = vsel %vm151, %v465, 0
    %v500 = vsel %vm151, %v474, 0
    %v503 = vsel %vm151, %v473, 0
    %v506 = vsel %vm164, %v489, 0
    %v509 = vsel %vm164, %v490, 0
    %511 = vmatpush.bf16.msra.mxu0 0
    %512 = vmatpush.bf16.msra.mxu0 0
    %513 = vmatpush.bf16.msra.mxu0 0
    %514 = vmatpush.bf16.msra.mxu0 0
    %515 = vmatpush.bf16.msra.mxu0 0
    %516 = vmatpush.bf16.msra.mxu0 0
    %517 = vmatpush.bf16.msra.mxu0 %v506
    %518 = vmatpush.bf16.msra.mxu0 %v487
    %519 = vmatmul.bf16.gmra.mxu0 %v494
    %v520 = vpop.f32.mrf.mxu0
    %v521 = vadd.f32 0.0, %v520
    %v522 = vpop.f32.mrf.mxu0
    %v523 = vadd.f32 0.0, %v522
    %524 = vmatmul.bf16.gmra.mxu0 %v497
    %v525 = vpop.f32.mrf.mxu0
    %v526 = vadd.f32 0.0, %v525
    %v527 = vpop.f32.mrf.mxu0
    %v528 = vadd.f32 0.0, %v527
    %529 = vmatmul.bf16.gmra.mxu0 %v500
    %v530 = vpop.f32.mrf.mxu0
    %v531 = vadd.f32 0.0, %v530
    %v532 = vpop.f32.mrf.mxu0
    %v533 = vadd.f32 0.0, %v532
    %534 = vmatmul.bf16.gmra.mxu0 %v503
    %v535 = vpop.f32.mrf.mxu0
    %v536 = vadd.f32 0.0, %v535
    %v537 = vpop.f32.mrf.mxu0
    %538 = vdwg.mxu0
    %539 = vmatpush.bf16.msra.mxu0 0
    %540 = vmatpush.bf16.msra.mxu0 0
    %541 = vmatpush.bf16.msra.mxu0 0
    %542 = vmatpush.bf16.msra.mxu0 0
    %543 = vmatpush.bf16.msra.mxu0 0
    %544 = vmatpush.bf16.msra.mxu0 0
    %545 = vmatpush.bf16.msra.mxu0 %v509
    %546 = vmatpush.bf16.msra.mxu0 %v488
    %547 = vmatmul.bf16.gmra.mxu0 %v494
    %v548 = vpop.f32.mrf.mxu0
    %v549 = vadd.f32 0.0, %v548
    %v550 = vpop.f32.mrf.mxu0
    %v551 = vadd.f32 0.0, %v550
    %552 = vmatmul.bf16.gmra.mxu0 %v497
    %v553 = vpop.f32.mrf.mxu0
    %v554 = vadd.f32 0.0, %v553
    %v555 = vpop.f32.mrf.mxu0
    %v556 = vadd.f32 0.0, %v555
    %557 = vmatmul.bf16.gmra.mxu0 %v500
    %v558 = vpop.f32.mrf.mxu0
    %v559 = vadd.f32 0.0, %v558
    %v560 = vpop.f32.mrf.mxu0
    %v561 = vadd.f32 0.0, %v560
    %562 = vmatmul.bf16.gmra.mxu0 %v503
    %v563 = vpop.f32.mrf.mxu0
    %v564 = vadd.f32 0.0, %v563
    %v565 = vpop.f32.mrf.mxu0
    %566 = vdwg.mxu0
    %v567 = vadd.f32 %v426, %v521
    %v568 = vadd.f32 %v427, %v549
    %v569 = vadd.f32 %v428, %v523
    %v570 = vadd.f32 %v429, %v551
    %v571 = vadd.f32 %v430, %v526
    %v572 = vadd.f32 %v431, %v554
    %v573 = vadd.f32 %v432, %v528
    %v574 = vadd.f32 %v433, %v556
    %v575 = vadd.f32 %v434, %v531
    %v576 = vadd.f32 %v435, %v559
    %v577 = vadd.f32 %v436, %v533
    %v578 = vadd.f32 %v437, %v561
    %v579 = vadd.f32 %v438, %v536
    %v580 = vadd.f32 %v439, %v564
    %v581 = vld [vmem:[#allocation2] sm:$0xc]
    %s582 = scalar_lea.vmem %s1, 128
    %v583 = vld [vmem:[%s582] sm:$0xff]
    %v584 = vld [vmem:[%s582 + $0x8] sm:$0xff]
    %v585 = vld [vmem:[%s582 + $0x10] sm:$0xff]
    %v586 = vld [vmem:[%s582 + $0x18] sm:$0x33]
    %v588 = vunpack.c.l.b16 %v581
    %v589 = vpack.c.b16 %v90, %v588
    %vm590 = vcmask 1045504
    %v591 = vrot.slane %v589, 2
    %v592 = vrot.slane %v98, 2
    %v593 = vsel %vm590, %v591, %v592
    %v594 = vrot.slane %v99, 2
    %v595 = vsel %vm590, %v592, %v594
    %v596 = vrot.slane %v448, 2
    %v597 = vsel %vm590, %v594, %v596
    %v602 = vunpack.c.l.b16 %v583
    %v603 = vunpack.c.h.b16 %v583
    %v604 = vunpack.c.l.b16 %v584
    %v605 = vunpack.c.h.b16 %v584
    %v606 = vunpack.c.l.b16 %v585
    %v607 = vunpack.c.h.b16 %v585
    %v608 = vunpack.c.l.b16 %v586
    %v609 = vunpack.c.h.b16 %v586
    %v610 = vpack.c.b16 %v604, %v602
    %v611 = vpack.c.b16 %v605, %v603
    %v612 = vpack.c.b16 %v608, %v606
    %v613 = vpack.c.b16 %v609, %v607
    %v617 = vsel %vm151, %v593, 0
    %v620 = vsel %vm151, %v595, 0
    %v623 = vsel %vm151, %v597, 0
    %v626 = vsel %vm151, %v596, 0
    %v629 = vsel %vm164, %v612, 0
    %v632 = vsel %vm164, %v613, 0
    %634 = vmatpush.bf16.msra.mxu0 0
    %635 = vmatpush.bf16.msra.mxu0 0
    %636 = vmatpush.bf16.msra.mxu0 0
    %637 = vmatpush.bf16.msra.mxu0 0
    %638 = vmatpush.bf16.msra.mxu0 0
    %639 = vmatpush.bf16.msra.mxu0 0
    %640 = vmatpush.bf16.msra.mxu0 %v629
    %641 = vmatpush.bf16.msra.mxu0 %v610
    %642 = vmatmul.bf16.gmra.mxu0 %v617
    %v643 = vpop.f32.mrf.mxu0
    %v644 = vadd.f32 0.0, %v643
    %v645 = vpop.f32.mrf.mxu0
    %v646 = vadd.f32 0.0, %v645
    %647 = vmatmul.bf16.gmra.mxu0 %v620
    %v648 = vpop.f32.mrf.mxu0
    %v649 = vadd.f32 0.0, %v648
    %v650 = vpop.f32.mrf.mxu0
    %v651 = vadd.f32 0.0, %v650
    %652 = vmatmul.bf16.gmra.mxu0 %v623
    %v653 = vpop.f32.mrf.mxu0
    %v654 = vadd.f32 0.0, %v653
    %v655 = vpop.f32.mrf.mxu0
    %v656 = vadd.f32 0.0, %v655
    %657 = vmatmul.bf16.gmra.mxu0 %v626
    %v658 = vpop.f32.mrf.mxu0
    %v659 = vadd.f32 0.0, %v658
    %v660 = vpop.f32.mrf.mxu0
    %661 = vdwg.mxu0
    %662 = vmatpush.bf16.msra.mxu0 0
    %663 = vmatpush.bf16.msra.mxu0 0
    %664 = vmatpush.bf16.msra.mxu0 0
    %665 = vmatpush.bf16.msra.mxu0 0
    %666 = vmatpush.bf16.msra.mxu0 0
    %667 = vmatpush.bf16.msra.mxu0 0
    %668 = vmatpush.bf16.msra.mxu0 %v632
    %669 = vmatpush.bf16.msra.mxu0 %v611
    %670 = vmatmul.bf16.gmra.mxu0 %v617
    %v671 = vpop.f32.mrf.mxu0
    %v672 = vadd.f32 0.0, %v671
    %v673 = vpop.f32.mrf.mxu0
    %v674 = vadd.f32 0.0, %v673
    %675 = vmatmul.bf16.gmra.mxu0 %v620
    %v676 = vpop.f32.mrf.mxu0
    %v677 = vadd.f32 0.0, %v676
    %v678 = vpop.f32.mrf.mxu0
    %v679 = vadd.f32 0.0, %v678
    %680 = vmatmul.bf16.gmra.mxu0 %v623
    %v681 = vpop.f32.mrf.mxu0
    %v682 = vadd.f32 0.0, %v681
    %v683 = vpop.f32.mrf.mxu0
    %v684 = vadd.f32 0.0, %v683
    %685 = vmatmul.bf16.gmra.mxu0 %v626
    %v686 = vpop.f32.mrf.mxu0
    %v687 = vadd.f32 0.0, %v686
    %v688 = vpop.f32.mrf.mxu0
    %689 = vdwg.mxu0
    %v690 = vadd.f32 %v567, %v644
    %v691 = vadd.f32 %v568, %v672
    %v692 = vadd.f32 %v569, %v646
    %v693 = vadd.f32 %v570, %v674
    %v694 = vadd.f32 %v571, %v649
    %v695 = vadd.f32 %v572, %v677
    %v696 = vadd.f32 %v573, %v651
    %v697 = vadd.f32 %v574, %v679
    %v698 = vadd.f32 %v575, %v654
    %v699 = vadd.f32 %v576, %v682
    %v700 = vadd.f32 %v577, %v656
    %v701 = vadd.f32 %v578, %v684
    %v702 = vadd.f32 %v579, %v659
    %v703 = vadd.f32 %v580, %v687
    %v704 = vld [vmem:[%s2] sm:$0x3]
    %v706 = vperm.slane %v704, 0
    %v707 = vperm.slane %v704, 1
    %v710 = vadd.f32 %v690, %v706
    %v711 = vadd.f32 %v691, %v707
    %v712 = vadd.f32 %v692, %v706
    %v713 = vadd.f32 %v693, %v707
    %v714 = vadd.f32 %v694, %v706
    %v715 = vadd.f32 %v695, %v707
    %v716 = vadd.f32 %v696, %v706
    %v717 = vadd.f32 %v697, %v707
    %v718 = vadd.f32 %v698, %v706
    %v719 = vadd.f32 %v699, %v707
    %v720 = vadd.f32 %v700, %v706
    %v721 = vadd.f32 %v701, %v707
    %v722 = vadd.f32 %v702, %v706
    %v723 = vadd.f32 %v703, %v707
    %v724 = vmax.f32 %v710, 0.0
    %v725 = vmax.f32 %v711, 0.0
    %v726 = vmax.f32 %v712, 0.0
    %v727 = vmax.f32 %v713, 0.0
    %v728 = vmax.f32 %v714, 0.0
    %v729 = vmax.f32 %v715, 0.0
    %v730 = vmax.f32 %v716, 0.0
    %v731 = vmax.f32 %v717, 0.0
    %v732 = vmax.f32 %v718, 0.0
    %v733 = vmax.f32 %v719, 0.0
    %v734 = vmax.f32 %v720, 0.0
    %v735 = vmax.f32 %v721, 0.0
    %v736 = vmax.f32 %v722, 0.0
    %v737 = vmax.f32 %v723, 0.0
    %738 = vst [vmem:[#allocation3] sm:$0xff] %v724
    %vm739 = vcmask 916480
    %740 = vst.msk [vmem:[#allocation3 + $0x8] sm:$0xff] %vm739, %v725
    %741 = vst [vmem:[#allocation3 + $0x10] sm:$0xff] %v726
    %742 = vst.msk [vmem:[#allocation3 + $0x18] sm:$0xff] %vm739, %v727
    %743 = vst [vmem:[#allocation3 + $0x20] sm:$0xff] %v728
    %744 = vst.msk [vmem:[#allocation3 + $0x28] sm:$0xff] %vm739, %v729
    %745 = vst [vmem:[#allocation3 + $0x30] sm:$0xff] %v730
    %746 = vst.msk [vmem:[#allocation3 + $0x38] sm:$0xff] %vm739, %v731
    %747 = vst [vmem:[#allocation3 + $0x40] sm:$0xff] %v732
    %748 = vst.msk [vmem:[#allocation3 + $0x48] sm:$0xff] %vm739, %v733
    %749 = vst [vmem:[#allocation3 + $0x50] sm:$0xff] %v734
    %750 = vst.msk [vmem:[#allocation3 + $0x58] sm:$0xff] %vm739, %v735
    %751 = vst [vmem:[#allocation3 + $0x60] sm:$0xff] %v736
    %752 = vst.msk [vmem:[#allocation3 + $0x68] sm:$0xff] %vm739, %v737
    %v753 = vlaneseq
    %vm754 = vcmp.ge.s32.totalorder %v753, 0
    %vm755 = vcmp.lt.s32.totalorder %v753, 240
    %vm756 = vmand %vm754, %vm755
    %s757 = scalar_lea.vmem [#allocation3], 112
    %758 = vst.msk [vmem:[%s757] ss:$8 sm:$0x3] %vm756, 0.0
    %759 = vst.msk [vmem:[%s757] ss:$8 sm:$0x0] %vm756, 0.0
    %v760 = vld [vmem:[#allocation3] sm:$0xff]
    %v761 = vld [vmem:[#allocation3 + $0x8] sm:$0xff]
    %v762 = vld [vmem:[#allocation3 + $0x10] sm:$0xff]
    %v763 = vld [vmem:[#allocation3 + $0x18] sm:$0xff]
    %v764 = vld [vmem:[#allocation3 + $0x20] sm:$0xff]
    %v765 = vld [vmem:[#allocation3 + $0x28] sm:$0xff]
    %v766 = vld [vmem:[#allocation3 + $0x30] sm:$0xff]
    %v767 = vld [vmem:[#allocation3 + $0x38] sm:$0xff]
    %v768 = vld [vmem:[#allocation3 + $0x40] sm:$0xff]
    %v769 = vld [vmem:[#allocation3 + $0x48] sm:$0xff]
    %v770 = vld [vmem:[#allocation3 + $0x50] sm:$0xff]
    %v771 = vld [vmem:[#allocation3 + $0x58] sm:$0xff]
    %v772 = vld [vmem:[#allocation3 + $0x60] sm:$0xff]
    %v773 = vld [vmem:[#allocation3 + $0x68] sm:$0xff]
    %v774 = vld [vmem:[#allocation3] sm:$0xfe]
    %v775 = vld [vmem:[#allocation3 + $0x8] sm:$0xfe]
    %v776 = vld [vmem:[#allocation3 + $0x70] sm:$0x1]
    %v777 = vld [vmem:[#allocation3 + $0x78] sm:$0x1]
    %vm794 = vcmask 1046528
    %v795 = vrot.slane %v774, 1
    %v796 = vrot.slane %v762, 1
    %v797 = vsel %vm794, %v795, %v796
    %v798 = vrot.slane %v775, 1
    %v799 = vrot.slane %v763, 1
    %v800 = vsel %vm794, %v798, %v799
    %v801 = vrot.slane %v764, 1
    %v802 = vsel %vm794, %v796, %v801
    %v803 = vrot.slane %v765, 1
    %v804 = vsel %vm794, %v799, %v803
    %v805 = vrot.slane %v766, 1
    %v806 = vsel %vm794, %v801, %v805
    %v807 = vrot.slane %v767, 1
    %v808 = vsel %vm794, %v803, %v807
    %v809 = vrot.slane %v768, 1
    %v810 = vsel %vm794, %v805, %v809
    %v811 = vrot.slane %v769, 1
    %v812 = vsel %vm794, %v807, %v811
    %v813 = vrot.slane %v770, 1
    %v814 = vsel %vm794, %v809, %v813
    %v815 = vrot.slane %v771, 1
    %v816 = vsel %vm794, %v811, %v815
    %v817 = vrot.slane %v772, 1
    %v818 = vsel %vm794, %v813, %v817
    %v819 = vrot.slane %v773, 1
    %v820 = vsel %vm794, %v815, %v819
    %v821 = vrot.slane %v776, 1
    %v822 = vsel %vm794, %v817, %v821
    %v823 = vrot.slane %v777, 1
    %v824 = vsel %vm794, %v819, %v823
    %v839 = vmax.f32 %v760, %v797
    %v840 = vmax.f32 %v761, %v800
    %v841 = vmax.f32 %v762, %v802
    %v842 = vmax.f32 %v763, %v804
    %v843 = vmax.f32 %v764, %v806
    %v844 = vmax.f32 %v765, %v808
    %v845 = vmax.f32 %v766, %v810
    %v846 = vmax.f32 %v767, %v812
    %v847 = vmax.f32 %v768, %v814
    %v848 = vmax.f32 %v769, %v816
    %v849 = vmax.f32 %v770, %v818
    %v850 = vmax.f32 %v771, %v820
    %v851 = vmax.f32 %v772, %v822
    %v852 = vmax.f32 %v773, %v824
    %867 = vrot.lane.b32.xlu0 %v839, 118
    %v868 = vpop.permute.xlu0 %867
    %869 = vrot.lane.b32.xlu0 %v840, 118
    %v870 = vpop.permute.xlu0 %869
    %871 = vrot.lane.b32.xlu0 %v841, 118
    %v872 = vpop.permute.xlu0 %871
    %873 = vrot.lane.b32.xlu0 %v842, 118
    %v874 = vpop.permute.xlu0 %873
    %875 = vrot.lane.b32.xlu0 %v843, 118
    %v876 = vpop.permute.xlu0 %875
    %877 = vrot.lane.b32.xlu0 %v844, 118
    %v878 = vpop.permute.xlu0 %877
    %879 = vrot.lane.b32.xlu0 %v845, 118
    %v880 = vpop.permute.xlu0 %879
    %881 = vrot.lane.b32.xlu0 %v846, 118
    %v882 = vpop.permute.xlu0 %881
    %883 = vrot.lane.b32.xlu0 %v847, 118
    %v884 = vpop.permute.xlu0 %883
    %885 = vrot.lane.b32.xlu0 %v848, 118
    %v886 = vpop.permute.xlu0 %885
    %887 = vrot.lane.b32.xlu0 %v849, 118
    %v888 = vpop.permute.xlu0 %887
    %889 = vrot.lane.b32.xlu0 %v850, 118
    %v890 = vpop.permute.xlu0 %889
    %891 = vrot.lane.b32.xlu0 %v851, 118
    %v892 = vpop.permute.xlu0 %891
    %893 = vrot.lane.b32.xlu0 %v852, 118
    %v894 = vpop.permute.xlu0 %893
    %vm895 = vcmask 965632
    %v896 = vsel %vm895, %v868, %v870
    %v897 = vsel %vm895, %v872, %v874
    %v898 = vsel %vm895, %v876, %v878
    %v899 = vsel %vm895, %v880, %v882
    %v900 = vsel %vm895, %v884, %v886
    %v901 = vsel %vm895, %v888, %v890
    %v902 = vsel %vm895, %v892, %v894
    %v917 = vmax.f32 %v839, %v896
    %v918 = vmax.f32 %v840, %v870
    %v919 = vmax.f32 %v841, %v897
    %v920 = vmax.f32 %v842, %v874
    %v921 = vmax.f32 %v843, %v898
    %v922 = vmax.f32 %v844, %v878
    %v923 = vmax.f32 %v845, %v899
    %v924 = vmax.f32 %v846, %v882
    %v925 = vmax.f32 %v847, %v900
    %v926 = vmax.f32 %v848, %v886
    %v927 = vmax.f32 %v849, %v901
    %v928 = vmax.f32 %v850, %v890
    %v929 = vmax.f32 %v851, %v902
    %v930 = vmax.f32 %v852, %v894
    %v931 = vlaneseq
    %v932 = vshrl.u32 %v931, 7
    %v933 = vadd.s32 %v932, 8
    %v934 = vadd.s32 %v932, 16
    %v935 = vadd.s32 %v932, 24
    %v936 = vadd.s32 %v932, 32
    %v937 = vadd.s32 %v932, 40
    %v938 = vadd.s32 %v932, 48
    %vm939 = vcmp.lt.s32.totalorder %v932, 0
    %v940 = vsub.s32 0, %v932
    %v941 = vsel %vm939, %v940, %v932
    %v942 = vand.u32 %v941, 65535
    %v943 = vshrl.u32 %v941, 16
    %v945 = vmul.u32 %v942, 9362
    %v946 = vmul.u32 %v942, 37449
    %v947 = vmul.u32 %v943, 9362
    %v948 = vmul.u32 %v943, 37449
    %v949 = vshll.u32 %v946, 16
    %v950 = vshrl.u32 %v946, 16
    %v951 = vshll.u32 %v947, 16
    %v952 = vshrl.u32 %v947, 16
    %vm953 = vc.u32 %v945, %v949
    %v954 = vsel %vm953, 1, 0
    %v955 = vadd.s32 %v945, %v949
    %v956 = vadd.s32 %v948, %v954
    %vm957 = vc.u32 %v955, %v951
    %v958 = vsel %vm957, 1, 0
    %v959 = vadd.s32 %v955, %v951
    %v960 = vadd.s32 %v956, %v958
    %v961 = vadd.s32 %v960, %v950
    %v962 = vadd.s32 %v961, %v952
    %vm963 = vc.u32 %v959, 2454267026
    %v964 = vsel %vm963, 1, 0
    %v965 = vadd.s32 %v962, %v964
    %v966 = vshrl.u32 %v965, 4
    %v967 = vmul.u32 %v966, 28
    %v968 = vsub.s32 %v941, %v967
    %v969 = vsub.s32 0, %v968
    %v970 = vsel %vm939, %v969, %v968
    %vm971 = vcmp.lt.s32.totalorder %v933, 0
    %v972 = vsub.s32 0, %v933
    %v973 = vsel %vm971, %v972, %v933
    %v974 = vand.u32 %v973, 65535
    %v975 = vshrl.u32 %v973, 16
    %v977 = vmul.u32 %v974, 9362
    %v978 = vmul.u32 %v974, 37449
    %v979 = vmul.u32 %v975, 9362
    %v980 = vmul.u32 %v975, 37449
    %v981 = vshll.u32 %v978, 16
    %v982 = vshrl.u32 %v978, 16
    %v983 = vshll.u32 %v979, 16
    %v984 = vshrl.u32 %v979, 16
    %vm985 = vc.u32 %v977, %v981
    %v986 = vsel %vm985, 1, 0
    %v987 = vadd.s32 %v977, %v981
    %v988 = vadd.s32 %v980, %v986
    %vm989 = vc.u32 %v987, %v983
    %v990 = vsel %vm989, 1, 0
    %v991 = vadd.s32 %v987, %v983
    %v992 = vadd.s32 %v988, %v990
    %v993 = vadd.s32 %v992, %v982
    %v994 = vadd.s32 %v993, %v984
    %vm995 = vc.u32 %v991, 2454267026
    %v996 = vsel %vm995, 1, 0
    %v997 = vadd.s32 %v994, %v996
    %v998 = vshrl.u32 %v997, 4
    %v999 = vmul.u32 %v998, 28
    %v1000 = vsub.s32 %v973, %v999
    %v1001 = vsub.s32 0, %v1000
    %v1002 = vsel %vm971, %v1001, %v1000
    %vm1003 = vcmp.lt.s32.totalorder %v934, 0
    %v1004 = vsub.s32 0, %v934
    %v1005 = vsel %vm1003, %v1004, %v934
    %v1006 = vand.u32 %v1005, 65535
    %v1007 = vshrl.u32 %v1005, 16
    %v1009 = vmul.u32 %v1006, 9362
    %v1010 = vmul.u32 %v1006, 37449
    %v1011 = vmul.u32 %v1007, 9362
    %v1012 = vmul.u32 %v1007, 37449
    %v1013 = vshll.u32 %v1010, 16
    %v1014 = vshrl.u32 %v1010, 16
    %v1015 = vshll.u32 %v1011, 16
    %v1016 = vshrl.u32 %v1011, 16
    %vm1017 = vc.u32 %v1009, %v1013
    %v1018 = vsel %vm1017, 1, 0
    %v1019 = vadd.s32 %v1009, %v1013
    %v1020 = vadd.s32 %v1012, %v1018
    %vm1021 = vc.u32 %v1019, %v1015
    %v1022 = vsel %vm1021, 1, 0
    %v1023 = vadd.s32 %v1019, %v1015
    %v1024 = vadd.s32 %v1020, %v1022
    %v1025 = vadd.s32 %v1024, %v1014
    %v1026 = vadd.s32 %v1025, %v1016
    %vm1027 = vc.u32 %v1023, 2454267026
    %v1028 = vsel %vm1027, 1, 0
    %v1029 = vadd.s32 %v1026, %v1028
    %v1030 = vshrl.u32 %v1029, 4
    %v1031 = vmul.u32 %v1030, 28
    %v1032 = vsub.s32 %v1005, %v1031
    %v1033 = vsub.s32 0, %v1032
    %v1034 = vsel %vm1003, %v1033, %v1032
    %vm1035 = vcmp.lt.s32.totalorder %v935, 0
    %v1036 = vsub.s32 0, %v935
    %v1037 = vsel %vm1035, %v1036, %v935
    %v1038 = vand.u32 %v1037, 65535
    %v1039 = vshrl.u32 %v1037, 16
    %v1041 = vmul.u32 %v1038, 9362
    %v1042 = vmul.u32 %v1038, 37449
    %v1043 = vmul.u32 %v1039, 9362
    %v1044 = vmul.u32 %v1039, 37449
    %v1045 = vshll.u32 %v1042, 16
    %v1046 = vshrl.u32 %v1042, 16
    %v1047 = vshll.u32 %v1043, 16
    %v1048 = vshrl.u32 %v1043, 16
    %vm1049 = vc.u32 %v1041, %v1045
    %v1050 = vsel %vm1049, 1, 0
    %v1051 = vadd.s32 %v1041, %v1045
    %v1052 = vadd.s32 %v1044, %v1050
    %vm1053 = vc.u32 %v1051, %v1047
    %v1054 = vsel %vm1053, 1, 0
    %v1055 = vadd.s32 %v1051, %v1047
    %v1056 = vadd.s32 %v1052, %v1054
    %v1057 = vadd.s32 %v1056, %v1046
    %v1058 = vadd.s32 %v1057, %v1048
    %vm1059 = vc.u32 %v1055, 2454267026
    %v1060 = vsel %vm1059, 1, 0
    %v1061 = vadd.s32 %v1058, %v1060
    %v1062 = vshrl.u32 %v1061, 4
    %v1063 = vmul.u32 %v1062, 28
    %v1064 = vsub.s32 %v1037, %v1063
    %v1065 = vsub.s32 0, %v1064
    %v1066 = vsel %vm1035, %v1065, %v1064
    %vm1067 = vcmp.lt.s32.totalorder %v936, 0
    %v1068 = vsub.s32 0, %v936
    %v1069 = vsel %vm1067, %v1068, %v936
    %v1070 = vand.u32 %v1069, 65535
    %v1071 = vshrl.u32 %v1069, 16
    %v1073 = vmul.u32 %v1070, 9362
    %v1074 = vmul.u32 %v1070, 37449
    %v1075 = vmul.u32 %v1071, 9362
    %v1076 = vmul.u32 %v1071, 37449
    %v1077 = vshll.u32 %v1074, 16
    %v1078 = vshrl.u32 %v1074, 16
    %v1079 = vshll.u32 %v1075, 16
    %v1080 = vshrl.u32 %v1075, 16
    %vm1081 = vc.u32 %v1073, %v1077
    %v1082 = vsel %vm1081, 1, 0
    %v1083 = vadd.s32 %v1073, %v1077
    %v1084 = vadd.s32 %v1076, %v1082
    %vm1085 = vc.u32 %v1083, %v1079
    %v1086 = vsel %vm1085, 1, 0
    %v1087 = vadd.s32 %v1083, %v1079
    %v1088 = vadd.s32 %v1084, %v1086
    %v1089 = vadd.s32 %v1088, %v1078
    %v1090 = vadd.s32 %v1089, %v1080
    %vm1091 = vc.u32 %v1087, 2454267026
    %v1092 = vsel %vm1091, 1, 0
    %v1093 = vadd.s32 %v1090, %v1092
    %v1094 = vshrl.u32 %v1093, 4
    %v1095 = vmul.u32 %v1094, 28
    %v1096 = vsub.s32 %v1069, %v1095
    %v1097 = vsub.s32 0, %v1096
    %v1098 = vsel %vm1067, %v1097, %v1096
    %vm1099 = vcmp.lt.s32.totalorder %v937, 0
    %v1100 = vsub.s32 0, %v937
    %v1101 = vsel %vm1099, %v1100, %v937
    %v1102 = vand.u32 %v1101, 65535
    %v1103 = vshrl.u32 %v1101, 16
    %v1105 = vmul.u32 %v1102, 9362
    %v1106 = vmul.u32 %v1102, 37449
    %v1107 = vmul.u32 %v1103, 9362
    %v1108 = vmul.u32 %v1103, 37449
    %v1109 = vshll.u32 %v1106, 16
    %v1110 = vshrl.u32 %v1106, 16
    %v1111 = vshll.u32 %v1107, 16
    %v1112 = vshrl.u32 %v1107, 16
    %vm1113 = vc.u32 %v1105, %v1109
    %v1114 = vsel %vm1113, 1, 0
    %v1115 = vadd.s32 %v1105, %v1109
    %v1116 = vadd.s32 %v1108, %v1114
    %vm1117 = vc.u32 %v1115, %v1111
    %v1118 = vsel %vm1117, 1, 0
    %v1119 = vadd.s32 %v1115, %v1111
    %v1120 = vadd.s32 %v1116, %v1118
    %v1121 = vadd.s32 %v1120, %v1110
    %v1122 = vadd.s32 %v1121, %v1112
    %vm1123 = vc.u32 %v1119, 2454267026
    %v1124 = vsel %vm1123, 1, 0
    %v1125 = vadd.s32 %v1122, %v1124
    %v1126 = vshrl.u32 %v1125, 4
    %v1127 = vmul.u32 %v1126, 28
    %v1128 = vsub.s32 %v1101, %v1127
    %v1129 = vsub.s32 0, %v1128
    %v1130 = vsel %vm1099, %v1129, %v1128
    %vm1131 = vcmp.lt.s32.totalorder %v938, 0
    %v1132 = vsub.s32 0, %v938
    %v1133 = vsel %vm1131, %v1132, %v938
    %v1134 = vand.u32 %v1133, 65535
    %v1135 = vshrl.u32 %v1133, 16
    %v1137 = vmul.u32 %v1134, 9362
    %v1138 = vmul.u32 %v1134, 37449
    %v1139 = vmul.u32 %v1135, 9362
    %v1140 = vmul.u32 %v1135, 37449
    %v1141 = vshll.u32 %v1138, 16
    %v1142 = vshrl.u32 %v1138, 16
    %v1143 = vshll.u32 %v1139, 16
    %v1144 = vshrl.u32 %v1139, 16
    %vm1145 = vc.u32 %v1137, %v1141
    %v1146 = vsel %vm1145, 1, 0
    %v1147 = vadd.s32 %v1137, %v1141
    %v1148 = vadd.s32 %v1140, %v1146
    %vm1149 = vc.u32 %v1147, %v1143
    %v1150 = vsel %vm1149, 1, 0
    %v1151 = vadd.s32 %v1147, %v1143
    %v1152 = vadd.s32 %v1148, %v1150
    %v1153 = vadd.s32 %v1152, %v1142
    %v1154 = vadd.s32 %v1153, %v1144
    %vm1155 = vc.u32 %v1151, 2454267026
    %v1156 = vsel %vm1155, 1, 0
    %v1157 = vadd.s32 %v1154, %v1156
    %v1158 = vshrl.u32 %v1157, 4
    %v1159 = vmul.u32 %v1158, 28
    %v1160 = vsub.s32 %v1133, %v1159
    %v1161 = vsub.s32 0, %v1160
    %v1162 = vsel %vm1131, %v1161, %v1160
    %vm1163 = vcmp.ne.s32.totalorder %v970, 0
    %vm1164 = vcmp.ne.s32.totalorder %v1002, 0
    %vm1165 = vcmp.ne.s32.totalorder %v1034, 0
    %vm1166 = vcmp.ne.s32.totalorder %v1066, 0
    %vm1167 = vcmp.ne.s32.totalorder %v1098, 0
    %vm1168 = vcmp.ne.s32.totalorder %v1130, 0
    %vm1169 = vcmp.ne.s32.totalorder %v1162, 0
    %vm1170 = vcmp.lt.s32.totalorder %v970, 0
    %vm1171 = vcmp.lt.s32.totalorder %v1002, 0
    %vm1172 = vcmp.lt.s32.totalorder %v1034, 0
    %vm1173 = vcmp.lt.s32.totalorder %v1066, 0
    %vm1174 = vcmp.lt.s32.totalorder %v1098, 0
    %vm1175 = vcmp.lt.s32.totalorder %v1130, 0
    %vm1176 = vcmp.lt.s32.totalorder %v1162, 0
    %vm1177 = vmand %vm1170, %vm1163
    %vm1178 = vmand %vm1171, %vm1164
    %vm1179 = vmand %vm1172, %vm1165
    %vm1180 = vmand %vm1173, %vm1166
    %vm1181 = vmand %vm1174, %vm1167
    %vm1182 = vmand %vm1175, %vm1168
    %vm1183 = vmand %vm1176, %vm1169
    %v1184 = vadd.s32 %v970, 28
    %v1185 = vadd.s32 %v1002, 28
    %v1186 = vadd.s32 %v1034, 28
    %v1187 = vadd.s32 %v1066, 28
    %v1188 = vadd.s32 %v1098, 28
    %v1189 = vadd.s32 %v1130, 28
    %v1190 = vadd.s32 %v1162, 28
    %v1191 = vsel %vm1177, %v1184, %v970
    %v1192 = vsel %vm1178, %v1185, %v1002
    %v1193 = vsel %vm1179, %v1186, %v1034
    %v1194 = vsel %vm1180, %v1187, %v1066
    %v1195 = vsel %vm1181, %v1188, %v1098
    %v1196 = vsel %vm1182, %v1189, %v1130
    %v1197 = vsel %vm1183, %v1190, %v1162
    %vm1198 = vcmp.lt.s32.totalorder %v1191, 0
    %v1199 = vsub.s32 0, %v1191
    %v1200 = vsel %vm1198, %v1199, %v1191
    %v1201 = vshrl.u32 %v1200, 1
    %v1202 = vand.u32 %v1200, 1
    %v1203 = vsub.s32 0, %v1202
    %v1204 = vsel %vm1198, %v1203, %v1202
    %vm1205 = vcmp.lt.s32.totalorder %v1192, 0
    %v1206 = vsub.s32 0, %v1192
    %v1207 = vsel %vm1205, %v1206, %v1192
    %v1208 = vshrl.u32 %v1207, 1
    %v1209 = vand.u32 %v1207, 1
    %v1210 = vsub.s32 0, %v1209
    %v1211 = vsel %vm1205, %v1210, %v1209
    %vm1212 = vcmp.lt.s32.totalorder %v1193, 0
    %v1213 = vsub.s32 0, %v1193
    %v1214 = vsel %vm1212, %v1213, %v1193
    %v1215 = vshrl.u32 %v1214, 1
    %v1216 = vand.u32 %v1214, 1
    %v1217 = vsub.s32 0, %v1216
    %v1218 = vsel %vm1212, %v1217, %v1216
    %vm1219 = vcmp.lt.s32.totalorder %v1194, 0
    %v1220 = vsub.s32 0, %v1194
    %v1221 = vsel %vm1219, %v1220, %v1194
    %v1222 = vshrl.u32 %v1221, 1
    %v1223 = vand.u32 %v1221, 1
    %v1224 = vsub.s32 0, %v1223
    %v1225 = vsel %vm1219, %v1224, %v1223
    %vm1226 = vcmp.lt.s32.totalorder %v1195, 0
    %v1227 = vsub.s32 0, %v1195
    %v1228 = vsel %vm1226, %v1227, %v1195
    %v1229 = vshrl.u32 %v1228, 1
    %v1230 = vand.u32 %v1228, 1
    %v1231 = vsub.s32 0, %v1230
    %v1232 = vsel %vm1226, %v1231, %v1230
    %vm1233 = vcmp.lt.s32.totalorder %v1196, 0
    %v1234 = vsub.s32 0, %v1196
    %v1235 = vsel %vm1233, %v1234, %v1196
    %v1236 = vshrl.u32 %v1235, 1
    %v1237 = vand.u32 %v1235, 1
    %v1238 = vsub.s32 0, %v1237
    %v1239 = vsel %vm1233, %v1238, %v1237
    %vm1240 = vcmp.lt.s32.totalorder %v1197, 0
    %v1241 = vsub.s32 0, %v1197
    %v1242 = vsel %vm1240, %v1241, %v1197
    %v1243 = vshrl.u32 %v1242, 1
    %v1244 = vand.u32 %v1242, 1
    %v1245 = vsub.s32 0, %v1244
    %v1246 = vsel %vm1240, %v1245, %v1244
    %vm1247 = vcmp.ne.s32.totalorder %v1204, 0
    %vm1248 = vcmp.ne.s32.totalorder %v1211, 0
    %vm1249 = vcmp.ne.s32.totalorder %v1218, 0
    %vm1250 = vcmp.ne.s32.totalorder %v1225, 0
    %vm1251 = vcmp.ne.s32.totalorder %v1232, 0
    %vm1252 = vcmp.ne.s32.totalorder %v1239, 0
    %vm1253 = vcmp.ne.s32.totalorder %v1246, 0
    %vm1254 = vcmp.lt.s32.totalorder %v1204, 0
    %vm1255 = vcmp.lt.s32.totalorder %v1211, 0
    %vm1256 = vcmp.lt.s32.totalorder %v1218, 0
    %vm1257 = vcmp.lt.s32.totalorder %v1225, 0
    %vm1258 = vcmp.lt.s32.totalorder %v1232, 0
    %vm1259 = vcmp.lt.s32.totalorder %v1239, 0
    %vm1260 = vcmp.lt.s32.totalorder %v1246, 0
    %vm1261 = vmand %vm1254, %vm1247
    %vm1262 = vmand %vm1255, %vm1248
    %vm1263 = vmand %vm1256, %vm1249
    %vm1264 = vmand %vm1257, %vm1250
    %vm1265 = vmand %vm1258, %vm1251
    %vm1266 = vmand %vm1259, %vm1252
    %vm1267 = vmand %vm1260, %vm1253
    %v1268 = vadd.s32 %v1204, 2
    %v1269 = vadd.s32 %v1211, 2
    %v1270 = vadd.s32 %v1218, 2
    %v1271 = vadd.s32 %v1225, 2
    %v1272 = vadd.s32 %v1232, 2
    %v1273 = vadd.s32 %v1239, 2
    %v1274 = vadd.s32 %v1246, 2
    %v1275 = vsel %vm1261, %v1268, %v1204
    %v1276 = vsel %vm1262, %v1269, %v1211
    %v1277 = vsel %vm1263, %v1270, %v1218
    %v1278 = vsel %vm1264, %v1271, %v1225
    %v1279 = vsel %vm1265, %v1272, %v1232
    %v1280 = vsel %vm1266, %v1273, %v1239
    %v1281 = vsel %vm1267, %v1274, %v1246
    %vm1282 = vcmp.eq.s32.totalorder %v1275, 0
    %vm1283 = vcmp.eq.s32.totalorder %v1276, 0
    %vm1284 = vcmp.eq.s32.totalorder %v1277, 0
    %vm1285 = vcmp.eq.s32.totalorder %v1278, 0
    %vm1286 = vcmp.eq.s32.totalorder %v1279, 0
    %vm1287 = vcmp.eq.s32.totalorder %v1280, 0
    %vm1288 = vcmp.eq.s32.totalorder %v1281, 0
    %vm1289 = vcmp.lt.s32.totalorder %v1191, 24
    %vm1290 = vcmp.lt.s32.totalorder %v1192, 24
    %vm1291 = vcmp.lt.s32.totalorder %v1193, 24
    %vm1292 = vcmp.lt.s32.totalorder %v1194, 24
    %vm1293 = vcmp.lt.s32.totalorder %v1195, 24
    %vm1294 = vcmp.lt.s32.totalorder %v1196, 24
    %vm1295 = vcmp.lt.s32.totalorder %v1197, 24
    %vm1296 = vmand %vm1282, %vm1289
    %vm1297 = vmand %vm1283, %vm1290
    %vm1298 = vmand %vm1284, %vm1291
    %vm1299 = vmand %vm1285, %vm1292
    %vm1300 = vmand %vm1286, %vm1293
    %vm1301 = vmand %vm1287, %vm1294
    %vm1302 = vmand %vm1288, %vm1295
    %v1303 = vsel %vm1296, %v917, 0.0
    %v1304 = vsel %vm1296, %v918, 0.0
    %v1305 = vsel %vm1297, %v919, 0.0
    %v1306 = vsel %vm1297, %v920, 0.0
    %v1307 = vsel %vm1298, %v921, 0.0
    %v1308 = vsel %vm1298, %v922, 0.0
    %v1309 = vsel %vm1299, %v923, 0.0
    %v1310 = vsel %vm1299, %v924, 0.0
    %v1311 = vsel %vm1300, %v925, 0.0
    %v1312 = vsel %vm1300, %v926, 0.0
    %v1313 = vsel %vm1301, %v927, 0.0
    %v1314 = vsel %vm1301, %v928, 0.0
    %v1315 = vsel %vm1302, %v929, 0.0
    %v1316 = vsel %vm1302, %v930, 0.0
    %vm1317 = vcmask 1040384
    %vm1318 = vcmask 831492
    %vm1319 = vmor %vm1318, %vm1317
    %1320 = vst.msk [vmem:[#allocation2] sm:$0x11] %vm1319, 0
    %v1321 = vpack.c.bf16 %v1304, %v1303
    %v1322 = vpack.c.bf16 %v1306, %v1305
    %v1323 = vpack.c.bf16 %v1308, %v1307
    %v1324 = vpack.c.bf16 %v1310, %v1309
    %v1325 = vpack.c.bf16 %v1312, %v1311
    %v1326 = vpack.c.bf16 %v1314, %v1313
    %v1327 = vpack.c.bf16 %v1316, %v1315
    %vm1335 = vcmask 1040384
    %vm1336 = vcmask 1044484
    %vm1337 = vmor %vm1335, %vm1336
    %v1338 = vrot.slane %v1321, 7
    %v1339 = vrot.slane %v1338, 4
    %v1340 = vrot.slane %v1322, 7
    %v1341 = vsel %vm1337, %v1339, %v1340
    %v1342 = vrot.slane %v1340, 4
    %v1343 = vrot.slane %v1323, 7
    %v1344 = vsel %vm1337, %v1342, %v1343
    %v1345 = vrot.slane %v1343, 4
    %v1346 = vrot.slane %v1324, 7
    %v1347 = vsel %vm1337, %v1345, %v1346
    %v1348 = vrot.slane %v1346, 4
    %v1349 = vrot.slane %v1325, 7
    %v1350 = vsel %vm1337, %v1348, %v1349
    %v1351 = vrot.slane %v1349, 4
    %v1352 = vrot.slane %v1326, 7
    %v1353 = vsel %vm1337, %v1351, %v1352
    %v1354 = vrot.slane %v1352, 4
    %v1355 = vrot.slane %v1327, 7
    %v1356 = vsel %vm1337, %v1354, %v1355
    %v1357 = vrot.slane %v1355, 4
    %vm1366 = vcmask 1043457
    %vm1367 = vcmask 834565
    %vm1368 = vmor %vm1367, %vm1366
    %1369 = vst.msk [vmem:[#allocation2] sm:$0xee] %vm1368, %v1338
    %vm1370 = vcmask 1043456
    %vm1371 = vcmask 834564
    %vm1372 = vmor %vm1371, %vm1370
    %1373 = vst.msk [vmem:[#allocation2 + $0x8] sm:$0xff] %vm1372, %v1341
    %1374 = vst.msk [vmem:[#allocation2 + $0x10] sm:$0xff] %vm1372, %v1344
    %1375 = vst.msk [vmem:[#allocation2 + $0x18] sm:$0xff] %vm1372, %v1347
    %1376 = vst.msk [vmem:[#allocation2 + $0x20] sm:$0xff] %vm1372, %v1350
    %1377 = vst.msk [vmem:[#allocation2 + $0x28] sm:$0xff] %vm1372, %v1353
    %1378 = vst.msk [vmem:[#allocation2 + $0x30] sm:$0xff] %vm1372, %v1356
    %1379 = vst.msk [vmem:[#allocation2 + $0x38] sm:$0x11] %vm1319, %v1357
    %vm1380 = vcmask 1041409
    %vm1381 = vcmask 832517
    %vm1382 = vmor %vm1381, %vm1380
    %1383 = vst.msk [vmem:[#allocation2 + $0x38] sm:$0x22] %vm1382, 0
    %v1384 = vld [vmem:[#allocation2] sm:$0xff]
    %v1385 = vld [vmem:[#allocation2 + $0x8] sm:$0xff]
    %v1386 = vld [vmem:[#allocation2 + $0x10] sm:$0xff]
    %v1387 = vld [vmem:[#allocation2 + $0x18] sm:$0xff]
    %v1388 = vld [vmem:[#allocation2 + $0x20] sm:$0xff]
    %v1389 = vld [vmem:[#allocation2 + $0x28] sm:$0xff]
    %v1390 = vld [vmem:[#allocation2 + $0x30] sm:$0xff]
    %v1391 = vld [vmem:[%s3] sm:$0xff]
    %v1392 = vld [vmem:[%s3 + $0x8] sm:$0xff]
    %v1393 = vld [vmem:[%s3 + $0x10] sm:$0xff]
    %v1394 = vld [vmem:[%s3 + $0x18] sm:$0xff]
    %v1395 = vld [vmem:[%s3 + $0x20] sm:$0xff]
    %v1396 = vld [vmem:[%s3 + $0x28] sm:$0xff]
    %v1397 = vld [vmem:[%s3 + $0x30] sm:$0xff]
    %v1398 = vld [vmem:[%s3 + $0x38] sm:$0xff]
    %v1399 = vld [vmem:[%s3 + $0x40] sm:$0xff]
    %v1400 = vld [vmem:[%s3 + $0x48] sm:$0xff]
    %v1401 = vld [vmem:[%s3 + $0x50] sm:$0xff]
    %v1402 = vld [vmem:[%s3 + $0x58] sm:$0xff]
    %v1403 = vld [vmem:[%s3 + $0x60] sm:$0xff]
    %v1404 = vld [vmem:[%s3 + $0x68] sm:$0xff]
    %v1405 = vld [vmem:[%s3 + $0x70] sm:$0xff]
    %v1406 = vld [vmem:[%s3 + $0x78] sm:$0xff]
    %v1407 = vld [vmem:[%s3 + $0x80] sm:$0xff]
    %v1408 = vld [vmem:[%s3 + $0x88] sm:$0xff]
    %v1409 = vld [vmem:[%s3 + $0x90] sm:$0xff]
    %v1410 = vld [vmem:[%s3 + $0x98] sm:$0xff]
    %v1411 = vld [vmem:[%s3 + $0xa0] sm:$0xff]
    %v1412 = vld [vmem:[%s3 + $0xa8] sm:$0xff]
    %v1413 = vld [vmem:[%s3 + $0xb0] sm:$0xff]
    %v1414 = vld [vmem:[%s3 + $0xb8] sm:$0xff]
    %v1415 = vld [vmem:[%s3 + $0xc0] sm:$0xff]
    %v1416 = vld [vmem:[%s3 + $0xc8] sm:$0xff]
    %v1417 = vld [vmem:[%s3 + $0xd0] sm:$0xff]
    %v1418 = vld [vmem:[%s3 + $0xd8] sm:$0xff]
    %v1419 = vld [vmem:[%s3 + $0xe0] sm:$0x77]
    %v1420 = vld [vmem:[#allocation2] sm:$0xee]
    %v1421 = vld [vmem:[#allocation2 + $0x38] sm:$0x11]
    %s1422 = scalar_lea.vmem %s3, 232
    %v1423 = vld [vmem:[%s1422] sm:$0xff]
    %v1424 = vld [vmem:[%s1422 + $0x8] sm:$0xff]
    %v1425 = vld [vmem:[%s1422 + $0x10] sm:$0xff]
    %v1426 = vld [vmem:[%s1422 + $0x18] sm:$0xff]
    %v1427 = vld [vmem:[%s1422 + $0x20] sm:$0xff]
    %v1428 = vld [vmem:[%s1422 + $0x28] sm:$0xff]
    %v1429 = vld [vmem:[%s1422 + $0x30] sm:$0xff]
    %v1430 = vld [vmem:[%s1422 + $0x38] sm:$0xff]
    %v1431 = vld [vmem:[%s1422 + $0x40] sm:$0xff]
    %v1432 = vld [vmem:[%s1422 + $0x48] sm:$0xff]
    %v1433 = vld [vmem:[%s1422 + $0x50] sm:$0xff]
    %v1434 = vld [vmem:[%s1422 + $0x58] sm:$0xff]
    %v1435 = vld [vmem:[%s1422 + $0x60] sm:$0xff]
    %v1436 = vld [vmem:[%s1422 + $0x68] sm:$0xff]
    %v1437 = vld [vmem:[%s1422 + $0x70] sm:$0xff]
    %v1438 = vld [vmem:[%s1422 + $0x78] sm:$0xff]
    %v1439 = vld [vmem:[%s1422 + $0x80] sm:$0xff]
    %v1440 = vld [vmem:[%s1422 + $0x88] sm:$0xff]
    %v1441 = vld [vmem:[%s1422 + $0x90] sm:$0xff]
    %v1442 = vld [vmem:[%s1422 + $0x98] sm:$0xff]
    %v1443 = vld [vmem:[%s1422 + $0xa0] sm:$0xff]
    %v1444 = vld [vmem:[%s1422 + $0xa8] sm:$0xff]
    %v1445 = vld [vmem:[%s1422 + $0xb0] sm:$0xff]
    %v1446 = vld [vmem:[%s1422 + $0xb8] sm:$0xff]
    %v1447 = vld [vmem:[%s1422 + $0xc0] sm:$0xff]
    %v1448 = vld [vmem:[%s1422 + $0xc8] sm:$0xff]
    %v1449 = vld [vmem:[%s1422 + $0xd0] sm:$0xff]
    %v1450 = vld [vmem:[%s1422 + $0xd8] sm:$0xff]
    %v1451 = vld [vmem:[%s1422 + $0xe0] sm:$0x77]
    %v1460 = vunpack.c.l.b16 %v1420
    %v1461 = vunpack.c.h.b16 %v1420
    %v1462 = vunpack.c.l.b16 %v1385
    %v1463 = vunpack.c.h.b16 %v1385
    %v1464 = vunpack.c.l.b16 %v1386
    %v1465 = vunpack.c.h.b16 %v1386
    %v1466 = vunpack.c.l.b16 %v1387
    %v1467 = vunpack.c.h.b16 %v1387
    %v1468 = vunpack.c.l.b16 %v1388
    %v1469 = vunpack.c.h.b16 %v1388
    %v1470 = vunpack.c.l.b16 %v1389
    %v1471 = vunpack.c.h.b16 %v1389
    %v1472 = vunpack.c.l.b16 %v1390
    %v1473 = vunpack.c.h.b16 %v1390
    %v1474 = vunpack.c.l.b16 %v1421
    %v1475 = vunpack.c.h.b16 %v1421
    %v1476 = vpack.c.b16 %v1462, %v1460
    %v1477 = vpack.c.b16 %v1463, %v1461
    %v1478 = vpack.c.b16 %v1466, %v1464
    %v1479 = vpack.c.b16 %v1467, %v1465
    %v1480 = vpack.c.b16 %v1470, %v1468
    %v1481 = vpack.c.b16 %v1471, %v1469
    %v1482 = vpack.c.b16 %v1474, %v1472
    %v1483 = vpack.c.b16 %v1475, %v1473
    %v1484 = vrot.slane %v1476, 1
    %v1485 = vrot.slane %v1478, 1
    %v1486 = vsel %vm326, %v1484, %v1485
    %v1487 = vrot.slane %v1477, 1
    %v1488 = vrot.slane %v1479, 1
    %v1489 = vsel %vm326, %v1487, %v1488
    %v1490 = vrot.slane %v1480, 1
    %v1491 = vsel %vm326, %v1485, %v1490
    %v1492 = vrot.slane %v1481, 1
    %v1493 = vsel %vm326, %v1488, %v1492
    %v1494 = vrot.slane %v1482, 1
    %v1495 = vsel %vm326, %v1490, %v1494
    %v1496 = vrot.slane %v1483, 1
    %v1497 = vsel %vm326, %v1492, %v1496
    %v1531 = vunpack.c.l.b16 %v1423
    %v1532 = vunpack.c.h.b16 %v1423
    %v1533 = vunpack.c.l.b16 %v1424
    %v1534 = vunpack.c.h.b16 %v1424
    %v1535 = vunpack.c.l.b16 %v1425
    %v1536 = vunpack.c.h.b16 %v1425
    %v1537 = vunpack.c.l.b16 %v1426
    %v1538 = vunpack.c.h.b16 %v1426
    %v1539 = vunpack.c.l.b16 %v1427
    %v1540 = vunpack.c.h.b16 %v1427
    %v1541 = vunpack.c.l.b16 %v1428
    %v1542 = vunpack.c.h.b16 %v1428
    %v1543 = vunpack.c.l.b16 %v1429
    %v1544 = vunpack.c.h.b16 %v1429
    %v1545 = vunpack.c.l.b16 %v1430
    %v1546 = vunpack.c.h.b16 %v1430
    %v1547 = vunpack.c.l.b16 %v1431
    %v1548 = vunpack.c.h.b16 %v1431
    %v1549 = vunpack.c.l.b16 %v1432
    %v1550 = vunpack.c.h.b16 %v1432
    %v1551 = vunpack.c.l.b16 %v1433
    %v1552 = vunpack.c.h.b16 %v1433
    %v1553 = vunpack.c.l.b16 %v1434
    %v1554 = vunpack.c.h.b16 %v1434
    %v1555 = vunpack.c.l.b16 %v1435
    %v1556 = vunpack.c.h.b16 %v1435
    %v1557 = vunpack.c.l.b16 %v1436
    %v1558 = vunpack.c.h.b16 %v1436
    %v1559 = vunpack.c.l.b16 %v1437
    %v1560 = vunpack.c.h.b16 %v1437
    %v1561 = vunpack.c.l.b16 %v1438
    %v1562 = vunpack.c.h.b16 %v1438
    %v1563 = vunpack.c.l.b16 %v1439
    %v1564 = vunpack.c.h.b16 %v1439
    %v1565 = vunpack.c.l.b16 %v1440
    %v1566 = vunpack.c.h.b16 %v1440
    %v1567 = vunpack.c.l.b16 %v1441
    %v1568 = vunpack.c.h.b16 %v1441
    %v1569 = vunpack.c.l.b16 %v1442
    %v1570 = vunpack.c.h.b16 %v1442
    %v1571 = vunpack.c.l.b16 %v1443
    %v1572 = vunpack.c.h.b16 %v1443
    %v1573 = vunpack.c.l.b16 %v1444
    %v1574 = vunpack.c.h.b16 %v1444
    %v1575 = vunpack.c.l.b16 %v1445
    %v1576 = vunpack.c.h.b16 %v1445
    %v1577 = vunpack.c.l.b16 %v1446
    %v1578 = vunpack.c.h.b16 %v1446
    %v1579 = vunpack.c.l.b16 %v1447
    %v1580 = vunpack.c.h.b16 %v1447
    %v1581 = vunpack.c.l.b16 %v1448
    %v1582 = vunpack.c.h.b16 %v1448
    %v1583 = vunpack.c.l.b16 %v1449
    %v1584 = vunpack.c.h.b16 %v1449
    %v1585 = vunpack.c.l.b16 %v1450
    %v1586 = vunpack.c.h.b16 %v1450
    %v1587 = vunpack.c.l.b16 %v1451
    %v1588 = vunpack.c.h.b16 %v1451
    %v1589 = vpack.c.b16 %v1533, %v1531
    %v1590 = vpack.c.b16 %v1534, %v1532
    %v1591 = vpack.c.b16 %v1537, %v1535
    %v1592 = vpack.c.b16 %v1538, %v1536
    %v1593 = vpack.c.b16 %v1541, %v1539
    %v1594 = vpack.c.b16 %v1542, %v1540
    %v1595 = vpack.c.b16 %v1545, %v1543
    %v1596 = vpack.c.b16 %v1546, %v1544
    %v1597 = vpack.c.b16 %v1549, %v1547
    %v1598 = vpack.c.b16 %v1550, %v1548
    %v1599 = vpack.c.b16 %v1553, %v1551
    %v1600 = vpack.c.b16 %v1554, %v1552
    %v1601 = vpack.c.b16 %v1557, %v1555
    %v1602 = vpack.c.b16 %v1558, %v1556
    %v1603 = vpack.c.b16 %v1561, %v1559
    %v1604 = vpack.c.b16 %v1562, %v1560
    %v1605 = vpack.c.b16 %v1565, %v1563
    %v1606 = vpack.c.b16 %v1566, %v1564
    %v1607 = vpack.c.b16 %v1569, %v1567
    %v1608 = vpack.c.b16 %v1570, %v1568
    %v1609 = vpack.c.b16 %v1573, %v1571
    %v1610 = vpack.c.b16 %v1574, %v1572
    %v1611 = vpack.c.b16 %v1577, %v1575
    %v1612 = vpack.c.b16 %v1578, %v1576
    %v1613 = vpack.c.b16 %v1581, %v1579
    %v1614 = vpack.c.b16 %v1582, %v1580
    %v1615 = vpack.c.b16 %v1585, %v1583
    %v1616 = vpack.c.b16 %v1586, %v1584
    %v1617 = vpack.c.b16 %v1587, %v1587
    %v1618 = vpack.c.b16 %v1588, %v1588
    %vm1647 = vcmask 834560
    %v1649 = vsel %vm1647, %v1489, 0
    %v1652 = vsel %vm1647, %v1493, 0
    %v1655 = vsel %vm1647, %v1497, 0
    %v1658 = vsel %vm1647, %v1496, 0
    %vm1660 = vcmask 1042432
    %v1662 = vsel %vm1660, %v1617, 0
    %v1665 = vsel %vm1660, %v1618, 0
    %1667 = vmatpush.bf16.msra.mxu0 %v1603
    %1668 = vmatpush.bf16.msra.mxu0 %v1601
    %1669 = vmatpush.bf16.msra.mxu0 %v1599
    %1670 = vmatpush.bf16.msra.mxu0 %v1597
    %1671 = vmatpush.bf16.msra.mxu0 %v1595
    %1672 = vmatpush.bf16.msra.mxu0 %v1593
    %1673 = vmatpush.bf16.msra.mxu0 %v1591
    %1674 = vmatpush.bf16.msra.mxu0 %v1589
    %1675 = vmatmul.bf16.gmra.mxu0 %v1486
    %v1676 = vpop.f32.mrf.mxu0
    %v1677 = vadd.f32 0.0, %v1676
    %v1678 = vpop.f32.mrf.mxu0
    %v1679 = vadd.f32 0.0, %v1678
    %1680 = vmatmul.bf16.gmra.mxu0 %v1491
    %v1681 = vpop.f32.mrf.mxu0
    %v1682 = vadd.f32 0.0, %v1681
    %v1683 = vpop.f32.mrf.mxu0
    %v1684 = vadd.f32 0.0, %v1683
    %1685 = vmatmul.bf16.gmra.mxu0 %v1495
    %v1686 = vpop.f32.mrf.mxu0
    %v1687 = vadd.f32 0.0, %v1686
    %v1688 = vpop.f32.mrf.mxu0
    %v1689 = vadd.f32 0.0, %v1688
    %1690 = vmatmul.bf16.gmra.mxu0 %v1494
    %v1691 = vpop.f32.mrf.mxu0
    %v1692 = vadd.f32 0.0, %v1691
    %v1693 = vpop.f32.mrf.mxu0
    %1694 = vdwg.mxu0
    %1695 = vmatpush.bf16.msra.mxu0 0
    %1696 = vmatpush.bf16.msra.mxu0 %v1662
    %1697 = vmatpush.bf16.msra.mxu0 %v1615
    %1698 = vmatpush.bf16.msra.mxu0 %v1613
    %1699 = vmatpush.bf16.msra.mxu0 %v1611
    %1700 = vmatpush.bf16.msra.mxu0 %v1609
    %1701 = vmatpush.bf16.msra.mxu0 %v1607
    %1702 = vmatpush.bf16.msra.mxu0 %v1605
    %1703 = vmatmul.bf16.gmra.mxu0 %v1649
    %v1704 = vpop.f32.mrf.mxu0
    %v1705 = vadd.f32 %v1677, %v1704
    %v1706 = vpop.f32.mrf.mxu0
    %v1707 = vadd.f32 %v1679, %v1706
    %1708 = vmatmul.bf16.gmra.mxu0 %v1652
    %v1709 = vpop.f32.mrf.mxu0
    %v1710 = vadd.f32 %v1682, %v1709
    %v1711 = vpop.f32.mrf.mxu0
    %v1712 = vadd.f32 %v1684, %v1711
    %1713 = vmatmul.bf16.gmra.mxu0 %v1655
    %v1714 = vpop.f32.mrf.mxu0
    %v1715 = vadd.f32 %v1687, %v1714
    %v1716 = vpop.f32.mrf.mxu0
    %v1717 = vadd.f32 %v1689, %v1716
    %1718 = vmatmul.bf16.gmra.mxu0 %v1658
    %v1719 = vpop.f32.mrf.mxu0
    %v1720 = vadd.f32 %v1692, %v1719
    %v1721 = vpop.f32.mrf.mxu0
    %1722 = vdwg.mxu0
    %1723 = vmatpush.bf16.msra.mxu0 %v1604
    %1724 = vmatpush.bf16.msra.mxu0 %v1602
    %1725 = vmatpush.bf16.msra.mxu0 %v1600
    %1726 = vmatpush.bf16.msra.mxu0 %v1598
    %1727 = vmatpush.bf16.msra.mxu0 %v1596
    %1728 = vmatpush.bf16.msra.mxu0 %v1594
    %1729 = vmatpush.bf16.msra.mxu0 %v1592
    %1730 = vmatpush.bf16.msra.mxu0 %v1590
    %1731 = vmatmul.bf16.gmra.mxu0 %v1486
    %v1732 = vpop.f32.mrf.mxu0
    %v1733 = vadd.f32 0.0, %v1732
    %v1734 = vpop.f32.mrf.mxu0
    %v1735 = vadd.f32 0.0, %v1734
    %1736 = vmatmul.bf16.gmra.mxu0 %v1491
    %v1737 = vpop.f32.mrf.mxu0
    %v1738 = vadd.f32 0.0, %v1737
    %v1739 = vpop.f32.mrf.mxu0
    %v1740 = vadd.f32 0.0, %v1739
    %1741 = vmatmul.bf16.gmra.mxu0 %v1495
    %v1742 = vpop.f32.mrf.mxu0
    %v1743 = vadd.f32 0.0, %v1742
    %v1744 = vpop.f32.mrf.mxu0
    %v1745 = vadd.f32 0.0, %v1744
    %1746 = vmatmul.bf16.gmra.mxu0 %v1494
    %v1747 = vpop.f32.mrf.mxu0
    %v1748 = vadd.f32 0.0, %v1747
    %v1749 = vpop.f32.mrf.mxu0
    %1750 = vdwg.mxu0
    %1751 = vmatpush.bf16.msra.mxu0 0
    %1752 = vmatpush.bf16.msra.mxu0 %v1665
    %1753 = vmatpush.bf16.msra.mxu0 %v1616
    %1754 = vmatpush.bf16.msra.mxu0 %v1614
    %1755 = vmatpush.bf16.msra.mxu0 %v1612
    %1756 = vmatpush.bf16.msra.mxu0 %v1610
    %1757 = vmatpush.bf16.msra.mxu0 %v1608
    %1758 = vmatpush.bf16.msra.mxu0 %v1606
    %1759 = vmatmul.bf16.gmra.mxu0 %v1649
    %v1760 = vpop.f32.mrf.mxu0
    %v1761 = vadd.f32 %v1733, %v1760
    %v1762 = vpop.f32.mrf.mxu0
    %v1763 = vadd.f32 %v1735, %v1762
    %1764 = vmatmul.bf16.gmra.mxu0 %v1652
    %v1765 = vpop.f32.mrf.mxu0
    %v1766 = vadd.f32 %v1738, %v1765
    %v1767 = vpop.f32.mrf.mxu0
    %v1768 = vadd.f32 %v1740, %v1767
    %1769 = vmatmul.bf16.gmra.mxu0 %v1655
    %v1770 = vpop.f32.mrf.mxu0
    %v1771 = vadd.f32 %v1743, %v1770
    %v1772 = vpop.f32.mrf.mxu0
    %v1773 = vadd.f32 %v1745, %v1772
    %1774 = vmatmul.bf16.gmra.mxu0 %v1658
    %v1775 = vpop.f32.mrf.mxu0
    %v1776 = vadd.f32 %v1748, %v1775
    %v1777 = vpop.f32.mrf.mxu0
    %1778 = vdwg.mxu0
    %v1780 = vunpack.c.l.b16 %v1384
    %v1781 = vunpack.c.h.b16 %v1384
    %v1782 = vpack.c.b16 %v1462, %v1780
    %v1783 = vpack.c.b16 %v1463, %v1781
    %v1784 = vpack.c.b16 %v1472, %v1472
    %v1785 = vpack.c.b16 %v1473, %v1473
    %v1819 = vunpack.c.l.b16 %v1391
    %v1820 = vunpack.c.h.b16 %v1391
    %v1821 = vunpack.c.l.b16 %v1392
    %v1822 = vunpack.c.h.b16 %v1392
    %v1823 = vunpack.c.l.b16 %v1393
    %v1824 = vunpack.c.h.b16 %v1393
    %v1825 = vunpack.c.l.b16 %v1394
    %v1826 = vunpack.c.h.b16 %v1394
    %v1827 = vunpack.c.l.b16 %v1395
    %v1828 = vunpack.c.h.b16 %v1395
    %v1829 = vunpack.c.l.b16 %v1396
    %v1830 = vunpack.c.h.b16 %v1396
    %v1831 = vunpack.c.l.b16 %v1397
    %v1832 = vunpack.c.h.b16 %v1397
    %v1833 = vunpack.c.l.b16 %v1398
    %v1834 = vunpack.c.h.b16 %v1398
    %v1835 = vunpack.c.l.b16 %v1399
    %v1836 = vunpack.c.h.b16 %v1399
    %v1837 = vunpack.c.l.b16 %v1400
    %v1838 = vunpack.c.h.b16 %v1400
    %v1839 = vunpack.c.l.b16 %v1401
    %v1840 = vunpack.c.h.b16 %v1401
    %v1841 = vunpack.c.l.b16 %v1402
    %v1842 = vunpack.c.h.b16 %v1402
    %v1843 = vunpack.c.l.b16 %v1403
    %v1844 = vunpack.c.h.b16 %v1403
    %v1845 = vunpack.c.l.b16 %v1404
    %v1846 = vunpack.c.h.b16 %v1404
    %v1847 = vunpack.c.l.b16 %v1405
    %v1848 = vunpack.c.h.b16 %v1405
    %v1849 = vunpack.c.l.b16 %v1406
    %v1850 = vunpack.c.h.b16 %v1406
    %v1851 = vunpack.c.l.b16 %v1407
    %v1852 = vunpack.c.h.b16 %v1407
    %v1853 = vunpack.c.l.b16 %v1408
    %v1854 = vunpack.c.h.b16 %v1408
    %v1855 = vunpack.c.l.b16 %v1409
    %v1856 = vunpack.c.h.b16 %v1409
    %v1857 = vunpack.c.l.b16 %v1410
    %v1858 = vunpack.c.h.b16 %v1410
    %v1859 = vunpack.c.l.b16 %v1411
    %v1860 = vunpack.c.h.b16 %v1411
    %v1861 = vunpack.c.l.b16 %v1412
    %v1862 = vunpack.c.h.b16 %v1412
    %v1863 = vunpack.c.l.b16 %v1413
    %v1864 = vunpack.c.h.b16 %v1413
    %v1865 = vunpack.c.l.b16 %v1414
    %v1866 = vunpack.c.h.b16 %v1414
    %v1867 = vunpack.c.l.b16 %v1415
    %v1868 = vunpack.c.h.b16 %v1415
    %v1869 = vunpack.c.l.b16 %v1416
    %v1870 = vunpack.c.h.b16 %v1416
    %v1871 = vunpack.c.l.b16 %v1417
    %v1872 = vunpack.c.h.b16 %v1417
    %v1873 = vunpack.c.l.b16 %v1418
    %v1874 = vunpack.c.h.b16 %v1418
    %v1875 = vunpack.c.l.b16 %v1419
    %v1876 = vunpack.c.h.b16 %v1419
    %v1877 = vpack.c.b16 %v1821, %v1819
    %v1878 = vpack.c.b16 %v1822, %v1820
    %v1879 = vpack.c.b16 %v1825, %v1823
    %v1880 = vpack.c.b16 %v1826, %v1824
    %v1881 = vpack.c.b16 %v1829, %v1827
    %v1882 = vpack.c.b16 %v1830, %v1828
    %v1883 = vpack.c.b16 %v1833, %v1831
    %v1884 = vpack.c.b16 %v1834, %v1832
    %v1885 = vpack.c.b16 %v1837, %v1835
    %v1886 = vpack.c.b16 %v1838, %v1836
    %v1887 = vpack.c.b16 %v1841, %v1839
    %v1888 = vpack.c.b16 %v1842, %v1840
    %v1889 = vpack.c.b16 %v1845, %v1843
    %v1890 = vpack.c.b16 %v1846, %v1844
    %v1891 = vpack.c.b16 %v1849, %v1847
    %v1892 = vpack.c.b16 %v1850, %v1848
    %v1893 = vpack.c.b16 %v1853, %v1851
    %v1894 = vpack.c.b16 %v1854, %v1852
    %v1895 = vpack.c.b16 %v1857, %v1855
    %v1896 = vpack.c.b16 %v1858, %v1856
    %v1897 = vpack.c.b16 %v1861, %v1859
    %v1898 = vpack.c.b16 %v1862, %v1860
    %v1899 = vpack.c.b16 %v1865, %v1863
    %v1900 = vpack.c.b16 %v1866, %v1864
    %v1901 = vpack.c.b16 %v1869, %v1867
    %v1902 = vpack.c.b16 %v1870, %v1868
    %v1903 = vpack.c.b16 %v1873, %v1871
    %v1904 = vpack.c.b16 %v1874, %v1872
    %v1905 = vpack.c.b16 %v1875, %v1875
    %v1906 = vpack.c.b16 %v1876, %v1876
    %v1936 = vsel %vm1647, %v1783, 0
    %v1939 = vsel %vm1647, %v1479, 0
    %v1942 = vsel %vm1647, %v1481, 0
    %v1945 = vsel %vm1647, %v1785, 0
    %v1948 = vsel %vm1660, %v1905, 0
    %v1951 = vsel %vm1660, %v1906, 0
    %1953 = vmatpush.bf16.msra.mxu0 %v1891
    %1954 = vmatpush.bf16.msra.mxu0 %v1889
    %1955 = vmatpush.bf16.msra.mxu0 %v1887
    %1956 = vmatpush.bf16.msra.mxu0 %v1885
    %1957 = vmatpush.bf16.msra.mxu0 %v1883
    %1958 = vmatpush.bf16.msra.mxu0 %v1881
    %1959 = vmatpush.bf16.msra.mxu0 %v1879
    %1960 = vmatpush.bf16.msra.mxu0 %v1877
    %1961 = vmatmul.bf16.gmra.mxu0 %v1782
    %v1962 = vpop.f32.mrf.mxu0
    %v1963 = vadd.f32 %v1705, %v1962
    %v1964 = vpop.f32.mrf.mxu0
    %v1965 = vadd.f32 %v1707, %v1964
    %1966 = vmatmul.bf16.gmra.mxu0 %v1478
    %v1967 = vpop.f32.mrf.mxu0
    %v1968 = vadd.f32 %v1710, %v1967
    %v1969 = vpop.f32.mrf.mxu0
    %v1970 = vadd.f32 %v1712, %v1969
    %1971 = vmatmul.bf16.gmra.mxu0 %v1480
    %v1972 = vpop.f32.mrf.mxu0
    %v1973 = vadd.f32 %v1715, %v1972
    %v1974 = vpop.f32.mrf.mxu0
    %v1975 = vadd.f32 %v1717, %v1974
    %1976 = vmatmul.bf16.gmra.mxu0 %v1784
    %v1977 = vpop.f32.mrf.mxu0
    %v1978 = vadd.f32 %v1720, %v1977
    %v1979 = vpop.f32.mrf.mxu0
    %1980 = vdwg.mxu0
    %1981 = vmatpush.bf16.msra.mxu0 0
    %1982 = vmatpush.bf16.msra.mxu0 %v1948
    %1983 = vmatpush.bf16.msra.mxu0 %v1903
    %1984 = vmatpush.bf16.msra.mxu0 %v1901
    %1985 = vmatpush.bf16.msra.mxu0 %v1899
    %1986 = vmatpush.bf16.msra.mxu0 %v1897
    %1987 = vmatpush.bf16.msra.mxu0 %v1895
    %1988 = vmatpush.bf16.msra.mxu0 %v1893
    %1989 = vmatmul.bf16.gmra.mxu0 %v1936
    %v1990 = vpop.f32.mrf.mxu0
    %v1991 = vadd.f32 %v1963, %v1990
    %v1992 = vpop.f32.mrf.mxu0
    %v1993 = vadd.f32 %v1965, %v1992
    %1994 = vmatmul.bf16.gmra.mxu0 %v1939
    %v1995 = vpop.f32.mrf.mxu0
    %v1996 = vadd.f32 %v1968, %v1995
    %v1997 = vpop.f32.mrf.mxu0
    %v1998 = vadd.f32 %v1970, %v1997
    %1999 = vmatmul.bf16.gmra.mxu0 %v1942
    %v2000 = vpop.f32.mrf.mxu0
    %v2001 = vadd.f32 %v1973, %v2000
    %v2002 = vpop.f32.mrf.mxu0
    %v2003 = vadd.f32 %v1975, %v2002
    %2004 = vmatmul.bf16.gmra.mxu0 %v1945
    %v2005 = vpop.f32.mrf.mxu0
    %v2006 = vadd.f32 %v1978, %v2005
    %v2007 = vpop.f32.mrf.mxu0
    %2008 = vdwg.mxu0
    %2009 = vmatpush.bf16.msra.mxu0 %v1892
    %2010 = vmatpush.bf16.msra.mxu0 %v1890
    %2011 = vmatpush.bf16.msra.mxu0 %v1888
    %2012 = vmatpush.bf16.msra.mxu0 %v1886
    %2013 = vmatpush.bf16.msra.mxu0 %v1884
    %2014 = vmatpush.bf16.msra.mxu0 %v1882
    %2015 = vmatpush.bf16.msra.mxu0 %v1880
    %2016 = vmatpush.bf16.msra.mxu0 %v1878
    %2017 = vmatmul.bf16.gmra.mxu0 %v1782
    %v2018 = vpop.f32.mrf.mxu0
    %v2019 = vadd.f32 %v1761, %v2018
    %v2020 = vpop.f32.mrf.mxu0
    %v2021 = vadd.f32 %v1763, %v2020
    %2022 = vmatmul.bf16.gmra.mxu0 %v1478
    %v2023 = vpop.f32.mrf.mxu0
    %v2024 = vadd.f32 %v1766, %v2023
    %v2025 = vpop.f32.mrf.mxu0
    %v2026 = vadd.f32 %v1768, %v2025
    %2027 = vmatmul.bf16.gmra.mxu0 %v1480
    %v2028 = vpop.f32.mrf.mxu0
    %v2029 = vadd.f32 %v1771, %v2028
    %v2030 = vpop.f32.mrf.mxu0
    %v2031 = vadd.f32 %v1773, %v2030
    %2032 = vmatmul.bf16.gmra.mxu0 %v1784
    %v2033 = vpop.f32.mrf.mxu0
    %v2034 = vadd.f32 %v1776, %v2033
    %v2035 = vpop.f32.mrf.mxu0
    %2036 = vdwg.mxu0
    %2037 = vmatpush.bf16.msra.mxu0 0
    %2038 = vmatpush.bf16.msra.mxu0 %v1951
    %2039 = vmatpush.bf16.msra.mxu0 %v1904
    %2040 = vmatpush.bf16.msra.mxu0 %v1902
    %2041 = vmatpush.bf16.msra.mxu0 %v1900
    %2042 = vmatpush.bf16.msra.mxu0 %v1898
    %2043 = vmatpush.bf16.msra.mxu0 %v1896
    %2044 = vmatpush.bf16.msra.mxu0 %v1894
    %2045 = vmatmul.bf16.gmra.mxu0 %v1936
    %v2046 = vpop.f32.mrf.mxu0
    %v2047 = vadd.f32 %v2019, %v2046
    %v2048 = vpop.f32.mrf.mxu0
    %v2049 = vadd.f32 %v2021, %v2048
    %2050 = vmatmul.bf16.gmra.mxu0 %v1939
    %v2051 = vpop.f32.mrf.mxu0
    %v2052 = vadd.f32 %v2024, %v2051
    %v2053 = vpop.f32.mrf.mxu0
    %v2054 = vadd.f32 %v2026, %v2053
    %2055 = vmatmul.bf16.gmra.mxu0 %v1942
    %v2056 = vpop.f32.mrf.mxu0
    %v2057 = vadd.f32 %v2029, %v2056
    %v2058 = vpop.f32.mrf.mxu0
    %v2059 = vadd.f32 %v2031, %v2058
    %2060 = vmatmul.bf16.gmra.mxu0 %v1945
    %v2061 = vpop.f32.mrf.mxu0
    %v2062 = vadd.f32 %v2034, %v2061
    %v2063 = vpop.f32.mrf.mxu0
    %2064 = vdwg.mxu0
    %v2065 = vld [vmem:[#allocation2] sm:$0xcc]
    %v2066 = vld [vmem:[#allocation2 + $0x38] sm:$0x33]
    %s2067 = scalar_lea.vmem %s3, 464
    %v2068 = vld [vmem:[%s2067] sm:$0xff]
    %v2069 = vld [vmem:[%s2067 + $0x8] sm:$0xff]
    %v2070 = vld [vmem:[%s2067 + $0x10] sm:$0xff]
    %v2071 = vld [vmem:[%s2067 + $0x18] sm:$0xff]
    %v2072 = vld [vmem:[%s2067 + $0x20] sm:$0xff]
    %v2073 = vld [vmem:[%s2067 + $0x28] sm:$0xff]
    %v2074 = vld [vmem:[%s2067 + $0x30] sm:$0xff]
    %v2075 = vld [vmem:[%s2067 + $0x38] sm:$0xff]
    %v2076 = vld [vmem:[%s2067 + $0x40] sm:$0xff]
    %v2077 = vld [vmem:[%s2067 + $0x48] sm:$0xff]
    %v2078 = vld [vmem:[%s2067 + $0x50] sm:$0xff]
    %v2079 = vld [vmem:[%s2067 + $0x58] sm:$0xff]
    %v2080 = vld [vmem:[%s2067 + $0x60] sm:$0xff]
    %v2081 = vld [vmem:[%s2067 + $0x68] sm:$0xff]
    %v2082 = vld [vmem:[%s2067 + $0x70] sm:$0xff]
    %v2083 = vld [vmem:[%s2067 + $0x78] sm:$0xff]
    %v2084 = vld [vmem:[%s2067 + $0x80] sm:$0xff]
    %v2085 = vld [vmem:[%s2067 + $0x88] sm:$0xff]
    %v2086 = vld [vmem:[%s2067 + $0x90] sm:$0xff]
    %v2087 = vld [vmem:[%s2067 + $0x98] sm:$0xff]
    %v2088 = vld [vmem:[%s2067 + $0xa0] sm:$0xff]
    %v2089 = vld [vmem:[%s2067 + $0xa8] sm:$0xff]
    %v2090 = vld [vmem:[%s2067 + $0xb0] sm:$0xff]
    %v2091 = vld [vmem:[%s2067 + $0xb8] sm:$0xff]
    %v2092 = vld [vmem:[%s2067 + $0xc0] sm:$0xff]
    %v2093 = vld [vmem:[%s2067 + $0xc8] sm:$0xff]
    %v2094 = vld [vmem:[%s2067 + $0xd0] sm:$0xff]
    %v2095 = vld [vmem:[%s2067 + $0xd8] sm:$0xff]
    %v2096 = vld [vmem:[%s2067 + $0xe0] sm:$0x77]
    %v2099 = vunpack.c.l.b16 %v2065
    %v2100 = vunpack.c.h.b16 %v2065
    %v2101 = vunpack.c.l.b16 %v2066
    %v2102 = vunpack.c.h.b16 %v2066
    %v2103 = vpack.c.b16 %v1462, %v2099
    %v2104 = vpack.c.b16 %v1463, %v2100
    %v2105 = vpack.c.b16 %v2101, %v1472
    %v2106 = vpack.c.b16 %v2102, %v1473
    %v2107 = vrot.slane %v2103, 2
    %v2108 = vrot.slane %v1478, 2
    %v2109 = vsel %vm590, %v2107, %v2108
    %v2110 = vrot.slane %v2104, 2
    %v2111 = vrot.slane %v1479, 2
    %v2112 = vsel %vm590, %v2110, %v2111
    %v2113 = vrot.slane %v1480, 2
    %v2114 = vsel %vm590, %v2108, %v2113
    %v2115 = vrot.slane %v1481, 2
    %v2116 = vsel %vm590, %v2111, %v2115
    %v2117 = vrot.slane %v2105, 2
    %v2118 = vsel %vm590, %v2113, %v2117
    %v2119 = vrot.slane %v2106, 2
    %v2120 = vsel %vm590, %v2115, %v2119
    %v2154 = vunpack.c.l.b16 %v2068
    %v2155 = vunpack.c.h.b16 %v2068
    %v2156 = vunpack.c.l.b16 %v2069
    %v2157 = vunpack.c.h.b16 %v2069
    %v2158 = vunpack.c.l.b16 %v2070
    %v2159 = vunpack.c.h.b16 %v2070
    %v2160 = vunpack.c.l.b16 %v2071
    %v2161 = vunpack.c.h.b16 %v2071
    %v2162 = vunpack.c.l.b16 %v2072
    %v2163 = vunpack.c.h.b16 %v2072
    %v2164 = vunpack.c.l.b16 %v2073
    %v2165 = vunpack.c.h.b16 %v2073
    %v2166 = vunpack.c.l.b16 %v2074
    %v2167 = vunpack.c.h.b16 %v2074
    %v2168 = vunpack.c.l.b16 %v2075
    %v2169 = vunpack.c.h.b16 %v2075
    %v2170 = vunpack.c.l.b16 %v2076
    %v2171 = vunpack.c.h.b16 %v2076
    %v2172 = vunpack.c.l.b16 %v2077
    %v2173 = vunpack.c.h.b16 %v2077
    %v2174 = vunpack.c.l.b16 %v2078
    %v2175 = vunpack.c.h.b16 %v2078
    %v2176 = vunpack.c.l.b16 %v2079
    %v2177 = vunpack.c.h.b16 %v2079
    %v2178 = vunpack.c.l.b16 %v2080
    %v2179 = vunpack.c.h.b16 %v2080
    %v2180 = vunpack.c.l.b16 %v2081
    %v2181 = vunpack.c.h.b16 %v2081
    %v2182 = vunpack.c.l.b16 %v2082
    %v2183 = vunpack.c.h.b16 %v2082
    %v2184 = vunpack.c.l.b16 %v2083
    %v2185 = vunpack.c.h.b16 %v2083
    %v2186 = vunpack.c.l.b16 %v2084
    %v2187 = vunpack.c.h.b16 %v2084
    %v2188 = vunpack.c.l.b16 %v2085
    %v2189 = vunpack.c.h.b16 %v2085
    %v2190 = vunpack.c.l.b16 %v2086
    %v2191 = vunpack.c.h.b16 %v2086
    %v2192 = vunpack.c.l.b16 %v2087
    %v2193 = vunpack.c.h.b16 %v2087
    %v2194 = vunpack.c.l.b16 %v2088
    %v2195 = vunpack.c.h.b16 %v2088
    %v2196 = vunpack.c.l.b16 %v2089
    %v2197 = vunpack.c.h.b16 %v2089
    %v2198 = vunpack.c.l.b16 %v2090
    %v2199 = vunpack.c.h.b16 %v2090
    %v2200 = vunpack.c.l.b16 %v2091
    %v2201 = vunpack.c.h.b16 %v2091
    %v2202 = vunpack.c.l.b16 %v2092
    %v2203 = vunpack.c.h.b16 %v2092
    %v2204 = vunpack.c.l.b16 %v2093
    %v2205 = vunpack.c.h.b16 %v2093
    %v2206 = vunpack.c.l.b16 %v2094
    %v2207 = vunpack.c.h.b16 %v2094
    %v2208 = vunpack.c.l.b16 %v2095
    %v2209 = vunpack.c.h.b16 %v2095
    %v2210 = vunpack.c.l.b16 %v2096
    %v2211 = vunpack.c.h.b16 %v2096
    %v2212 = vpack.c.b16 %v2156, %v2154
    %v2213 = vpack.c.b16 %v2157, %v2155
    %v2214 = vpack.c.b16 %v2160, %v2158
    %v2215 = vpack.c.b16 %v2161, %v2159
    %v2216 = vpack.c.b16 %v2164, %v2162
    %v2217 = vpack.c.b16 %v2165, %v2163
    %v2218 = vpack.c.b16 %v2168, %v2166
    %v2219 = vpack.c.b16 %v2169, %v2167
    %v2220 = vpack.c.b16 %v2172, %v2170
    %v2221 = vpack.c.b16 %v2173, %v2171
    %v2222 = vpack.c.b16 %v2176, %v2174
    %v2223 = vpack.c.b16 %v2177, %v2175
    %v2224 = vpack.c.b16 %v2180, %v2178
    %v2225 = vpack.c.b16 %v2181, %v2179
    %v2226 = vpack.c.b16 %v2184, %v2182
    %v2227 = vpack.c.b16 %v2185, %v2183
    %v2228 = vpack.c.b16 %v2188, %v2186
    %v2229 = vpack.c.b16 %v2189, %v2187
    %v2230 = vpack.c.b16 %v2192, %v2190
    %v2231 = vpack.c.b16 %v2193, %v2191
    %v2232 = vpack.c.b16 %v2196, %v2194
    %v2233 = vpack.c.b16 %v2197, %v2195
    %v2234 = vpack.c.b16 %v2200, %v2198
    %v2235 = vpack.c.b16 %v2201, %v2199
    %v2236 = vpack.c.b16 %v2204, %v2202
    %v2237 = vpack.c.b16 %v2205, %v2203
    %v2238 = vpack.c.b16 %v2208, %v2206
    %v2239 = vpack.c.b16 %v2209, %v2207
    %v2240 = vpack.c.b16 %v2210, %v2210
    %v2241 = vpack.c.b16 %v2211, %v2211
    %v2271 = vsel %vm1647, %v2112, 0
    %v2274 = vsel %vm1647, %v2116, 0
    %v2277 = vsel %vm1647, %v2120, 0
    %v2280 = vsel %vm1647, %v2119, 0
    %v2283 = vsel %vm1660, %v2240, 0
    %v2286 = vsel %vm1660, %v2241, 0
    %2288 = vmatpush.bf16.msra.mxu0 %v2226
    %2289 = vmatpush.bf16.msra.mxu0 %v2224
    %2290 = vmatpush.bf16.msra.mxu0 %v2222
    %2291 = vmatpush.bf16.msra.mxu0 %v2220
    %2292 = vmatpush.bf16.msra.mxu0 %v2218
    %2293 = vmatpush.bf16.msra.mxu0 %v2216
    %2294 = vmatpush.bf16.msra.mxu0 %v2214
    %2295 = vmatpush.bf16.msra.mxu0 %v2212
    %2296 = vmatmul.bf16.gmra.mxu0 %v2109
    %v2297 = vpop.f32.mrf.mxu0
    %v2298 = vadd.f32 0.0, %v2297
    %v2299 = vpop.f32.mrf.mxu0
    %v2300 = vadd.f32 0.0, %v2299
    %2301 = vmatmul.bf16.gmra.mxu0 %v2114
    %v2302 = vpop.f32.mrf.mxu0
    %v2303 = vadd.f32 0.0, %v2302
    %v2304 = vpop.f32.mrf.mxu0
    %v2305 = vadd.f32 0.0, %v2304
    %2306 = vmatmul.bf16.gmra.mxu0 %v2118
    %v2307 = vpop.f32.mrf.mxu0
    %v2308 = vadd.f32 0.0, %v2307
    %v2309 = vpop.f32.mrf.mxu0
    %v2310 = vadd.f32 0.0, %v2309
    %2311 = vmatmul.bf16.gmra.mxu0 %v2117
    %v2312 = vpop.f32.mrf.mxu0
    %v2313 = vadd.f32 0.0, %v2312
    %v2314 = vpop.f32.mrf.mxu0
    %2315 = vdwg.mxu0
    %2316 = vmatpush.bf16.msra.mxu0 0
    %2317 = vmatpush.bf16.msra.mxu0 %v2283
    %2318 = vmatpush.bf16.msra.mxu0 %v2238
    %2319 = vmatpush.bf16.msra.mxu0 %v2236
    %2320 = vmatpush.bf16.msra.mxu0 %v2234
    %2321 = vmatpush.bf16.msra.mxu0 %v2232
    %2322 = vmatpush.bf16.msra.mxu0 %v2230
    %2323 = vmatpush.bf16.msra.mxu0 %v2228
    %2324 = vmatmul.bf16.gmra.mxu0 %v2271
    %v2325 = vpop.f32.mrf.mxu0
    %v2326 = vadd.f32 %v2298, %v2325
    %v2327 = vpop.f32.mrf.mxu0
    %v2328 = vadd.f32 %v2300, %v2327
    %2329 = vmatmul.bf16.gmra.mxu0 %v2274
    %v2330 = vpop.f32.mrf.mxu0
    %v2331 = vadd.f32 %v2303, %v2330
    %v2332 = vpop.f32.mrf.mxu0
    %v2333 = vadd.f32 %v2305, %v2332
    %2334 = vmatmul.bf16.gmra.mxu0 %v2277
    %v2335 = vpop.f32.mrf.mxu0
    %v2336 = vadd.f32 %v2308, %v2335
    %v2337 = vpop.f32.mrf.mxu0
    %v2338 = vadd.f32 %v2310, %v2337
    %2339 = vmatmul.bf16.gmra.mxu0 %v2280
    %v2340 = vpop.f32.mrf.mxu0
    %v2341 = vadd.f32 %v2313, %v2340
    %v2342 = vpop.f32.mrf.mxu0
    %2343 = vdwg.mxu0
    %2344 = vmatpush.bf16.msra.mxu0 %v2227
    %2345 = vmatpush.bf16.msra.mxu0 %v2225
    %2346 = vmatpush.bf16.msra.mxu0 %v2223
    %2347 = vmatpush.bf16.msra.mxu0 %v2221
    %2348 = vmatpush.bf16.msra.mxu0 %v2219
    %2349 = vmatpush.bf16.msra.mxu0 %v2217
    %2350 = vmatpush.bf16.msra.mxu0 %v2215
    %2351 = vmatpush.bf16.msra.mxu0 %v2213
    %2352 = vmatmul.bf16.gmra.mxu0 %v2109
    %v2353 = vpop.f32.mrf.mxu0
    %v2354 = vadd.f32 0.0, %v2353
    %v2355 = vpop.f32.mrf.mxu0
    %v2356 = vadd.f32 0.0, %v2355
    %2357 = vmatmul.bf16.gmra.mxu0 %v2114
    %v2358 = vpop.f32.mrf.mxu0
    %v2359 = vadd.f32 0.0, %v2358
    %v2360 = vpop.f32.mrf.mxu0
    %v2361 = vadd.f32 0.0, %v2360
    %2362 = vmatmul.bf16.gmra.mxu0 %v2118
    %v2363 = vpop.f32.mrf.mxu0
    %v2364 = vadd.f32 0.0, %v2363
    %v2365 = vpop.f32.mrf.mxu0
    %v2366 = vadd.f32 0.0, %v2365
    %2367 = vmatmul.bf16.gmra.mxu0 %v2117
    %v2368 = vpop.f32.mrf.mxu0
    %v2369 = vadd.f32 0.0, %v2368
    %v2370 = vpop.f32.mrf.mxu0
    %2371 = vdwg.mxu0
    %2372 = vmatpush.bf16.msra.mxu0 0
    %2373 = vmatpush.bf16.msra.mxu0 %v2286
    %2374 = vmatpush.bf16.msra.mxu0 %v2239
    %2375 = vmatpush.bf16.msra.mxu0 %v2237
    %2376 = vmatpush.bf16.msra.mxu0 %v2235
    %2377 = vmatpush.bf16.msra.mxu0 %v2233
    %2378 = vmatpush.bf16.msra.mxu0 %v2231
    %2379 = vmatpush.bf16.msra.mxu0 %v2229
    %2380 = vmatmul.bf16.gmra.mxu0 %v2271
    %v2381 = vpop.f32.mrf.mxu0
    %v2382 = vadd.f32 %v2354, %v2381
    %v2383 = vpop.f32.mrf.mxu0
    %v2384 = vadd.f32 %v2356, %v2383
    %2385 = vmatmul.bf16.gmra.mxu0 %v2274
    %v2386 = vpop.f32.mrf.mxu0
    %v2387 = vadd.f32 %v2359, %v2386
    %v2388 = vpop.f32.mrf.mxu0
    %v2389 = vadd.f32 %v2361, %v2388
    %2390 = vmatmul.bf16.gmra.mxu0 %v2277
    %v2391 = vpop.f32.mrf.mxu0
    %v2392 = vadd.f32 %v2364, %v2391
    %v2393 = vpop.f32.mrf.mxu0
    %v2394 = vadd.f32 %v2366, %v2393
    %2395 = vmatmul.bf16.gmra.mxu0 %v2280
    %v2396 = vpop.f32.mrf.mxu0
    %v2397 = vadd.f32 %v2369, %v2396
    %v2398 = vpop.f32.mrf.mxu0
    %2399 = vdwg.mxu0
    %v2400 = vadd.f32 %v1991, %v2326
    %v2401 = vadd.f32 %v2047, %v2382
    %v2402 = vadd.f32 %v1993, %v2328
    %v2403 = vadd.f32 %v2049, %v2384
    %v2404 = vadd.f32 %v1996, %v2331
    %v2405 = vadd.f32 %v2052, %v2387
    %v2406 = vadd.f32 %v1998, %v2333
    %v2407 = vadd.f32 %v2054, %v2389
    %v2408 = vadd.f32 %v2001, %v2336
    %v2409 = vadd.f32 %v2057, %v2392
    %v2410 = vadd.f32 %v2003, %v2338
    %v2411 = vadd.f32 %v2059, %v2394
    %v2412 = vadd.f32 %v2006, %v2341
    %v2413 = vadd.f32 %v2062, %v2397
    %v2414 = vld [vmem:[%s4] sm:$0x3]
    %v2416 = vperm.slane %v2414, 0
    %v2417 = vperm.slane %v2414, 1
    %v2420 = vadd.f32 %v2400, %v2416
    %v2421 = vadd.f32 %v2401, %v2417
    %v2422 = vadd.f32 %v2402, %v2416
    %v2423 = vadd.f32 %v2403, %v2417
    %v2424 = vadd.f32 %v2404, %v2416
    %v2425 = vadd.f32 %v2405, %v2417
    %v2426 = vadd.f32 %v2406, %v2416
    %v2427 = vadd.f32 %v2407, %v2417
    %v2428 = vadd.f32 %v2408, %v2416
    %v2429 = vadd.f32 %v2409, %v2417
    %v2430 = vadd.f32 %v2410, %v2416
    %v2431 = vadd.f32 %v2411, %v2417
    %v2432 = vadd.f32 %v2412, %v2416
    %v2433 = vadd.f32 %v2413, %v2417
    %v2434 = vadd.f32 %v2420, %v1303
    %v2435 = vadd.f32 %v2421, %v1304
    %v2436 = vadd.f32 %v2422, %v1305
    %v2437 = vadd.f32 %v2423, %v1306
    %v2438 = vadd.f32 %v2424, %v1307
    %v2439 = vadd.f32 %v2425, %v1308
    %v2440 = vadd.f32 %v2426, %v1309
    %v2441 = vadd.f32 %v2427, %v1310
    %v2442 = vadd.f32 %v2428, %v1311
    %v2443 = vadd.f32 %v2429, %v1312
    %v2444 = vadd.f32 %v2430, %v1313
    %v2445 = vadd.f32 %v2431, %v1314
    %v2446 = vadd.f32 %v2432, %v1315
    %v2447 = vadd.f32 %v2433, %v1316
    %v2448 = vmax.f32 %v2434, 0.0
    %v2449 = vmax.f32 %v2435, 0.0
    %v2450 = vmax.f32 %v2436, 0.0
    %v2451 = vmax.f32 %v2437, 0.0
    %v2452 = vmax.f32 %v2438, 0.0
    %v2453 = vmax.f32 %v2439, 0.0
    %v2454 = vmax.f32 %v2440, 0.0
    %v2455 = vmax.f32 %v2441, 0.0
    %v2456 = vmax.f32 %v2442, 0.0
    %v2457 = vmax.f32 %v2443, 0.0
    %v2458 = vmax.f32 %v2444, 0.0
    %v2459 = vmax.f32 %v2445, 0.0
    %v2460 = vmax.f32 %v2446, 0.0
    %v2461 = vmax.f32 %v2447, 0.0
    %v2462 = vpack.c.bf16 %v2449, %v2448
    %v2463 = vpack.c.bf16 %v2451, %v2450
    %v2464 = vpack.c.bf16 %v2453, %v2452
    %v2465 = vpack.c.bf16 %v2455, %v2454
    %v2466 = vpack.c.bf16 %v2457, %v2456
    %v2467 = vpack.c.bf16 %v2459, %v2458
    %v2468 = vpack.c.bf16 %v2461, %v2460
    %2469 = vst.msk [vmem:[#allocation2] sm:$0xff] %vm1372, %v2462
    %2470 = vst.msk [vmem:[#allocation2 + $0x8] sm:$0xff] %vm1372, %v2463
    %2471 = vst.msk [vmem:[#allocation2 + $0x10] sm:$0xff] %vm1372, %v2464
    %2472 = vst.msk [vmem:[#allocation2 + $0x18] sm:$0xff] %vm1372, %v2465
    %2473 = vst.msk [vmem:[#allocation2 + $0x20] sm:$0xff] %vm1372, %v2466
    %2474 = vst.msk [vmem:[#allocation2 + $0x28] sm:$0xff] %vm1372, %v2467
    %2475 = vst.msk [vmem:[#allocation2 + $0x30] sm:$0xff] %vm1372, %v2468
    %2476 = vst.msk [vmem:[#allocation2 + $0x38] sm:$0xff] %vm1372, 0
    %v2477 = vld [vmem:[#allocation2] sm:$0xff]
    %v2478 = vld [vmem:[#allocation2 + $0x8] sm:$0xff]
    %v2479 = vld [vmem:[#allocation2 + $0x10] sm:$0xff]
    %v2480 = vld [vmem:[#allocation2 + $0x18] sm:$0xff]
    %v2481 = vld [vmem:[#allocation2 + $0x20] sm:$0xff]
    %v2482 = vld [vmem:[#allocation2 + $0x28] sm:$0xff]
    %v2483 = vld [vmem:[#allocation2 + $0x30] sm:$0xff]
    %v2484 = vld [vmem:[%s5] sm:$0xff]
    %v2485 = vld [vmem:[%s5 + $0x8] sm:$0xff]
    %v2486 = vld [vmem:[%s5 + $0x10] sm:$0xff]
    %v2487 = vld [vmem:[%s5 + $0x18] sm:$0xff]
    %v2488 = vld [vmem:[%s5 + $0x20] sm:$0xff]
    %v2489 = vld [vmem:[%s5 + $0x28] sm:$0xff]
    %v2490 = vld [vmem:[%s5 + $0x30] sm:$0xff]
    %v2491 = vld [vmem:[%s5 + $0x38] sm:$0xff]
    %v2492 = vld [vmem:[%s5 + $0x40] sm:$0xff]
    %v2493 = vld [vmem:[%s5 + $0x48] sm:$0xff]
    %v2494 = vld [vmem:[%s5 + $0x50] sm:$0xff]
    %v2495 = vld [vmem:[%s5 + $0x58] sm:$0xff]
    %v2496 = vld [vmem:[%s5 + $0x60] sm:$0xff]
    %v2497 = vld [vmem:[%s5 + $0x68] sm:$0xff]
    %v2498 = vld [vmem:[%s5 + $0x70] sm:$0xff]
    %v2499 = vld [vmem:[%s5 + $0x78] sm:$0xff]
    %v2500 = vld [vmem:[%s5 + $0x80] sm:$0xff]
    %v2501 = vld [vmem:[%s5 + $0x88] sm:$0xff]
    %v2502 = vld [vmem:[%s5 + $0x90] sm:$0xff]
    %v2503 = vld [vmem:[%s5 + $0x98] sm:$0xff]
    %v2504 = vld [vmem:[%s5 + $0xa0] sm:$0xff]
    %v2505 = vld [vmem:[%s5 + $0xa8] sm:$0xff]
    %v2506 = vld [vmem:[%s5 + $0xb0] sm:$0xff]
    %v2507 = vld [vmem:[%s5 + $0xb8] sm:$0xff]
    %v2508 = vld [vmem:[%s5 + $0xc0] sm:$0xff]
    %v2509 = vld [vmem:[%s5 + $0xc8] sm:$0xff]
    %v2510 = vld [vmem:[%s5 + $0xd0] sm:$0xff]
    %v2511 = vld [vmem:[%s5 + $0xd8] sm:$0xff]
    %v2512 = vld [vmem:[%s5 + $0xe0] sm:$0x77]
    %v2513 = vld [vmem:[#allocation2] sm:$0xee]
    %v2514 = vld [vmem:[#allocation2 + $0x38] sm:$0x11]
    %s2515 = scalar_lea.vmem %s5, 232
    %v2516 = vld [vmem:[%s2515] sm:$0xff]
    %v2517 = vld [vmem:[%s2515 + $0x8] sm:$0xff]
    %v2518 = vld [vmem:[%s2515 + $0x10] sm:$0xff]
    %v2519 = vld [vmem:[%s2515 + $0x18] sm:$0xff]
    %v2520 = vld [vmem:[%s2515 + $0x20] sm:$0xff]
    %v2521 = vld [vmem:[%s2515 + $0x28] sm:$0xff]
    %v2522 = vld [vmem:[%s2515 + $0x30] sm:$0xff]
    %v2523 = vld [vmem:[%s2515 + $0x38] sm:$0xff]
    %v2524 = vld [vmem:[%s2515 + $0x40] sm:$0xff]
    %v2525 = vld [vmem:[%s2515 + $0x48] sm:$0xff]
    %v2526 = vld [vmem:[%s2515 + $0x50] sm:$0xff]
    %v2527 = vld [vmem:[%s2515 + $0x58] sm:$0xff]
    %v2528 = vld [vmem:[%s2515 + $0x60] sm:$0xff]
    %v2529 = vld [vmem:[%s2515 + $0x68] sm:$0xff]
    %v2530 = vld [vmem:[%s2515 + $0x70] sm:$0xff]
    %v2531 = vld [vmem:[%s2515 + $0x78] sm:$0xff]
    %v2532 = vld [vmem:[%s2515 + $0x80] sm:$0xff]
    %v2533 = vld [vmem:[%s2515 + $0x88] sm:$0xff]
    %v2534 = vld [vmem:[%s2515 + $0x90] sm:$0xff]
    %v2535 = vld [vmem:[%s2515 + $0x98] sm:$0xff]
    %v2536 = vld [vmem:[%s2515 + $0xa0] sm:$0xff]
    %v2537 = vld [vmem:[%s2515 + $0xa8] sm:$0xff]
    %v2538 = vld [vmem:[%s2515 + $0xb0] sm:$0xff]
    %v2539 = vld [vmem:[%s2515 + $0xb8] sm:$0xff]
    %v2540 = vld [vmem:[%s2515 + $0xc0] sm:$0xff]
    %v2541 = vld [vmem:[%s2515 + $0xc8] sm:$0xff]
    %v2542 = vld [vmem:[%s2515 + $0xd0] sm:$0xff]
    %v2543 = vld [vmem:[%s2515 + $0xd8] sm:$0xff]
    %v2544 = vld [vmem:[%s2515 + $0xe0] sm:$0x77]
    %v2553 = vunpack.c.l.b16 %v2513
    %v2554 = vunpack.c.h.b16 %v2513
    %v2555 = vunpack.c.l.b16 %v2478
    %v2556 = vunpack.c.h.b16 %v2478
    %v2557 = vunpack.c.l.b16 %v2479
    %v2558 = vunpack.c.h.b16 %v2479
    %v2559 = vunpack.c.l.b16 %v2480
    %v2560 = vunpack.c.h.b16 %v2480
    %v2561 = vunpack.c.l.b16 %v2481
    %v2562 = vunpack.c.h.b16 %v2481
    %v2563 = vunpack.c.l.b16 %v2482
    %v2564 = vunpack.c.h.b16 %v2482
    %v2565 = vunpack.c.l.b16 %v2483
    %v2566 = vunpack.c.h.b16 %v2483
    %v2567 = vunpack.c.l.b16 %v2514
    %v2568 = vunpack.c.h.b16 %v2514
    %v2569 = vpack.c.b16 %v2555, %v2553
    %v2570 = vpack.c.b16 %v2556, %v2554
    %v2571 = vpack.c.b16 %v2559, %v2557
    %v2572 = vpack.c.b16 %v2560, %v2558
    %v2573 = vpack.c.b16 %v2563, %v2561
    %v2574 = vpack.c.b16 %v2564, %v2562
    %v2575 = vpack.c.b16 %v2567, %v2565
    %v2576 = vpack.c.b16 %v2568, %v2566
    %v2577 = vrot.slane %v2569, 1
    %v2578 = vrot.slane %v2571, 1
    %v2579 = vsel %vm326, %v2577, %v2578
    %v2580 = vrot.slane %v2570, 1
    %v2581 = vrot.slane %v2572, 1
    %v2582 = vsel %vm326, %v2580, %v2581
    %v2583 = vrot.slane %v2573, 1
    %v2584 = vsel %vm326, %v2578, %v2583
    %v2585 = vrot.slane %v2574, 1
    %v2586 = vsel %vm326, %v2581, %v2585
    %v2587 = vrot.slane %v2575, 1
    %v2588 = vsel %vm326, %v2583, %v2587
    %v2589 = vrot.slane %v2576, 1
    %v2590 = vsel %vm326, %v2585, %v2589
    %v2624 = vunpack.c.l.b16 %v2516
    %v2625 = vunpack.c.h.b16 %v2516
    %v2626 = vunpack.c.l.b16 %v2517
    %v2627 = vunpack.c.h.b16 %v2517
    %v2628 = vunpack.c.l.b16 %v2518
    %v2629 = vunpack.c.h.b16 %v2518
    %v2630 = vunpack.c.l.b16 %v2519
    %v2631 = vunpack.c.h.b16 %v2519
    %v2632 = vunpack.c.l.b16 %v2520
    %v2633 = vunpack.c.h.b16 %v2520
    %v2634 = vunpack.c.l.b16 %v2521
    %v2635 = vunpack.c.h.b16 %v2521
    %v2636 = vunpack.c.l.b16 %v2522
    %v2637 = vunpack.c.h.b16 %v2522
    %v2638 = vunpack.c.l.b16 %v2523
    %v2639 = vunpack.c.h.b16 %v2523
    %v2640 = vunpack.c.l.b16 %v2524
    %v2641 = vunpack.c.h.b16 %v2524
    %v2642 = vunpack.c.l.b16 %v2525
    %v2643 = vunpack.c.h.b16 %v2525
    %v2644 = vunpack.c.l.b16 %v2526
    %v2645 = vunpack.c.h.b16 %v2526
    %v2646 = vunpack.c.l.b16 %v2527
    %v2647 = vunpack.c.h.b16 %v2527
    %v2648 = vunpack.c.l.b16 %v2528
    %v2649 = vunpack.c.h.b16 %v2528
    %v2650 = vunpack.c.l.b16 %v2529
    %v2651 = vunpack.c.h.b16 %v2529
    %v2652 = vunpack.c.l.b16 %v2530
    %v2653 = vunpack.c.h.b16 %v2530
    %v2654 = vunpack.c.l.b16 %v2531
    %v2655 = vunpack.c.h.b16 %v2531
    %v2656 = vunpack.c.l.b16 %v2532
    %v2657 = vunpack.c.h.b16 %v2532
    %v2658 = vunpack.c.l.b16 %v2533
    %v2659 = vunpack.c.h.b16 %v2533
    %v2660 = vunpack.c.l.b16 %v2534
    %v2661 = vunpack.c.h.b16 %v2534
    %v2662 = vunpack.c.l.b16 %v2535
    %v2663 = vunpack.c.h.b16 %v2535
    %v2664 = vunpack.c.l.b16 %v2536
    %v2665 = vunpack.c.h.b16 %v2536
    %v2666 = vunpack.c.l.b16 %v2537
    %v2667 = vunpack.c.h.b16 %v2537
    %v2668 = vunpack.c.l.b16 %v2538
    %v2669 = vunpack.c.h.b16 %v2538
    %v2670 = vunpack.c.l.b16 %v2539
    %v2671 = vunpack.c.h.b16 %v2539
    %v2672 = vunpack.c.l.b16 %v2540
    %v2673 = vunpack.c.h.b16 %v2540
    %v2674 = vunpack.c.l.b16 %v2541
    %v2675 = vunpack.c.h.b16 %v2541
    %v2676 = vunpack.c.l.b16 %v2542
    %v2677 = vunpack.c.h.b16 %v2542
    %v2678 = vunpack.c.l.b16 %v2543
    %v2679 = vunpack.c.h.b16 %v2543
    %v2680 = vunpack.c.l.b16 %v2544
    %v2681 = vunpack.c.h.b16 %v2544
    %v2682 = vpack.c.b16 %v2626, %v2624
    %v2683 = vpack.c.b16 %v2627, %v2625
    %v2684 = vpack.c.b16 %v2630, %v2628
    %v2685 = vpack.c.b16 %v2631, %v2629
    %v2686 = vpack.c.b16 %v2634, %v2632
    %v2687 = vpack.c.b16 %v2635, %v2633
    %v2688 = vpack.c.b16 %v2638, %v2636
    %v2689 = vpack.c.b16 %v2639, %v2637
    %v2690 = vpack.c.b16 %v2642, %v2640
    %v2691 = vpack.c.b16 %v2643, %v2641
    %v2692 = vpack.c.b16 %v2646, %v2644
    %v2693 = vpack.c.b16 %v2647, %v2645
    %v2694 = vpack.c.b16 %v2650, %v2648
    %v2695 = vpack.c.b16 %v2651, %v2649
    %v2696 = vpack.c.b16 %v2654, %v2652
    %v2697 = vpack.c.b16 %v2655, %v2653
    %v2698 = vpack.c.b16 %v2658, %v2656
    %v2699 = vpack.c.b16 %v2659, %v2657
    %v2700 = vpack.c.b16 %v2662, %v2660
    %v2701 = vpack.c.b16 %v2663, %v2661
    %v2702 = vpack.c.b16 %v2666, %v2664
    %v2703 = vpack.c.b16 %v2667, %v2665
    %v2704 = vpack.c.b16 %v2670, %v2668
    %v2705 = vpack.c.b16 %v2671, %v2669
    %v2706 = vpack.c.b16 %v2674, %v2672
    %v2707 = vpack.c.b16 %v2675, %v2673
    %v2708 = vpack.c.b16 %v2678, %v2676
    %v2709 = vpack.c.b16 %v2679, %v2677
    %v2710 = vpack.c.b16 %v2680, %v2680
    %v2711 = vpack.c.b16 %v2681, %v2681
    %v2741 = vsel %vm1647, %v2582, 0
    %v2744 = vsel %vm1647, %v2586, 0
    %v2747 = vsel %vm1647, %v2590, 0
    %v2750 = vsel %vm1647, %v2589, 0
    %v2753 = vsel %vm1660, %v2710, 0
    %v2756 = vsel %vm1660, %v2711, 0
    %2758 = vmatpush.bf16.msra.mxu0 %v2696
    %2759 = vmatpush.bf16.msra.mxu0 %v2694
    %2760 = vmatpush.bf16.msra.mxu0 %v2692
    %2761 = vmatpush.bf16.msra.mxu0 %v2690
    %2762 = vmatpush.bf16.msra.mxu0 %v2688
    %2763 = vmatpush.bf16.msra.mxu0 %v2686
    %2764 = vmatpush.bf16.msra.mxu0 %v2684
    %2765 = vmatpush.bf16.msra.mxu0 %v2682
    %2766 = vmatmul.bf16.gmra.mxu0 %v2579
    %v2767 = vpop.f32.mrf.mxu0
    %v2768 = vadd.f32 0.0, %v2767
    %v2769 = vpop.f32.mrf.mxu0
    %v2770 = vadd.f32 0.0, %v2769
    %2771 = vmatmul.bf16.gmra.mxu0 %v2584
    %v2772 = vpop.f32.mrf.mxu0
    %v2773 = vadd.f32 0.0, %v2772
    %v2774 = vpop.f32.mrf.mxu0
    %v2775 = vadd.f32 0.0, %v2774
    %2776 = vmatmul.bf16.gmra.mxu0 %v2588
    %v2777 = vpop.f32.mrf.mxu0
    %v2778 = vadd.f32 0.0, %v2777
    %v2779 = vpop.f32.mrf.mxu0
    %v2780 = vadd.f32 0.0, %v2779
    %2781 = vmatmul.bf16.gmra.mxu0 %v2587
    %v2782 = vpop.f32.mrf.mxu0
    %v2783 = vadd.f32 0.0, %v2782
    %v2784 = vpop.f32.mrf.mxu0
    %2785 = vdwg.mxu0
    %2786 = vmatpush.bf16.msra.mxu0 0
    %2787 = vmatpush.bf16.msra.mxu0 %v2753
    %2788 = vmatpush.bf16.msra.mxu0 %v2708
    %2789 = vmatpush.bf16.msra.mxu0 %v2706
    %2790 = vmatpush.bf16.msra.mxu0 %v2704
    %2791 = vmatpush.bf16.msra.mxu0 %v2702
    %2792 = vmatpush.bf16.msra.mxu0 %v2700
    %2793 = vmatpush.bf16.msra.mxu0 %v2698
    %2794 = vmatmul.bf16.gmra.mxu0 %v2741
    %v2795 = vpop.f32.mrf.mxu0
    %v2796 = vadd.f32 %v2768, %v2795
    %v2797 = vpop.f32.mrf.mxu0
    %v2798 = vadd.f32 %v2770, %v2797
    %2799 = vmatmul.bf16.gmra.mxu0 %v2744
    %v2800 = vpop.f32.mrf.mxu0
    %v2801 = vadd.f32 %v2773, %v2800
    %v2802 = vpop.f32.mrf.mxu0
    %v2803 = vadd.f32 %v2775, %v2802
    %2804 = vmatmul.bf16.gmra.mxu0 %v2747
    %v2805 = vpop.f32.mrf.mxu0
    %v2806 = vadd.f32 %v2778, %v2805
    %v2807 = vpop.f32.mrf.mxu0
    %v2808 = vadd.f32 %v2780, %v2807
    %2809 = vmatmul.bf16.gmra.mxu0 %v2750
    %v2810 = vpop.f32.mrf.mxu0
    %v2811 = vadd.f32 %v2783, %v2810
    %v2812 = vpop.f32.mrf.mxu0
    %2813 = vdwg.mxu0
    %2814 = vmatpush.bf16.msra.mxu0 %v2697
    %2815 = vmatpush.bf16.msra.mxu0 %v2695
    %2816 = vmatpush.bf16.msra.mxu0 %v2693
    %2817 = vmatpush.bf16.msra.mxu0 %v2691
    %2818 = vmatpush.bf16.msra.mxu0 %v2689
    %2819 = vmatpush.bf16.msra.mxu0 %v2687
    %2820 = vmatpush.bf16.msra.mxu0 %v2685
    %2821 = vmatpush.bf16.msra.mxu0 %v2683
    %2822 = vmatmul.bf16.gmra.mxu0 %v2579
    %v2823 = vpop.f32.mrf.mxu0
    %v2824 = vadd.f32 0.0, %v2823
    %v2825 = vpop.f32.mrf.mxu0
    %v2826 = vadd.f32 0.0, %v2825
    %2827 = vmatmul.bf16.gmra.mxu0 %v2584
    %v2828 = vpop.f32.mrf.mxu0
    %v2829 = vadd.f32 0.0, %v2828
    %v2830 = vpop.f32.mrf.mxu0
    %v2831 = vadd.f32 0.0, %v2830
    %2832 = vmatmul.bf16.gmra.mxu0 %v2588
    %v2833 = vpop.f32.mrf.mxu0
    %v2834 = vadd.f32 0.0, %v2833
    %v2835 = vpop.f32.mrf.mxu0
    %v2836 = vadd.f32 0.0, %v2835
    %2837 = vmatmul.bf16.gmra.mxu0 %v2587
    %v2838 = vpop.f32.mrf.mxu0
    %v2839 = vadd.f32 0.0, %v2838
    %v2840 = vpop.f32.mrf.mxu0
    %2841 = vdwg.mxu0
    %2842 = vmatpush.bf16.msra.mxu0 0
    %2843 = vmatpush.bf16.msra.mxu0 %v2756
    %2844 = vmatpush.bf16.msra.mxu0 %v2709
    %2845 = vmatpush.bf16.msra.mxu0 %v2707
    %2846 = vmatpush.bf16.msra.mxu0 %v2705
    %2847 = vmatpush.bf16.msra.mxu0 %v2703
    %2848 = vmatpush.bf16.msra.mxu0 %v2701
    %2849 = vmatpush.bf16.msra.mxu0 %v2699
    %2850 = vmatmul.bf16.gmra.mxu0 %v2741
    %v2851 = vpop.f32.mrf.mxu0
    %v2852 = vadd.f32 %v2824, %v2851
    %v2853 = vpop.f32.mrf.mxu0
    %v2854 = vadd.f32 %v2826, %v2853
    %2855 = vmatmul.bf16.gmra.mxu0 %v2744
    %v2856 = vpop.f32.mrf.mxu0
    %v2857 = vadd.f32 %v2829, %v2856
    %v2858 = vpop.f32.mrf.mxu0
    %v2859 = vadd.f32 %v2831, %v2858
    %2860 = vmatmul.bf16.gmra.mxu0 %v2747
    %v2861 = vpop.f32.mrf.mxu0
    %v2862 = vadd.f32 %v2834, %v2861
    %v2863 = vpop.f32.mrf.mxu0
    %v2864 = vadd.f32 %v2836, %v2863
    %2865 = vmatmul.bf16.gmra.mxu0 %v2750
    %v2866 = vpop.f32.mrf.mxu0
    %v2867 = vadd.f32 %v2839, %v2866
    %v2868 = vpop.f32.mrf.mxu0
    %2869 = vdwg.mxu0
    %v2871 = vunpack.c.l.b16 %v2477
    %v2872 = vunpack.c.h.b16 %v2477
    %v2873 = vpack.c.b16 %v2555, %v2871
    %v2874 = vpack.c.b16 %v2556, %v2872
    %v2875 = vpack.c.b16 %v2565, %v2565
    %v2876 = vpack.c.b16 %v2566, %v2566
    %v2910 = vunpack.c.l.b16 %v2484
    %v2911 = vunpack.c.h.b16 %v2484
    %v2912 = vunpack.c.l.b16 %v2485
    %v2913 = vunpack.c.h.b16 %v2485
    %v2914 = vunpack.c.l.b16 %v2486
    %v2915 = vunpack.c.h.b16 %v2486
    %v2916 = vunpack.c.l.b16 %v2487
    %v2917 = vunpack.c.h.b16 %v2487
    %v2918 = vunpack.c.l.b16 %v2488
    %v2919 = vunpack.c.h.b16 %v2488
    %v2920 = vunpack.c.l.b16 %v2489
    %v2921 = vunpack.c.h.b16 %v2489
    %v2922 = vunpack.c.l.b16 %v2490
    %v2923 = vunpack.c.h.b16 %v2490
    %v2924 = vunpack.c.l.b16 %v2491
    %v2925 = vunpack.c.h.b16 %v2491
    %v2926 = vunpack.c.l.b16 %v2492
    %v2927 = vunpack.c.h.b16 %v2492
    %v2928 = vunpack.c.l.b16 %v2493
    %v2929 = vunpack.c.h.b16 %v2493
    %v2930 = vunpack.c.l.b16 %v2494
    %v2931 = vunpack.c.h.b16 %v2494
    %v2932 = vunpack.c.l.b16 %v2495
    %v2933 = vunpack.c.h.b16 %v2495
    %v2934 = vunpack.c.l.b16 %v2496
    %v2935 = vunpack.c.h.b16 %v2496
    %v2936 = vunpack.c.l.b16 %v2497
    %v2937 = vunpack.c.h.b16 %v2497
    %v2938 = vunpack.c.l.b16 %v2498
    %v2939 = vunpack.c.h.b16 %v2498
    %v2940 = vunpack.c.l.b16 %v2499
    %v2941 = vunpack.c.h.b16 %v2499
    %v2942 = vunpack.c.l.b16 %v2500
    %v2943 = vunpack.c.h.b16 %v2500
    %v2944 = vunpack.c.l.b16 %v2501
    %v2945 = vunpack.c.h.b16 %v2501
    %v2946 = vunpack.c.l.b16 %v2502
    %v2947 = vunpack.c.h.b16 %v2502
    %v2948 = vunpack.c.l.b16 %v2503
    %v2949 = vunpack.c.h.b16 %v2503
    %v2950 = vunpack.c.l.b16 %v2504
    %v2951 = vunpack.c.h.b16 %v2504
    %v2952 = vunpack.c.l.b16 %v2505
    %v2953 = vunpack.c.h.b16 %v2505
    %v2954 = vunpack.c.l.b16 %v2506
    %v2955 = vunpack.c.h.b16 %v2506
    %v2956 = vunpack.c.l.b16 %v2507
    %v2957 = vunpack.c.h.b16 %v2507
    %v2958 = vunpack.c.l.b16 %v2508
    %v2959 = vunpack.c.h.b16 %v2508
    %v2960 = vunpack.c.l.b16 %v2509
    %v2961 = vunpack.c.h.b16 %v2509
    %v2962 = vunpack.c.l.b16 %v2510
    %v2963 = vunpack.c.h.b16 %v2510
    %v2964 = vunpack.c.l.b16 %v2511
    %v2965 = vunpack.c.h.b16 %v2511
    %v2966 = vunpack.c.l.b16 %v2512
    %v2967 = vunpack.c.h.b16 %v2512
    %v2968 = vpack.c.b16 %v2912, %v2910
    %v2969 = vpack.c.b16 %v2913, %v2911
    %v2970 = vpack.c.b16 %v2916, %v2914
    %v2971 = vpack.c.b16 %v2917, %v2915
    %v2972 = vpack.c.b16 %v2920, %v2918
    %v2973 = vpack.c.b16 %v2921, %v2919
    %v2974 = vpack.c.b16 %v2924, %v2922
    %v2975 = vpack.c.b16 %v2925, %v2923
    %v2976 = vpack.c.b16 %v2928, %v2926
    %v2977 = vpack.c.b16 %v2929, %v2927
    %v2978 = vpack.c.b16 %v2932, %v2930
    %v2979 = vpack.c.b16 %v2933, %v2931
    %v2980 = vpack.c.b16 %v2936, %v2934
    %v2981 = vpack.c.b16 %v2937, %v2935
    %v2982 = vpack.c.b16 %v2940, %v2938
    %v2983 = vpack.c.b16 %v2941, %v2939
    %v2984 = vpack.c.b16 %v2944, %v2942
    %v2985 = vpack.c.b16 %v2945, %v2943
    %v2986 = vpack.c.b16 %v2948, %v2946
    %v2987 = vpack.c.b16 %v2949, %v2947
    %v2988 = vpack.c.b16 %v2952, %v2950
    %v2989 = vpack.c.b16 %v2953, %v2951
    %v2990 = vpack.c.b16 %v2956, %v2954
    %v2991 = vpack.c.b16 %v2957, %v2955
    %v2992 = vpack.c.b16 %v2960, %v2958
    %v2993 = vpack.c.b16 %v2961, %v2959
    %v2994 = vpack.c.b16 %v2964, %v2962
    %v2995 = vpack.c.b16 %v2965, %v2963
    %v2996 = vpack.c.b16 %v2966, %v2966
    %v2997 = vpack.c.b16 %v2967, %v2967
    %v3027 = vsel %vm1647, %v2874, 0
    %v3030 = vsel %vm1647, %v2572, 0
    %v3033 = vsel %vm1647, %v2574, 0
    %v3036 = vsel %vm1647, %v2876, 0
    %v3039 = vsel %vm1660, %v2996, 0
    %v3042 = vsel %vm1660, %v2997, 0
    %3044 = vmatpush.bf16.msra.mxu0 %v2982
    %3045 = vmatpush.bf16.msra.mxu0 %v2980
    %3046 = vmatpush.bf16.msra.mxu0 %v2978
    %3047 = vmatpush.bf16.msra.mxu0 %v2976
    %3048 = vmatpush.bf16.msra.mxu0 %v2974
    %3049 = vmatpush.bf16.msra.mxu0 %v2972
    %3050 = vmatpush.bf16.msra.mxu0 %v2970
    %3051 = vmatpush.bf16.msra.mxu0 %v2968
    %3052 = vmatmul.bf16.gmra.mxu0 %v2873
    %v3053 = vpop.f32.mrf.mxu0
    %v3054 = vadd.f32 %v2796, %v3053
    %v3055 = vpop.f32.mrf.mxu0
    %v3056 = vadd.f32 %v2798, %v3055
    %3057 = vmatmul.bf16.gmra.mxu0 %v2571
    %v3058 = vpop.f32.mrf.mxu0
    %v3059 = vadd.f32 %v2801, %v3058
    %v3060 = vpop.f32.mrf.mxu0
    %v3061 = vadd.f32 %v2803, %v3060
    %3062 = vmatmul.bf16.gmra.mxu0 %v2573
    %v3063 = vpop.f32.mrf.mxu0
    %v3064 = vadd.f32 %v2806, %v3063
    %v3065 = vpop.f32.mrf.mxu0
    %v3066 = vadd.f32 %v2808, %v3065
    %3067 = vmatmul.bf16.gmra.mxu0 %v2875
    %v3068 = vpop.f32.mrf.mxu0
    %v3069 = vadd.f32 %v2811, %v3068
    %v3070 = vpop.f32.mrf.mxu0
    %3071 = vdwg.mxu0
    %3072 = vmatpush.bf16.msra.mxu0 0
    %3073 = vmatpush.bf16.msra.mxu0 %v3039
    %3074 = vmatpush.bf16.msra.mxu0 %v2994
    %3075 = vmatpush.bf16.msra.mxu0 %v2992
    %3076 = vmatpush.bf16.msra.mxu0 %v2990
    %3077 = vmatpush.bf16.msra.mxu0 %v2988
    %3078 = vmatpush.bf16.msra.mxu0 %v2986
    %3079 = vmatpush.bf16.msra.mxu0 %v2984
    %3080 = vmatmul.bf16.gmra.mxu0 %v3027
    %v3081 = vpop.f32.mrf.mxu0
    %v3082 = vadd.f32 %v3054, %v3081
    %v3083 = vpop.f32.mrf.mxu0
    %v3084 = vadd.f32 %v3056, %v3083
    %3085 = vmatmul.bf16.gmra.mxu0 %v3030
    %v3086 = vpop.f32.mrf.mxu0
    %v3087 = vadd.f32 %v3059, %v3086
    %v3088 = vpop.f32.mrf.mxu0
    %v3089 = vadd.f32 %v3061, %v3088
    %3090 = vmatmul.bf16.gmra.mxu0 %v3033
    %v3091 = vpop.f32.mrf.mxu0
    %v3092 = vadd.f32 %v3064, %v3091
    %v3093 = vpop.f32.mrf.mxu0
    %v3094 = vadd.f32 %v3066, %v3093
    %3095 = vmatmul.bf16.gmra.mxu0 %v3036
    %v3096 = vpop.f32.mrf.mxu0
    %v3097 = vadd.f32 %v3069, %v3096
    %v3098 = vpop.f32.mrf.mxu0
    %3099 = vdwg.mxu0
    %3100 = vmatpush.bf16.msra.mxu0 %v2983
    %3101 = vmatpush.bf16.msra.mxu0 %v2981
    %3102 = vmatpush.bf16.msra.mxu0 %v2979
    %3103 = vmatpush.bf16.msra.mxu0 %v2977
    %3104 = vmatpush.bf16.msra.mxu0 %v2975
    %3105 = vmatpush.bf16.msra.mxu0 %v2973
    %3106 = vmatpush.bf16.msra.mxu0 %v2971
    %3107 = vmatpush.bf16.msra.mxu0 %v2969
    %3108 = vmatmul.bf16.gmra.mxu0 %v2873
    %v3109 = vpop.f32.mrf.mxu0
    %v3110 = vadd.f32 %v2852, %v3109
    %v3111 = vpop.f32.mrf.mxu0
    %v3112 = vadd.f32 %v2854, %v3111
    %3113 = vmatmul.bf16.gmra.mxu0 %v2571
    %v3114 = vpop.f32.mrf.mxu0
    %v3115 = vadd.f32 %v2857, %v3114
    %v3116 = vpop.f32.mrf.mxu0
    %v3117 = vadd.f32 %v2859, %v3116
    %3118 = vmatmul.bf16.gmra.mxu0 %v2573
    %v3119 = vpop.f32.mrf.mxu0
    %v3120 = vadd.f32 %v2862, %v3119
    %v3121 = vpop.f32.mrf.mxu0
    %v3122 = vadd.f32 %v2864, %v3121
    %3123 = vmatmul.bf16.gmra.mxu0 %v2875
    %v3124 = vpop.f32.mrf.mxu0
    %v3125 = vadd.f32 %v2867, %v3124
    %v3126 = vpop.f32.mrf.mxu0
    %3127 = vdwg.mxu0
    %3128 = vmatpush.bf16.msra.mxu0 0
    %3129 = vmatpush.bf16.msra.mxu0 %v3042
    %3130 = vmatpush.bf16.msra.mxu0 %v2995
    %3131 = vmatpush.bf16.msra.mxu0 %v2993
    %3132 = vmatpush.bf16.msra.mxu0 %v2991
    %3133 = vmatpush.bf16.msra.mxu0 %v2989
    %3134 = vmatpush.bf16.msra.mxu0 %v2987
    %3135 = vmatpush.bf16.msra.mxu0 %v2985
    %3136 = vmatmul.bf16.gmra.mxu0 %v3027
    %v3137 = vpop.f32.mrf.mxu0
    %v3138 = vadd.f32 %v3110, %v3137
    %v3139 = vpop.f32.mrf.mxu0
    %v3140 = vadd.f32 %v3112, %v3139
    %3141 = vmatmul.bf16.gmra.mxu0 %v3030
    %v3142 = vpop.f32.mrf.mxu0
    %v3143 = vadd.f32 %v3115, %v3142
    %v3144 = vpop.f32.mrf.mxu0
    %v3145 = vadd.f32 %v3117, %v3144
    %3146 = vmatmul.bf16.gmra.mxu0 %v3033
    %v3147 = vpop.f32.mrf.mxu0
    %v3148 = vadd.f32 %v3120, %v3147
    %v3149 = vpop.f32.mrf.mxu0
    %v3150 = vadd.f32 %v3122, %v3149
    %3151 = vmatmul.bf16.gmra.mxu0 %v3036
    %v3152 = vpop.f32.mrf.mxu0
    %v3153 = vadd.f32 %v3125, %v3152
    %v3154 = vpop.f32.mrf.mxu0
    %3155 = vdwg.mxu0
    %v3156 = vld [vmem:[#allocation2] sm:$0xcc]
    %v3157 = vld [vmem:[#allocation2 + $0x38] sm:$0x33]
    %s3158 = scalar_lea.vmem %s5, 464
    %v3159 = vld [vmem:[%s3158] sm:$0xff]
    %v3160 = vld [vmem:[%s3158 + $0x8] sm:$0xff]
    %v3161 = vld [vmem:[%s3158 + $0x10] sm:$0xff]
    %v3162 = vld [vmem:[%s3158 + $0x18] sm:$0xff]
    %v3163 = vld [vmem:[%s3158 + $0x20] sm:$0xff]
    %v3164 = vld [vmem:[%s3158 + $0x28] sm:$0xff]
    %v3165 = vld [vmem:[%s3158 + $0x30] sm:$0xff]
    %v3166 = vld [vmem:[%s3158 + $0x38] sm:$0xff]
    %v3167 = vld [vmem:[%s3158 + $0x40] sm:$0xff]
    %v3168 = vld [vmem:[%s3158 + $0x48] sm:$0xff]
    %v3169 = vld [vmem:[%s3158 + $0x50] sm:$0xff]
    %v3170 = vld [vmem:[%s3158 + $0x58] sm:$0xff]
    %v3171 = vld [vmem:[%s3158 + $0x60] sm:$0xff]
    %v3172 = vld [vmem:[%s3158 + $0x68] sm:$0xff]
    %v3173 = vld [vmem:[%s3158 + $0x70] sm:$0xff]
    %v3174 = vld [vmem:[%s3158 + $0x78] sm:$0xff]
    %v3175 = vld [vmem:[%s3158 + $0x80] sm:$0xff]
    %v3176 = vld [vmem:[%s3158 + $0x88] sm:$0xff]
    %v3177 = vld [vmem:[%s3158 + $0x90] sm:$0xff]
    %v3178 = vld [vmem:[%s3158 + $0x98] sm:$0xff]
    %v3179 = vld [vmem:[%s3158 + $0xa0] sm:$0xff]
    %v3180 = vld [vmem:[%s3158 + $0xa8] sm:$0xff]
    %v3181 = vld [vmem:[%s3158 + $0xb0] sm:$0xff]
    %v3182 = vld [vmem:[%s3158 + $0xb8] sm:$0xff]
    %v3183 = vld [vmem:[%s3158 + $0xc0] sm:$0xff]
    %v3184 = vld [vmem:[%s3158 + $0xc8] sm:$0xff]
    %v3185 = vld [vmem:[%s3158 + $0xd0] sm:$0xff]
    %v3186 = vld [vmem:[%s3158 + $0xd8] sm:$0xff]
    %v3187 = vld [vmem:[%s3158 + $0xe0] sm:$0x77]
    %v3190 = vunpack.c.l.b16 %v3156
    %v3191 = vunpack.c.h.b16 %v3156
    %v3192 = vunpack.c.l.b16 %v3157
    %v3193 = vunpack.c.h.b16 %v3157
    %v3194 = vpack.c.b16 %v2555, %v3190
    %v3195 = vpack.c.b16 %v2556, %v3191
    %v3196 = vpack.c.b16 %v3192, %v2565
    %v3197 = vpack.c.b16 %v3193, %v2566
    %v3198 = vrot.slane %v3194, 2
    %v3199 = vrot.slane %v2571, 2
    %v3200 = vsel %vm590, %v3198, %v3199
    %v3201 = vrot.slane %v3195, 2
    %v3202 = vrot.slane %v2572, 2
    %v3203 = vsel %vm590, %v3201, %v3202
    %v3204 = vrot.slane %v2573, 2
    %v3205 = vsel %vm590, %v3199, %v3204
    %v3206 = vrot.slane %v2574, 2
    %v3207 = vsel %vm590, %v3202, %v3206
    %v3208 = vrot.slane %v3196, 2
    %v3209 = vsel %vm590, %v3204, %v3208
    %v3210 = vrot.slane %v3197, 2
    %v3211 = vsel %vm590, %v3206, %v3210
    %v3245 = vunpack.c.l.b16 %v3159
    %v3246 = vunpack.c.h.b16 %v3159
    %v3247 = vunpack.c.l.b16 %v3160
    %v3248 = vunpack.c.h.b16 %v3160
    %v3249 = vunpack.c.l.b16 %v3161
    %v3250 = vunpack.c.h.b16 %v3161
    %v3251 = vunpack.c.l.b16 %v3162
    %v3252 = vunpack.c.h.b16 %v3162
    %v3253 = vunpack.c.l.b16 %v3163
    %v3254 = vunpack.c.h.b16 %v3163
    %v3255 = vunpack.c.l.b16 %v3164
    %v3256 = vunpack.c.h.b16 %v3164
    %v3257 = vunpack.c.l.b16 %v3165
    %v3258 = vunpack.c.h.b16 %v3165
    %v3259 = vunpack.c.l.b16 %v3166
    %v3260 = vunpack.c.h.b16 %v3166
    %v3261 = vunpack.c.l.b16 %v3167
    %v3262 = vunpack.c.h.b16 %v3167
    %v3263 = vunpack.c.l.b16 %v3168
    %v3264 = vunpack.c.h.b16 %v3168
    %v3265 = vunpack.c.l.b16 %v3169
    %v3266 = vunpack.c.h.b16 %v3169
    %v3267 = vunpack.c.l.b16 %v3170
    %v3268 = vunpack.c.h.b16 %v3170
    %v3269 = vunpack.c.l.b16 %v3171
    %v3270 = vunpack.c.h.b16 %v3171
    %v3271 = vunpack.c.l.b16 %v3172
    %v3272 = vunpack.c.h.b16 %v3172
    %v3273 = vunpack.c.l.b16 %v3173
    %v3274 = vunpack.c.h.b16 %v3173
    %v3275 = vunpack.c.l.b16 %v3174
    %v3276 = vunpack.c.h.b16 %v3174
    %v3277 = vunpack.c.l.b16 %v3175
    %v3278 = vunpack.c.h.b16 %v3175
    %v3279 = vunpack.c.l.b16 %v3176
    %v3280 = vunpack.c.h.b16 %v3176
    %v3281 = vunpack.c.l.b16 %v3177
    %v3282 = vunpack.c.h.b16 %v3177
    %v3283 = vunpack.c.l.b16 %v3178
    %v3284 = vunpack.c.h.b16 %v3178
    %v3285 = vunpack.c.l.b16 %v3179
    %v3286 = vunpack.c.h.b16 %v3179
    %v3287 = vunpack.c.l.b16 %v3180
    %v3288 = vunpack.c.h.b16 %v3180
    %v3289 = vunpack.c.l.b16 %v3181
    %v3290 = vunpack.c.h.b16 %v3181
    %v3291 = vunpack.c.l.b16 %v3182
    %v3292 = vunpack.c.h.b16 %v3182
    %v3293 = vunpack.c.l.b16 %v3183
    %v3294 = vunpack.c.h.b16 %v3183
    %v3295 = vunpack.c.l.b16 %v3184
    %v3296 = vunpack.c.h.b16 %v3184
    %v3297 = vunpack.c.l.b16 %v3185
    %v3298 = vunpack.c.h.b16 %v3185
    %v3299 = vunpack.c.l.b16 %v3186
    %v3300 = vunpack.c.h.b16 %v3186
    %v3301 = vunpack.c.l.b16 %v3187
    %v3302 = vunpack.c.h.b16 %v3187
    %v3303 = vpack.c.b16 %v3247, %v3245
    %v3304 = vpack.c.b16 %v3248, %v3246
    %v3305 = vpack.c.b16 %v3251, %v3249
    %v3306 = vpack.c.b16 %v3252, %v3250
    %v3307 = vpack.c.b16 %v3255, %v3253
    %v3308 = vpack.c.b16 %v3256, %v3254
    %v3309 = vpack.c.b16 %v3259, %v3257
    %v3310 = vpack.c.b16 %v3260, %v3258
    %v3311 = vpack.c.b16 %v3263, %v3261
    %v3312 = vpack.c.b16 %v3264, %v3262
    %v3313 = vpack.c.b16 %v3267, %v3265
    %v3314 = vpack.c.b16 %v3268, %v3266
    %v3315 = vpack.c.b16 %v3271, %v3269
    %v3316 = vpack.c.b16 %v3272, %v3270
    %v3317 = vpack.c.b16 %v3275, %v3273
    %v3318 = vpack.c.b16 %v3276, %v3274
    %v3319 = vpack.c.b16 %v3279, %v3277
    %v3320 = vpack.c.b16 %v3280, %v3278
    %v3321 = vpack.c.b16 %v3283, %v3281
    %v3322 = vpack.c.b16 %v3284, %v3282
    %v3323 = vpack.c.b16 %v3287, %v3285
    %v3324 = vpack.c.b16 %v3288, %v3286
    %v3325 = vpack.c.b16 %v3291, %v3289
    %v3326 = vpack.c.b16 %v3292, %v3290
    %v3327 = vpack.c.b16 %v3295, %v3293
    %v3328 = vpack.c.b16 %v3296, %v3294
    %v3329 = vpack.c.b16 %v3299, %v3297
    %v3330 = vpack.c.b16 %v3300, %v3298
    %v3331 = vpack.c.b16 %v3301, %v3301
    %v3332 = vpack.c.b16 %v3302, %v3302
    %v3362 = vsel %vm1647, %v3203, 0
    %v3365 = vsel %vm1647, %v3207, 0
    %v3368 = vsel %vm1647, %v3211, 0
    %v3371 = vsel %vm1647, %v3210, 0
    %v3374 = vsel %vm1660, %v3331, 0
    %v3377 = vsel %vm1660, %v3332, 0
    %3379 = vmatpush.bf16.msra.mxu0 %v3317
    %3380 = vmatpush.bf16.msra.mxu0 %v3315
    %3381 = vmatpush.bf16.msra.mxu0 %v3313
    %3382 = vmatpush.bf16.msra.mxu0 %v3311
    %3383 = vmatpush.bf16.msra.mxu0 %v3309
    %3384 = vmatpush.bf16.msra.mxu0 %v3307
    %3385 = vmatpush.bf16.msra.mxu0 %v3305
    %3386 = vmatpush.bf16.msra.mxu0 %v3303
    %3387 = vmatmul.bf16.gmra.mxu0 %v3200
    %v3388 = vpop.f32.mrf.mxu0
    %v3389 = vadd.f32 0.0, %v3388
    %v3390 = vpop.f32.mrf.mxu0
    %v3391 = vadd.f32 0.0, %v3390
    %3392 = vmatmul.bf16.gmra.mxu0 %v3205
    %v3393 = vpop.f32.mrf.mxu0
    %v3394 = vadd.f32 0.0, %v3393
    %v3395 = vpop.f32.mrf.mxu0
    %v3396 = vadd.f32 0.0, %v3395
    %3397 = vmatmul.bf16.gmra.mxu0 %v3209
    %v3398 = vpop.f32.mrf.mxu0
    %v3399 = vadd.f32 0.0, %v3398
    %v3400 = vpop.f32.mrf.mxu0
    %v3401 = vadd.f32 0.0, %v3400
    %3402 = vmatmul.bf16.gmra.mxu0 %v3208
    %v3403 = vpop.f32.mrf.mxu0
    %v3404 = vadd.f32 0.0, %v3403
    %v3405 = vpop.f32.mrf.mxu0
    %3406 = vdwg.mxu0
    %3407 = vmatpush.bf16.msra.mxu0 0
    %3408 = vmatpush.bf16.msra.mxu0 %v3374
    %3409 = vmatpush.bf16.msra.mxu0 %v3329
    %3410 = vmatpush.bf16.msra.mxu0 %v3327
    %3411 = vmatpush.bf16.msra.mxu0 %v3325
    %3412 = vmatpush.bf16.msra.mxu0 %v3323
    %3413 = vmatpush.bf16.msra.mxu0 %v3321
    %3414 = vmatpush.bf16.msra.mxu0 %v3319
    %3415 = vmatmul.bf16.gmra.mxu0 %v3362
    %v3416 = vpop.f32.mrf.mxu0
    %v3417 = vadd.f32 %v3389, %v3416
    %v3418 = vpop.f32.mrf.mxu0
    %v3419 = vadd.f32 %v3391, %v3418
    %3420 = vmatmul.bf16.gmra.mxu0 %v3365
    %v3421 = vpop.f32.mrf.mxu0
    %v3422 = vadd.f32 %v3394, %v3421
    %v3423 = vpop.f32.mrf.mxu0
    %v3424 = vadd.f32 %v3396, %v3423
    %3425 = vmatmul.bf16.gmra.mxu0 %v3368
    %v3426 = vpop.f32.mrf.mxu0
    %v3427 = vadd.f32 %v3399, %v3426
    %v3428 = vpop.f32.mrf.mxu0
    %v3429 = vadd.f32 %v3401, %v3428
    %3430 = vmatmul.bf16.gmra.mxu0 %v3371
    %v3431 = vpop.f32.mrf.mxu0
    %v3432 = vadd.f32 %v3404, %v3431
    %v3433 = vpop.f32.mrf.mxu0
    %3434 = vdwg.mxu0
    %3435 = vmatpush.bf16.msra.mxu0 %v3318
    %3436 = vmatpush.bf16.msra.mxu0 %v3316
    %3437 = vmatpush.bf16.msra.mxu0 %v3314
    %3438 = vmatpush.bf16.msra.mxu0 %v3312
    %3439 = vmatpush.bf16.msra.mxu0 %v3310
    %3440 = vmatpush.bf16.msra.mxu0 %v3308
    %3441 = vmatpush.bf16.msra.mxu0 %v3306
    %3442 = vmatpush.bf16.msra.mxu0 %v3304
    %3443 = vmatmul.bf16.gmra.mxu0 %v3200
    %v3444 = vpop.f32.mrf.mxu0
    %v3445 = vadd.f32 0.0, %v3444
    %v3446 = vpop.f32.mrf.mxu0
    %v3447 = vadd.f32 0.0, %v3446
    %3448 = vmatmul.bf16.gmra.mxu0 %v3205
    %v3449 = vpop.f32.mrf.mxu0
    %v3450 = vadd.f32 0.0, %v3449
    %v3451 = vpop.f32.mrf.mxu0
    %v3452 = vadd.f32 0.0, %v3451
    %3453 = vmatmul.bf16.gmra.mxu0 %v3209
    %v3454 = vpop.f32.mrf.mxu0
    %v3455 = vadd.f32 0.0, %v3454
    %v3456 = vpop.f32.mrf.mxu0
    %v3457 = vadd.f32 0.0, %v3456
    %3458 = vmatmul.bf16.gmra.mxu0 %v3208
    %v3459 = vpop.f32.mrf.mxu0
    %v3460 = vadd.f32 0.0, %v3459
    %v3461 = vpop.f32.mrf.mxu0
    %3462 = vdwg.mxu0
    %3463 = vmatpush.bf16.msra.mxu0 0
    %3464 = vmatpush.bf16.msra.mxu0 %v3377
    %3465 = vmatpush.bf16.msra.mxu0 %v3330
    %3466 = vmatpush.bf16.msra.mxu0 %v3328
    %3467 = vmatpush.bf16.msra.mxu0 %v3326
    %3468 = vmatpush.bf16.msra.mxu0 %v3324
    %3469 = vmatpush.bf16.msra.mxu0 %v3322
    %3470 = vmatpush.bf16.msra.mxu0 %v3320
    %3471 = vmatmul.bf16.gmra.mxu0 %v3362
    %v3472 = vpop.f32.mrf.mxu0
    %v3473 = vadd.f32 %v3445, %v3472
    %v3474 = vpop.f32.mrf.mxu0
    %v3475 = vadd.f32 %v3447, %v3474
    %3476 = vmatmul.bf16.gmra.mxu0 %v3365
    %v3477 = vpop.f32.mrf.mxu0
    %v3478 = vadd.f32 %v3450, %v3477
    %v3479 = vpop.f32.mrf.mxu0
    %v3480 = vadd.f32 %v3452, %v3479
    %3481 = vmatmul.bf16.gmra.mxu0 %v3368
    %v3482 = vpop.f32.mrf.mxu0
    %v3483 = vadd.f32 %v3455, %v3482
    %v3484 = vpop.f32.mrf.mxu0
    %v3485 = vadd.f32 %v3457, %v3484
    %3486 = vmatmul.bf16.gmra.mxu0 %v3371
    %v3487 = vpop.f32.mrf.mxu0
    %v3488 = vadd.f32 %v3460, %v3487
    %v3489 = vpop.f32.mrf.mxu0
    %3490 = vdwg.mxu0
    %v3491 = vadd.f32 %v3082, %v3417
    %v3492 = vadd.f32 %v3138, %v3473
    %v3493 = vadd.f32 %v3084, %v3419
    %v3494 = vadd.f32 %v3140, %v3475
    %v3495 = vadd.f32 %v3087, %v3422
    %v3496 = vadd.f32 %v3143, %v3478
    %v3497 = vadd.f32 %v3089, %v3424
    %v3498 = vadd.f32 %v3145, %v3480
    %v3499 = vadd.f32 %v3092, %v3427
    %v3500 = vadd.f32 %v3148, %v3483
    %v3501 = vadd.f32 %v3094, %v3429
    %v3502 = vadd.f32 %v3150, %v3485
    %v3503 = vadd.f32 %v3097, %v3432
    %v3504 = vadd.f32 %v3153, %v3488
    %v3505 = vld [vmem:[#allocation2] sm:$0x88]
    %v3506 = vld [vmem:[#allocation2 + $0x38] sm:$0x77]
    %s3507 = scalar_lea.vmem %s5, 696
    %v3508 = vld [vmem:[%s3507] sm:$0xff]
    %v3509 = vld [vmem:[%s3507 + $0x8] sm:$0xff]
    %v3510 = vld [vmem:[%s3507 + $0x10] sm:$0xff]
    %v3511 = vld [vmem:[%s3507 + $0x18] sm:$0xff]
    %v3512 = vld [vmem:[%s3507 + $0x20] sm:$0xff]
    %v3513 = vld [vmem:[%s3507 + $0x28] sm:$0xff]
    %v3514 = vld [vmem:[%s3507 + $0x30] sm:$0xff]
    %v3515 = vld [vmem:[%s3507 + $0x38] sm:$0xff]
    %v3516 = vld [vmem:[%s3507 + $0x40] sm:$0xff]
    %v3517 = vld [vmem:[%s3507 + $0x48] sm:$0xff]
    %v3518 = vld [vmem:[%s3507 + $0x50] sm:$0xff]
    %v3519 = vld [vmem:[%s3507 + $0x58] sm:$0xff]
    %v3520 = vld [vmem:[%s3507 + $0x60] sm:$0xff]
    %v3521 = vld [vmem:[%s3507 + $0x68] sm:$0xff]
    %v3522 = vld [vmem:[%s3507 + $0x70] sm:$0xff]
    %v3523 = vld [vmem:[%s3507 + $0x78] sm:$0xff]
    %v3524 = vld [vmem:[%s3507 + $0x80] sm:$0xff]
    %v3525 = vld [vmem:[%s3507 + $0x88] sm:$0xff]
    %v3526 = vld [vmem:[%s3507 + $0x90] sm:$0xff]
    %v3527 = vld [vmem:[%s3507 + $0x98] sm:$0xff]
    %v3528 = vld [vmem:[%s3507 + $0xa0] sm:$0xff]
    %v3529 = vld [vmem:[%s3507 + $0xa8] sm:$0xff]
    %v3530 = vld [vmem:[%s3507 + $0xb0] sm:$0xff]
    %v3531 = vld [vmem:[%s3507 + $0xb8] sm:$0xff]
    %v3532 = vld [vmem:[%s3507 + $0xc0] sm:$0xff]
    %v3533 = vld [vmem:[%s3507 + $0xc8] sm:$0xff]
    %v3534 = vld [vmem:[%s3507 + $0xd0] sm:$0xff]
    %v3535 = vld [vmem:[%s3507 + $0xd8] sm:$0xff]
    %v3536 = vld [vmem:[%s3507 + $0xe0] sm:$0x77]
    %v3539 = vunpack.c.l.b16 %v3505
    %v3540 = vunpack.c.h.b16 %v3505
    %v3541 = vunpack.c.l.b16 %v3506
    %v3542 = vunpack.c.h.b16 %v3506
    %v3543 = vpack.c.b16 %v2555, %v3539
    %v3544 = vpack.c.b16 %v2556, %v3540
    %v3545 = vpack.c.b16 %v3541, %v2565
    %v3546 = vpack.c.b16 %v3542, %v2566
    %vm3547 = vcmask 1044480
    %v3548 = vrot.slane %v3543, 3
    %v3549 = vrot.slane %v2571, 3
    %v3550 = vsel %vm3547, %v3548, %v3549
    %v3551 = vrot.slane %v3544, 3
    %v3552 = vrot.slane %v2572, 3
    %v3553 = vsel %vm3547, %v3551, %v3552
    %v3554 = vrot.slane %v2573, 3
    %v3555 = vsel %vm3547, %v3549, %v3554
    %v3556 = vrot.slane %v2574, 3
    %v3557 = vsel %vm3547, %v3552, %v3556
    %v3558 = vrot.slane %v3545, 3
    %v3559 = vsel %vm3547, %v3554, %v3558
    %v3560 = vrot.slane %v3546, 3
    %v3561 = vsel %vm3547, %v3556, %v3560
    %v3595 = vunpack.c.l.b16 %v3508
    %v3596 = vunpack.c.h.b16 %v3508
    %v3597 = vunpack.c.l.b16 %v3509
    %v3598 = vunpack.c.h.b16 %v3509
    %v3599 = vunpack.c.l.b16 %v3510
    %v3600 = vunpack.c.h.b16 %v3510
    %v3601 = vunpack.c.l.b16 %v3511
    %v3602 = vunpack.c.h.b16 %v3511
    %v3603 = vunpack.c.l.b16 %v3512
    %v3604 = vunpack.c.h.b16 %v3512
    %v3605 = vunpack.c.l.b16 %v3513
    %v3606 = vunpack.c.h.b16 %v3513
    %v3607 = vunpack.c.l.b16 %v3514
    %v3608 = vunpack.c.h.b16 %v3514
    %v3609 = vunpack.c.l.b16 %v3515
    %v3610 = vunpack.c.h.b16 %v3515
    %v3611 = vunpack.c.l.b16 %v3516
    %v3612 = vunpack.c.h.b16 %v3516
    %v3613 = vunpack.c.l.b16 %v3517
    %v3614 = vunpack.c.h.b16 %v3517
    %v3615 = vunpack.c.l.b16 %v3518
    %v3616 = vunpack.c.h.b16 %v3518
    %v3617 = vunpack.c.l.b16 %v3519
    %v3618 = vunpack.c.h.b16 %v3519
    %v3619 = vunpack.c.l.b16 %v3520
    %v3620 = vunpack.c.h.b16 %v3520
    %v3621 = vunpack.c.l.b16 %v3521
    %v3622 = vunpack.c.h.b16 %v3521
    %v3623 = vunpack.c.l.b16 %v3522
    %v3624 = vunpack.c.h.b16 %v3522
    %v3625 = vunpack.c.l.b16 %v3523
    %v3626 = vunpack.c.h.b16 %v3523
    %v3627 = vunpack.c.l.b16 %v3524
    %v3628 = vunpack.c.h.b16 %v3524
    %v3629 = vunpack.c.l.b16 %v3525
    %v3630 = vunpack.c.h.b16 %v3525
    %v3631 = vunpack.c.l.b16 %v3526
    %v3632 = vunpack.c.h.b16 %v3526
    %v3633 = vunpack.c.l.b16 %v3527
    %v3634 = vunpack.c.h.b16 %v3527
    %v3635 = vunpack.c.l.b16 %v3528
    %v3636 = vunpack.c.h.b16 %v3528
    %v3637 = vunpack.c.l.b16 %v3529
    %v3638 = vunpack.c.h.b16 %v3529
    %v3639 = vunpack.c.l.b16 %v3530
    %v3640 = vunpack.c.h.b16 %v3530
    %v3641 = vunpack.c.l.b16 %v3531
    %v3642 = vunpack.c.h.b16 %v3531
    %v3643 = vunpack.c.l.b16 %v3532
    %v3644 = vunpack.c.h.b16 %v3532
    %v3645 = vunpack.c.l.b16 %v3533
    %v3646 = vunpack.c.h.b16 %v3533
    %v3647 = vunpack.c.l.b16 %v3534
    %v3648 = vunpack.c.h.b16 %v3534
    %v3649 = vunpack.c.l.b16 %v3535
    %v3650 = vunpack.c.h.b16 %v3535
    %v3651 = vunpack.c.l.b16 %v3536
    %v3652 = vunpack.c.h.b16 %v3536
    %v3653 = vpack.c.b16 %v3597, %v3595
    %v3654 = vpack.c.b16 %v3598, %v3596
    %v3655 = vpack.c.b16 %v3601, %v3599
    %v3656 = vpack.c.b16 %v3602, %v3600
    %v3657 = vpack.c.b16 %v3605, %v3603
    %v3658 = vpack.c.b16 %v3606, %v3604
    %v3659 = vpack.c.b16 %v3609, %v3607
    %v3660 = vpack.c.b16 %v3610, %v3608
    %v3661 = vpack.c.b16 %v3613, %v3611
    %v3662 = vpack.c.b16 %v3614, %v3612
    %v3663 = vpack.c.b16 %v3617, %v3615
    %v3664 = vpack.c.b16 %v3618, %v3616
    %v3665 = vpack.c.b16 %v3621, %v3619
    %v3666 = vpack.c.b16 %v3622, %v3620
    %v3667 = vpack.c.b16 %v3625, %v3623
    %v3668 = vpack.c.b16 %v3626, %v3624
    %v3669 = vpack.c.b16 %v3629, %v3627
    %v3670 = vpack.c.b16 %v3630, %v3628
    %v3671 = vpack.c.b16 %v3633, %v3631
    %v3672 = vpack.c.b16 %v3634, %v3632
    %v3673 = vpack.c.b16 %v3637, %v3635
    %v3674 = vpack.c.b16 %v3638, %v3636
    %v3675 = vpack.c.b16 %v3641, %v3639
    %v3676 = vpack.c.b16 %v3642, %v3640
    %v3677 = vpack.c.b16 %v3645, %v3643
    %v3678 = vpack.c.b16 %v3646, %v3644
    %v3679 = vpack.c.b16 %v3649, %v3647
    %v3680 = vpack.c.b16 %v3650, %v3648
    %v3681 = vpack.c.b16 %v3651, %v3651
    %v3682 = vpack.c.b16 %v3652, %v3652
    %v3712 = vsel %vm1647, %v3553, 0
    %v3715 = vsel %vm1647, %v3557, 0
    %v3718 = vsel %vm1647, %v3561, 0
    %v3721 = vsel %vm1647, %v3560, 0
    %v3724 = vsel %vm1660, %v3681, 0
    %v3727 = vsel %vm1660, %v3682, 0
    %3729 = vmatpush.bf16.msra.mxu0 %v3667
    %3730 = vmatpush.bf16.msra.mxu0 %v3665
    %3731 = vmatpush.bf16.msra.mxu0 %v3663
    %3732 = vmatpush.bf16.msra.mxu0 %v3661
    %3733 = vmatpush.bf16.msra.mxu0 %v3659
    %3734 = vmatpush.bf16.msra.mxu0 %v3657
    %3735 = vmatpush.bf16.msra.mxu0 %v3655
    %3736 = vmatpush.bf16.msra.mxu0 %v3653
    %3737 = vmatmul.bf16.gmra.mxu0 %v3550
    %v3738 = vpop.f32.mrf.mxu0
    %v3739 = vadd.f32 0.0, %v3738
    %v3740 = vpop.f32.mrf.mxu0
    %v3741 = vadd.f32 0.0, %v3740
    %3742 = vmatmul.bf16.gmra.mxu0 %v3555
    %v3743 = vpop.f32.mrf.mxu0
    %v3744 = vadd.f32 0.0, %v3743
    %v3745 = vpop.f32.mrf.mxu0
    %v3746 = vadd.f32 0.0, %v3745
    %3747 = vmatmul.bf16.gmra.mxu0 %v3559
    %v3748 = vpop.f32.mrf.mxu0
    %v3749 = vadd.f32 0.0, %v3748
    %v3750 = vpop.f32.mrf.mxu0
    %v3751 = vadd.f32 0.0, %v3750
    %3752 = vmatmul.bf16.gmra.mxu0 %v3558
    %v3753 = vpop.f32.mrf.mxu0
    %v3754 = vadd.f32 0.0, %v3753
    %v3755 = vpop.f32.mrf.mxu0
    %3756 = vdwg.mxu0
    %3757 = vmatpush.bf16.msra.mxu0 0
    %3758 = vmatpush.bf16.msra.mxu0 %v3724
    %3759 = vmatpush.bf16.msra.mxu0 %v3679
    %3760 = vmatpush.bf16.msra.mxu0 %v3677
    %3761 = vmatpush.bf16.msra.mxu0 %v3675
    %3762 = vmatpush.bf16.msra.mxu0 %v3673
    %3763 = vmatpush.bf16.msra.mxu0 %v3671
    %3764 = vmatpush.bf16.msra.mxu0 %v3669
    %3765 = vmatmul.bf16.gmra.mxu0 %v3712
    %v3766 = vpop.f32.mrf.mxu0
    %v3767 = vadd.f32 %v3739, %v3766
    %v3768 = vpop.f32.mrf.mxu0
    %v3769 = vadd.f32 %v3741, %v3768
    %3770 = vmatmul.bf16.gmra.mxu0 %v3715
    %v3771 = vpop.f32.mrf.mxu0
    %v3772 = vadd.f32 %v3744, %v3771
    %v3773 = vpop.f32.mrf.mxu0
    %v3774 = vadd.f32 %v3746, %v3773
    %3775 = vmatmul.bf16.gmra.mxu0 %v3718
    %v3776 = vpop.f32.mrf.mxu0
    %v3777 = vadd.f32 %v3749, %v3776
    %v3778 = vpop.f32.mrf.mxu0
    %v3779 = vadd.f32 %v3751, %v3778
    %3780 = vmatmul.bf16.gmra.mxu0 %v3721
    %v3781 = vpop.f32.mrf.mxu0
    %v3782 = vadd.f32 %v3754, %v3781
    %v3783 = vpop.f32.mrf.mxu0
    %3784 = vdwg.mxu0
    %3785 = vmatpush.bf16.msra.mxu0 %v3668
    %3786 = vmatpush.bf16.msra.mxu0 %v3666
    %3787 = vmatpush.bf16.msra.mxu0 %v3664
    %3788 = vmatpush.bf16.msra.mxu0 %v3662
    %3789 = vmatpush.bf16.msra.mxu0 %v3660
    %3790 = vmatpush.bf16.msra.mxu0 %v3658
    %3791 = vmatpush.bf16.msra.mxu0 %v3656
    %3792 = vmatpush.bf16.msra.mxu0 %v3654
    %3793 = vmatmul.bf16.gmra.mxu0 %v3550
    %v3794 = vpop.f32.mrf.mxu0
    %v3795 = vadd.f32 0.0, %v3794
    %v3796 = vpop.f32.mrf.mxu0
    %v3797 = vadd.f32 0.0, %v3796
    %3798 = vmatmul.bf16.gmra.mxu0 %v3555
    %v3799 = vpop.f32.mrf.mxu0
    %v3800 = vadd.f32 0.0, %v3799
    %v3801 = vpop.f32.mrf.mxu0
    %v3802 = vadd.f32 0.0, %v3801
    %3803 = vmatmul.bf16.gmra.mxu0 %v3559
    %v3804 = vpop.f32.mrf.mxu0
    %v3805 = vadd.f32 0.0, %v3804
    %v3806 = vpop.f32.mrf.mxu0
    %v3807 = vadd.f32 0.0, %v3806
    %3808 = vmatmul.bf16.gmra.mxu0 %v3558
    %v3809 = vpop.f32.mrf.mxu0
    %v3810 = vadd.f32 0.0, %v3809
    %v3811 = vpop.f32.mrf.mxu0
    %3812 = vdwg.mxu0
    %3813 = vmatpush.bf16.msra.mxu0 0
    %3814 = vmatpush.bf16.msra.mxu0 %v3727
    %3815 = vmatpush.bf16.msra.mxu0 %v3680
    %3816 = vmatpush.bf16.msra.mxu0 %v3678
    %3817 = vmatpush.bf16.msra.mxu0 %v3676
    %3818 = vmatpush.bf16.msra.mxu0 %v3674
    %3819 = vmatpush.bf16.msra.mxu0 %v3672
    %3820 = vmatpush.bf16.msra.mxu0 %v3670
    %3821 = vmatmul.bf16.gmra.mxu0 %v3712
    %v3822 = vpop.f32.mrf.mxu0
    %v3823 = vadd.f32 %v3795, %v3822
    %v3824 = vpop.f32.mrf.mxu0
    %v3825 = vadd.f32 %v3797, %v3824
    %3826 = vmatmul.bf16.gmra.mxu0 %v3715
    %v3827 = vpop.f32.mrf.mxu0
    %v3828 = vadd.f32 %v3800, %v3827
    %v3829 = vpop.f32.mrf.mxu0
    %v3830 = vadd.f32 %v3802, %v3829
    %3831 = vmatmul.bf16.gmra.mxu0 %v3718
    %v3832 = vpop.f32.mrf.mxu0
    %v3833 = vadd.f32 %v3805, %v3832
    %v3834 = vpop.f32.mrf.mxu0
    %v3835 = vadd.f32 %v3807, %v3834
    %3836 = vmatmul.bf16.gmra.mxu0 %v3721
    %v3837 = vpop.f32.mrf.mxu0
    %v3838 = vadd.f32 %v3810, %v3837
    %v3839 = vpop.f32.mrf.mxu0
    %3840 = vdwg.mxu0
    %v3841 = vadd.f32 %v3491, %v3767
    %v3842 = vadd.f32 %v3492, %v3823
    %v3843 = vadd.f32 %v3493, %v3769
    %v3844 = vadd.f32 %v3494, %v3825
    %v3845 = vadd.f32 %v3495, %v3772
    %v3846 = vadd.f32 %v3496, %v3828
    %v3847 = vadd.f32 %v3497, %v3774
    %v3848 = vadd.f32 %v3498, %v3830
    %v3849 = vadd.f32 %v3499, %v3777
    %v3850 = vadd.f32 %v3500, %v3833
    %v3851 = vadd.f32 %v3501, %v3779
    %v3852 = vadd.f32 %v3502, %v3835
    %v3853 = vadd.f32 %v3503, %v3782
    %v3854 = vadd.f32 %v3504, %v3838
    %v3855 = vld [vmem:[#allocation2 + $0x38] sm:$0xff]
    %s3856 = scalar_lea.vmem %s5, 928
    %v3857 = vld [vmem:[%s3856] sm:$0xff]
    %v3858 = vld [vmem:[%s3856 + $0x8] sm:$0xff]
    %v3859 = vld [vmem:[%s3856 + $0x10] sm:$0xff]
    %v3860 = vld [vmem:[%s3856 + $0x18] sm:$0xff]
    %v3861 = vld [vmem:[%s3856 + $0x20] sm:$0xff]
    %v3862 = vld [vmem:[%s3856 + $0x28] sm:$0xff]
    %v3863 = vld [vmem:[%s3856 + $0x30] sm:$0xff]
    %v3864 = vld [vmem:[%s3856 + $0x38] sm:$0xff]
    %v3865 = vld [vmem:[%s3856 + $0x40] sm:$0xff]
    %v3866 = vld [vmem:[%s3856 + $0x48] sm:$0xff]
    %v3867 = vld [vmem:[%s3856 + $0x50] sm:$0xff]
    %v3868 = vld [vmem:[%s3856 + $0x58] sm:$0xff]
    %v3869 = vld [vmem:[%s3856 + $0x60] sm:$0xff]
    %v3870 = vld [vmem:[%s3856 + $0x68] sm:$0xff]
    %v3871 = vld [vmem:[%s3856 + $0x70] sm:$0xff]
    %v3872 = vld [vmem:[%s3856 + $0x78] sm:$0xff]
    %v3873 = vld [vmem:[%s3856 + $0x80] sm:$0xff]
    %v3874 = vld [vmem:[%s3856 + $0x88] sm:$0xff]
    %v3875 = vld [vmem:[%s3856 + $0x90] sm:$0xff]
    %v3876 = vld [vmem:[%s3856 + $0x98] sm:$0xff]
    %v3877 = vld [vmem:[%s3856 + $0xa0] sm:$0xff]
    %v3878 = vld [vmem:[%s3856 + $0xa8] sm:$0xff]
    %v3879 = vld [vmem:[%s3856 + $0xb0] sm:$0xff]
    %v3880 = vld [vmem:[%s3856 + $0xb8] sm:$0xff]
    %v3881 = vld [vmem:[%s3856 + $0xc0] sm:$0xff]
    %v3882 = vld [vmem:[%s3856 + $0xc8] sm:$0xff]
    %v3883 = vld [vmem:[%s3856 + $0xd0] sm:$0xff]
    %v3884 = vld [vmem:[%s3856 + $0xd8] sm:$0xff]
    %v3885 = vld [vmem:[%s3856 + $0xe0] sm:$0x77]
    %v3887 = vunpack.c.l.b16 %v3855
    %v3888 = vunpack.c.h.b16 %v3855
    %v3889 = vpack.c.b16 %v2557, %v2555
    %v3890 = vpack.c.b16 %v2558, %v2556
    %v3891 = vpack.c.b16 %v2561, %v2559
    %v3892 = vpack.c.b16 %v2562, %v2560
    %v3893 = vpack.c.b16 %v2565, %v2563
    %v3894 = vpack.c.b16 %v2566, %v2564
    %v3895 = vpack.c.b16 %v3887, %v3887
    %v3896 = vpack.c.b16 %v3888, %v3888
    %v3930 = vunpack.c.l.b16 %v3857
    %v3931 = vunpack.c.h.b16 %v3857
    %v3932 = vunpack.c.l.b16 %v3858
    %v3933 = vunpack.c.h.b16 %v3858
    %v3934 = vunpack.c.l.b16 %v3859
    %v3935 = vunpack.c.h.b16 %v3859
    %v3936 = vunpack.c.l.b16 %v3860
    %v3937 = vunpack.c.h.b16 %v3860
    %v3938 = vunpack.c.l.b16 %v3861
    %v3939 = vunpack.c.h.b16 %v3861
    %v3940 = vunpack.c.l.b16 %v3862
    %v3941 = vunpack.c.h.b16 %v3862
    %v3942 = vunpack.c.l.b16 %v3863
    %v3943 = vunpack.c.h.b16 %v3863
    %v3944 = vunpack.c.l.b16 %v3864
    %v3945 = vunpack.c.h.b16 %v3864
    %v3946 = vunpack.c.l.b16 %v3865
    %v3947 = vunpack.c.h.b16 %v3865
    %v3948 = vunpack.c.l.b16 %v3866
    %v3949 = vunpack.c.h.b16 %v3866
    %v3950 = vunpack.c.l.b16 %v3867
    %v3951 = vunpack.c.h.b16 %v3867
    %v3952 = vunpack.c.l.b16 %v3868
    %v3953 = vunpack.c.h.b16 %v3868
    %v3954 = vunpack.c.l.b16 %v3869
    %v3955 = vunpack.c.h.b16 %v3869
    %v3956 = vunpack.c.l.b16 %v3870
    %v3957 = vunpack.c.h.b16 %v3870
    %v3958 = vunpack.c.l.b16 %v3871
    %v3959 = vunpack.c.h.b16 %v3871
    %v3960 = vunpack.c.l.b16 %v3872
    %v3961 = vunpack.c.h.b16 %v3872
    %v3962 = vunpack.c.l.b16 %v3873
    %v3963 = vunpack.c.h.b16 %v3873
    %v3964 = vunpack.c.l.b16 %v3874
    %v3965 = vunpack.c.h.b16 %v3874
    %v3966 = vunpack.c.l.b16 %v3875
    %v3967 = vunpack.c.h.b16 %v3875
    %v3968 = vunpack.c.l.b16 %v3876
    %v3969 = vunpack.c.h.b16 %v3876
    %v3970 = vunpack.c.l.b16 %v3877
    %v3971 = vunpack.c.h.b16 %v3877
    %v3972 = vunpack.c.l.b16 %v3878
    %v3973 = vunpack.c.h.b16 %v3878
    %v3974 = vunpack.c.l.b16 %v3879
    %v3975 = vunpack.c.h.b16 %v3879
    %v3976 = vunpack.c.l.b16 %v3880
    %v3977 = vunpack.c.h.b16 %v3880
    %v3978 = vunpack.c.l.b16 %v3881
    %v3979 = vunpack.c.h.b16 %v3881
    %v3980 = vunpack.c.l.b16 %v3882
    %v3981 = vunpack.c.h.b16 %v3882
    %v3982 = vunpack.c.l.b16 %v3883
    %v3983 = vunpack.c.h.b16 %v3883
    %v3984 = vunpack.c.l.b16 %v3884
    %v3985 = vunpack.c.h.b16 %v3884
    %v3986 = vunpack.c.l.b16 %v3885
    %v3987 = vunpack.c.h.b16 %v3885
    %v3988 = vpack.c.b16 %v3932, %v3930
    %v3989 = vpack.c.b16 %v3933, %v3931
    %v3990 = vpack.c.b16 %v3936, %v3934
    %v3991 = vpack.c.b16 %v3937, %v3935
    %v3992 = vpack.c.b16 %v3940, %v3938
    %v3993 = vpack.c.b16 %v3941, %v3939
    %v3994 = vpack.c.b16 %v3944, %v3942
    %v3995 = vpack.c.b16 %v3945, %v3943
    %v3996 = vpack.c.b16 %v3948, %v3946
    %v3997 = vpack.c.b16 %v3949, %v3947
    %v3998 = vpack.c.b16 %v3952, %v3950
    %v3999 = vpack.c.b16 %v3953, %v3951
    %v4000 = vpack.c.b16 %v3956, %v3954
    %v4001 = vpack.c.b16 %v3957, %v3955
    %v4002 = vpack.c.b16 %v3960, %v3958
    %v4003 = vpack.c.b16 %v3961, %v3959
    %v4004 = vpack.c.b16 %v3964, %v3962
    %v4005 = vpack.c.b16 %v3965, %v3963
    %v4006 = vpack.c.b16 %v3968, %v3966
    %v4007 = vpack.c.b16 %v3969, %v3967
    %v4008 = vpack.c.b16 %v3972, %v3970
    %v4009 = vpack.c.b16 %v3973, %v3971
    %v4010 = vpack.c.b16 %v3976, %v3974
    %v4011 = vpack.c.b16 %v3977, %v3975
    %v4012 = vpack.c.b16 %v3980, %v3978
    %v4013 = vpack.c.b16 %v3981, %v3979
    %v4014 = vpack.c.b16 %v3984, %v3982
    %v4015 = vpack.c.b16 %v3985, %v3983
    %v4016 = vpack.c.b16 %v3986, %v3986
    %v4017 = vpack.c.b16 %v3987, %v3987
    %v4047 = vsel %vm1647, %v3890, 0
    %v4050 = vsel %vm1647, %v3892, 0
    %v4053 = vsel %vm1647, %v3894, 0
    %v4056 = vsel %vm1647, %v3896, 0
    %v4059 = vsel %vm1660, %v4016, 0
    %v4062 = vsel %vm1660, %v4017, 0
    %4064 = vmatpush.bf16.msra.mxu0 %v4002
    %4065 = vmatpush.bf16.msra.mxu0 %v4000
    %4066 = vmatpush.bf16.msra.mxu0 %v3998
    %4067 = vmatpush.bf16.msra.mxu0 %v3996
    %4068 = vmatpush.bf16.msra.mxu0 %v3994
    %4069 = vmatpush.bf16.msra.mxu0 %v3992
    %4070 = vmatpush.bf16.msra.mxu0 %v3990
    %4071 = vmatpush.bf16.msra.mxu0 %v3988
    %4072 = vmatmul.bf16.gmra.mxu0 %v3889
    %v4073 = vpop.f32.mrf.mxu0
    %v4074 = vadd.f32 0.0, %v4073
    %v4075 = vpop.f32.mrf.mxu0
    %v4076 = vadd.f32 0.0, %v4075
    %4077 = vmatmul.bf16.gmra.mxu0 %v3891
    %v4078 = vpop.f32.mrf.mxu0
    %v4079 = vadd.f32 0.0, %v4078
    %v4080 = vpop.f32.mrf.mxu0
    %v4081 = vadd.f32 0.0, %v4080
    %4082 = vmatmul.bf16.gmra.mxu0 %v3893
    %v4083 = vpop.f32.mrf.mxu0
    %v4084 = vadd.f32 0.0, %v4083
    %v4085 = vpop.f32.mrf.mxu0
    %v4086 = vadd.f32 0.0, %v4085
    %4087 = vmatmul.bf16.gmra.mxu0 %v3895
    %v4088 = vpop.f32.mrf.mxu0
    %v4089 = vadd.f32 0.0, %v4088
    %v4090 = vpop.f32.mrf.mxu0
    %4091 = vdwg.mxu0
    %4092 = vmatpush.bf16.msra.mxu0 0
    %4093 = vmatpush.bf16.msra.mxu0 %v4059
    %4094 = vmatpush.bf16.msra.mxu0 %v4014
    %4095 = vmatpush.bf16.msra.mxu0 %v4012
    %4096 = vmatpush.bf16.msra.mxu0 %v4010
    %4097 = vmatpush.bf16.msra.mxu0 %v4008
    %4098 = vmatpush.bf16.msra.mxu0 %v4006
    %4099 = vmatpush.bf16.msra.mxu0 %v4004
    %4100 = vmatmul.bf16.gmra.mxu0 %v4047
    %v4101 = vpop.f32.mrf.mxu0
    %v4102 = vadd.f32 %v4074, %v4101
    %v4103 = vpop.f32.mrf.mxu0
    %v4104 = vadd.f32 %v4076, %v4103
    %4105 = vmatmul.bf16.gmra.mxu0 %v4050
    %v4106 = vpop.f32.mrf.mxu0
    %v4107 = vadd.f32 %v4079, %v4106
    %v4108 = vpop.f32.mrf.mxu0
    %v4109 = vadd.f32 %v4081, %v4108
    %4110 = vmatmul.bf16.gmra.mxu0 %v4053
    %v4111 = vpop.f32.mrf.mxu0
    %v4112 = vadd.f32 %v4084, %v4111
    %v4113 = vpop.f32.mrf.mxu0
    %v4114 = vadd.f32 %v4086, %v4113
    %4115 = vmatmul.bf16.gmra.mxu0 %v4056
    %v4116 = vpop.f32.mrf.mxu0
    %v4117 = vadd.f32 %v4089, %v4116
    %v4118 = vpop.f32.mrf.mxu0
    %4119 = vdwg.mxu0
    %4120 = vmatpush.bf16.msra.mxu0 %v4003
    %4121 = vmatpush.bf16.msra.mxu0 %v4001
    %4122 = vmatpush.bf16.msra.mxu0 %v3999
    %4123 = vmatpush.bf16.msra.mxu0 %v3997
    %4124 = vmatpush.bf16.msra.mxu0 %v3995
    %4125 = vmatpush.bf16.msra.mxu0 %v3993
    %4126 = vmatpush.bf16.msra.mxu0 %v3991
    %4127 = vmatpush.bf16.msra.mxu0 %v3989
    %4128 = vmatmul.bf16.gmra.mxu0 %v3889
    %v4129 = vpop.f32.mrf.mxu0
    %v4130 = vadd.f32 0.0, %v4129
    %v4131 = vpop.f32.mrf.mxu0
    %v4132 = vadd.f32 0.0, %v4131
    %4133 = vmatmul.bf16.gmra.mxu0 %v3891
    %v4134 = vpop.f32.mrf.mxu0
    %v4135 = vadd.f32 0.0, %v4134
    %v4136 = vpop.f32.mrf.mxu0
    %v4137 = vadd.f32 0.0, %v4136
    %4138 = vmatmul.bf16.gmra.mxu0 %v3893
    %v4139 = vpop.f32.mrf.mxu0
    %v4140 = vadd.f32 0.0, %v4139
    %v4141 = vpop.f32.mrf.mxu0
    %v4142 = vadd.f32 0.0, %v4141
    %4143 = vmatmul.bf16.gmra.mxu0 %v3895
    %v4144 = vpop.f32.mrf.mxu0
    %v4145 = vadd.f32 0.0, %v4144
    %v4146 = vpop.f32.mrf.mxu0
    %4147 = vdwg.mxu0
    %4148 = vmatpush.bf16.msra.mxu0 0
    %4149 = vmatpush.bf16.msra.mxu0 %v4062
    %4150 = vmatpush.bf16.msra.mxu0 %v4015
    %4151 = vmatpush.bf16.msra.mxu0 %v4013
    %4152 = vmatpush.bf16.msra.mxu0 %v4011
    %4153 = vmatpush.bf16.msra.mxu0 %v4009
    %4154 = vmatpush.bf16.msra.mxu0 %v4007
    %4155 = vmatpush.bf16.msra.mxu0 %v4005
    %4156 = vmatmul.bf16.gmra.mxu0 %v4047
    %v4157 = vpop.f32.mrf.mxu0
    %v4158 = vadd.f32 %v4130, %v4157
    %v4159 = vpop.f32.mrf.mxu0
    %v4160 = vadd.f32 %v4132, %v4159
    %4161 = vmatmul.bf16.gmra.mxu0 %v4050
    %v4162 = vpop.f32.mrf.mxu0
    %v4163 = vadd.f32 %v4135, %v4162
    %v4164 = vpop.f32.mrf.mxu0
    %v4165 = vadd.f32 %v4137, %v4164
    %4166 = vmatmul.bf16.gmra.mxu0 %v4053
    %v4167 = vpop.f32.mrf.mxu0
    %v4168 = vadd.f32 %v4140, %v4167
    %v4169 = vpop.f32.mrf.mxu0
    %v4170 = vadd.f32 %v4142, %v4169
    %4171 = vmatmul.bf16.gmra.mxu0 %v4056
    %v4172 = vpop.f32.mrf.mxu0
    %v4173 = vadd.f32 %v4145, %v4172
    %v4174 = vpop.f32.mrf.mxu0
    %4175 = vdwg.mxu0
    %v4176 = vadd.f32 %v3841, %v4102
    %v4177 = vadd.f32 %v3842, %v4158
    %v4178 = vadd.f32 %v3843, %v4104
    %v4179 = vadd.f32 %v3844, %v4160
    %v4180 = vadd.f32 %v3845, %v4107
    %v4181 = vadd.f32 %v3846, %v4163
    %v4182 = vadd.f32 %v3847, %v4109
    %v4183 = vadd.f32 %v3848, %v4165
    %v4184 = vadd.f32 %v3849, %v4112
    %v4185 = vadd.f32 %v3850, %v4168
    %v4186 = vadd.f32 %v3851, %v4114
    %v4187 = vadd.f32 %v3852, %v4170
    %v4188 = vadd.f32 %v3853, %v4117
    %v4189 = vadd.f32 %v3854, %v4173
    %v4190 = vld [vmem:[%s6] sm:$0x3]
    %v4192 = vperm.slane %v4190, 0
    %v4193 = vperm.slane %v4190, 1
    %v4196 = vadd.f32 %v4176, %v4192
    %v4197 = vadd.f32 %v4177, %v4193
    %v4198 = vadd.f32 %v4178, %v4192
    %v4199 = vadd.f32 %v4179, %v4193
    %v4200 = vadd.f32 %v4180, %v4192
    %v4201 = vadd.f32 %v4181, %v4193
    %v4202 = vadd.f32 %v4182, %v4192
    %v4203 = vadd.f32 %v4183, %v4193
    %v4204 = vadd.f32 %v4184, %v4192
    %v4205 = vadd.f32 %v4185, %v4193
    %v4206 = vadd.f32 %v4186, %v4192
    %v4207 = vadd.f32 %v4187, %v4193
    %v4208 = vadd.f32 %v4188, %v4192
    %v4209 = vadd.f32 %v4189, %v4193
    %v4210 = vmax.f32 %v4196, 0.0
    %v4211 = vmax.f32 %v4197, 0.0
    %v4212 = vmax.f32 %v4198, 0.0
    %v4213 = vmax.f32 %v4199, 0.0
    %v4214 = vmax.f32 %v4200, 0.0
    %v4215 = vmax.f32 %v4201, 0.0
    %v4216 = vmax.f32 %v4202, 0.0
    %v4217 = vmax.f32 %v4203, 0.0
    %v4218 = vmax.f32 %v4204, 0.0
    %v4219 = vmax.f32 %v4205, 0.0
    %v4220 = vmax.f32 %v4206, 0.0
    %v4221 = vmax.f32 %v4207, 0.0
    %v4222 = vmax.f32 %v4208, 0.0
    %v4223 = vmax.f32 %v4209, 0.0
    %4224 = vst [vmem:[#allocation3] sm:$0xff] %v4210
    %vm4225 = vcmask 261120
    %4226 = vst.msk [vmem:[#allocation3 + $0x8] sm:$0xff] %vm4225, %v4211
    %4227 = vst [vmem:[#allocation3 + $0x10] sm:$0xff] %v4212
    %4228 = vst.msk [vmem:[#allocation3 + $0x18] sm:$0xff] %vm4225, %v4213
    %4229 = vst [vmem:[#allocation3 + $0x20] sm:$0xff] %v4214
    %4230 = vst.msk [vmem:[#allocation3 + $0x28] sm:$0xff] %vm4225, %v4215
    %4231 = vst [vmem:[#allocation3 + $0x30] sm:$0xff] %v4216
    %4232 = vst.msk [vmem:[#allocation3 + $0x38] sm:$0xff] %vm4225, %v4217
    %4233 = vst [vmem:[#allocation3 + $0x40] sm:$0xff] %v4218
    %4234 = vst.msk [vmem:[#allocation3 + $0x48] sm:$0xff] %vm4225, %v4219
    %4235 = vst [vmem:[#allocation3 + $0x50] sm:$0xff] %v4220
    %4236 = vst.msk [vmem:[#allocation3 + $0x58] sm:$0xff] %vm4225, %v4221
    %4237 = vst [vmem:[#allocation3 + $0x60] sm:$0xff] %v4222
    %4238 = vst.msk [vmem:[#allocation3 + $0x68] sm:$0xff] %vm4225, %v4223
    %4239 = vst [vmem:[#allocation3 + $0x70] sm:$0x3] 0.0
    %vm4240 = vcmask 254976
    %4241 = vst.msk [vmem:[#allocation3 + $0x78] sm:$0x3] %vm4240, 0.0
    %v4242 = vld [vmem:[#allocation3] sm:$0xff]
    %v4243 = vld [vmem:[#allocation3 + $0x8] sm:$0xff]
    %v4244 = vld [vmem:[#allocation3 + $0x10] sm:$0xff]
    %v4245 = vld [vmem:[#allocation3 + $0x18] sm:$0xff]
    %v4246 = vld [vmem:[#allocation3 + $0x20] sm:$0xff]
    %v4247 = vld [vmem:[#allocation3 + $0x28] sm:$0xff]
    %v4248 = vld [vmem:[#allocation3 + $0x30] sm:$0xff]
    %v4249 = vld [vmem:[#allocation3 + $0x38] sm:$0xff]
    %v4250 = vld [vmem:[#allocation3 + $0x40] sm:$0xff]
    %v4251 = vld [vmem:[#allocation3 + $0x48] sm:$0xff]
    %v4252 = vld [vmem:[#allocation3 + $0x50] sm:$0xff]
    %v4253 = vld [vmem:[#allocation3 + $0x58] sm:$0xff]
    %v4254 = vld [vmem:[#allocation3 + $0x60] sm:$0xff]
    %v4255 = vld [vmem:[#allocation3 + $0x68] sm:$0xff]
    %v4256 = vld [vmem:[#allocation3] sm:$0xfc]
    %v4257 = vld [vmem:[#allocation3 + $0x8] sm:$0xfc]
    %v4258 = vld [vmem:[#allocation3 + $0x70] sm:$0x3]
    %v4259 = vld [vmem:[#allocation3 + $0x78] sm:$0x3]
    %v4276 = vrot.slane %v4256, 2
    %v4277 = vrot.slane %v4244, 2
    %v4278 = vsel %vm164, %v4276, %v4277
    %v4279 = vrot.slane %v4257, 2
    %v4280 = vrot.slane %v4245, 2
    %v4281 = vsel %vm164, %v4279, %v4280
    %v4282 = vrot.slane %v4246, 2
    %v4283 = vsel %vm164, %v4277, %v4282
    %v4284 = vrot.slane %v4247, 2
    %v4285 = vsel %vm164, %v4280, %v4284
    %v4286 = vrot.slane %v4248, 2
    %v4287 = vsel %vm164, %v4282, %v4286
    %v4288 = vrot.slane %v4249, 2
    %v4289 = vsel %vm164, %v4284, %v4288
    %v4290 = vrot.slane %v4250, 2
    %v4291 = vsel %vm164, %v4286, %v4290
    %v4292 = vrot.slane %v4251, 2
    %v4293 = vsel %vm164, %v4288, %v4292
    %v4294 = vrot.slane %v4252, 2
    %v4295 = vsel %vm164, %v4290, %v4294
    %v4296 = vrot.slane %v4253, 2
    %v4297 = vsel %vm164, %v4292, %v4296
    %v4298 = vrot.slane %v4254, 2
    %v4299 = vsel %vm164, %v4294, %v4298
    %v4300 = vrot.slane %v4255, 2
    %v4301 = vsel %vm164, %v4296, %v4300
    %v4302 = vrot.slane %v4258, 2
    %v4303 = vsel %vm164, %v4298, %v4302
    %v4304 = vrot.slane %v4259, 2
    %v4305 = vsel %vm164, %v4300, %v4304
    %v4320 = vmax.f32 %v4242, %v4278
    %v4321 = vmax.f32 %v4243, %v4281
    %v4322 = vmax.f32 %v4244, %v4283
    %v4323 = vmax.f32 %v4245, %v4285
    %v4324 = vmax.f32 %v4246, %v4287
    %v4325 = vmax.f32 %v4247, %v4289
    %v4326 = vmax.f32 %v4248, %v4291
    %v4327 = vmax.f32 %v4249, %v4293
    %v4328 = vmax.f32 %v4250, %v4295
    %v4329 = vmax.f32 %v4251, %v4297
    %v4330 = vmax.f32 %v4252, %v4299
    %v4331 = vmax.f32 %v4253, %v4301
    %v4332 = vmax.f32 %v4254, %v4303
    %v4333 = vmax.f32 %v4255, %v4305
    %4348 = vrot.lane.b32.xlu0 %v4320, 108
    %v4349 = vpop.permute.xlu0 %4348
    %4350 = vrot.lane.b32.xlu0 %v4321, 108
    %v4351 = vpop.permute.xlu0 %4350
    %4352 = vrot.lane.b32.xlu0 %v4322, 108
    %v4353 = vpop.permute.xlu0 %4352
    %4354 = vrot.lane.b32.xlu0 %v4323, 108
    %v4355 = vpop.permute.xlu0 %4354
    %4356 = vrot.lane.b32.xlu0 %v4324, 108
    %v4357 = vpop.permute.xlu0 %4356
    %4358 = vrot.lane.b32.xlu0 %v4325, 108
    %v4359 = vpop.permute.xlu0 %4358
    %4360 = vrot.lane.b32.xlu0 %v4326, 108
    %v4361 = vpop.permute.xlu0 %4360
    %4362 = vrot.lane.b32.xlu0 %v4327, 108
    %v4363 = vpop.permute.xlu0 %4362
    %4364 = vrot.lane.b32.xlu0 %v4328, 108
    %v4365 = vpop.permute.xlu0 %4364
    %4366 = vrot.lane.b32.xlu0 %v4329, 108
    %v4367 = vpop.permute.xlu0 %4366
    %4368 = vrot.lane.b32.xlu0 %v4330, 108
    %v4369 = vpop.permute.xlu0 %4368
    %4370 = vrot.lane.b32.xlu0 %v4331, 108
    %v4371 = vpop.permute.xlu0 %4370
    %4372 = vrot.lane.b32.xlu0 %v4332, 108
    %v4373 = vpop.permute.xlu0 %4372
    %4374 = vrot.lane.b32.xlu0 %v4333, 108
    %v4375 = vpop.permute.xlu0 %4374
    %vm4376 = vcmask 883712
    %v4377 = vsel %vm4376, %v4349, %v4351
    %v4378 = vsel %vm4376, %v4353, %v4355
    %v4379 = vsel %vm4376, %v4357, %v4359
    %v4380 = vsel %vm4376, %v4361, %v4363
    %v4381 = vsel %vm4376, %v4365, %v4367
    %v4382 = vsel %vm4376, %v4369, %v4371
    %v4383 = vsel %vm4376, %v4373, %v4375
    %v4398 = vmax.f32 %v4320, %v4377
    %v4399 = vmax.f32 %v4321, %v4351
    %v4400 = vmax.f32 %v4322, %v4378
    %v4401 = vmax.f32 %v4323, %v4355
    %v4402 = vmax.f32 %v4324, %v4379
    %v4403 = vmax.f32 %v4325, %v4359
    %v4404 = vmax.f32 %v4326, %v4380
    %v4405 = vmax.f32 %v4327, %v4363
    %v4406 = vmax.f32 %v4328, %v4381
    %v4407 = vmax.f32 %v4329, %v4367
    %v4408 = vmax.f32 %v4330, %v4382
    %v4409 = vmax.f32 %v4331, %v4371
    %v4410 = vmax.f32 %v4332, %v4383
    %v4411 = vmax.f32 %v4333, %v4375
    %vm4412 = vcmp.lt.s32.totalorder %v1191, 0
    %v4413 = vsub.s32 0, %v1191
    %v4414 = vsel %vm4412, %v4413, %v1191
    %v4415 = vshrl.u32 %v4414, 2
    %v4416 = vand.u32 %v4414, 3
    %v4417 = vsub.s32 0, %v4416
    %v4418 = vsel %vm4412, %v4417, %v4416
    %vm4419 = vcmp.lt.s32.totalorder %v1192, 0
    %v4420 = vsub.s32 0, %v1192
    %v4421 = vsel %vm4419, %v4420, %v1192
    %v4422 = vshrl.u32 %v4421, 2
    %v4423 = vand.u32 %v4421, 3
    %v4424 = vsub.s32 0, %v4423
    %v4425 = vsel %vm4419, %v4424, %v4423
    %vm4426 = vcmp.lt.s32.totalorder %v1193, 0
    %v4427 = vsub.s32 0, %v1193
    %v4428 = vsel %vm4426, %v4427, %v1193
    %v4429 = vshrl.u32 %v4428, 2
    %v4430 = vand.u32 %v4428, 3
    %v4431 = vsub.s32 0, %v4430
    %v4432 = vsel %vm4426, %v4431, %v4430
    %vm4433 = vcmp.lt.s32.totalorder %v1194, 0
    %v4434 = vsub.s32 0, %v1194
    %v4435 = vsel %vm4433, %v4434, %v1194
    %v4436 = vshrl.u32 %v4435, 2
    %v4437 = vand.u32 %v4435, 3
    %v4438 = vsub.s32 0, %v4437
    %v4439 = vsel %vm4433, %v4438, %v4437
    %vm4440 = vcmp.lt.s32.totalorder %v1195, 0
    %v4441 = vsub.s32 0, %v1195
    %v4442 = vsel %vm4440, %v4441, %v1195
    %v4443 = vshrl.u32 %v4442, 2
    %v4444 = vand.u32 %v4442, 3
    %v4445 = vsub.s32 0, %v4444
    %v4446 = vsel %vm4440, %v4445, %v4444
    %vm4447 = vcmp.lt.s32.totalorder %v1196, 0
    %v4448 = vsub.s32 0, %v1196
    %v4449 = vsel %vm4447, %v4448, %v1196
    %v4450 = vshrl.u32 %v4449, 2
    %v4451 = vand.u32 %v4449, 3
    %v4452 = vsub.s32 0, %v4451
    %v4453 = vsel %vm4447, %v4452, %v4451
    %vm4454 = vcmp.lt.s32.totalorder %v1197, 0
    %v4455 = vsub.s32 0, %v1197
    %v4456 = vsel %vm4454, %v4455, %v1197
    %v4457 = vshrl.u32 %v4456, 2
    %v4458 = vand.u32 %v4456, 3
    %v4459 = vsub.s32 0, %v4458
    %v4460 = vsel %vm4454, %v4459, %v4458
    %vm4461 = vcmp.ne.s32.totalorder %v4418, 0
    %vm4462 = vcmp.ne.s32.totalorder %v4425, 0
    %vm4463 = vcmp.ne.s32.totalorder %v4432, 0
    %vm4464 = vcmp.ne.s32.totalorder %v4439, 0
    %vm4465 = vcmp.ne.s32.totalorder %v4446, 0
    %vm4466 = vcmp.ne.s32.totalorder %v4453, 0
    %vm4467 = vcmp.ne.s32.totalorder %v4460, 0
    %vm4468 = vcmp.lt.s32.totalorder %v4418, 0
    %vm4469 = vcmp.lt.s32.totalorder %v4425, 0
    %vm4470 = vcmp.lt.s32.totalorder %v4432, 0
    %vm4471 = vcmp.lt.s32.totalorder %v4439, 0
    %vm4472 = vcmp.lt.s32.totalorder %v4446, 0
    %vm4473 = vcmp.lt.s32.totalorder %v4453, 0
    %vm4474 = vcmp.lt.s32.totalorder %v4460, 0
    %vm4475 = vmand %vm4468, %vm4461
    %vm4476 = vmand %vm4469, %vm4462
    %vm4477 = vmand %vm4470, %vm4463
    %vm4478 = vmand %vm4471, %vm4464
    %vm4479 = vmand %vm4472, %vm4465
    %vm4480 = vmand %vm4473, %vm4466
    %vm4481 = vmand %vm4474, %vm4467
    %v4482 = vadd.s32 %v4418, 4
    %v4483 = vadd.s32 %v4425, 4
    %v4484 = vadd.s32 %v4432, 4
    %v4485 = vadd.s32 %v4439, 4
    %v4486 = vadd.s32 %v4446, 4
    %v4487 = vadd.s32 %v4453, 4
    %v4488 = vadd.s32 %v4460, 4
    %v4489 = vsel %vm4475, %v4482, %v4418
    %v4490 = vsel %vm4476, %v4483, %v4425
    %v4491 = vsel %vm4477, %v4484, %v4432
    %v4492 = vsel %vm4478, %v4485, %v4439
    %v4493 = vsel %vm4479, %v4486, %v4446
    %v4494 = vsel %vm4480, %v4487, %v4453
    %v4495 = vsel %vm4481, %v4488, %v4460
    %vm4496 = vcmp.eq.s32.totalorder %v4489, 0
    %vm4497 = vcmp.eq.s32.totalorder %v4490, 0
    %vm4498 = vcmp.eq.s32.totalorder %v4491, 0
    %vm4499 = vcmp.eq.s32.totalorder %v4492, 0
    %vm4500 = vcmp.eq.s32.totalorder %v4493, 0
    %vm4501 = vcmp.eq.s32.totalorder %v4494, 0
    %vm4502 = vcmp.eq.s32.totalorder %v4495, 0
    %vm4503 = vcmp.lt.s32.totalorder %v1191, 16
    %vm4504 = vcmp.lt.s32.totalorder %v1192, 16
    %vm4505 = vcmp.lt.s32.totalorder %v1193, 16
    %vm4506 = vcmp.lt.s32.totalorder %v1194, 16
    %vm4507 = vcmp.lt.s32.totalorder %v1195, 16
    %vm4508 = vcmp.lt.s32.totalorder %v1196, 16
    %vm4509 = vcmp.lt.s32.totalorder %v1197, 16
    %vm4510 = vmand %vm4496, %vm4503
    %vm4511 = vmand %vm4497, %vm4504
    %vm4512 = vmand %vm4498, %vm4505
    %vm4513 = vmand %vm4499, %vm4506
    %vm4514 = vmand %vm4500, %vm4507
    %vm4515 = vmand %vm4501, %vm4508
    %vm4516 = vmand %vm4502, %vm4509
    %v4517 = vsel %vm4510, %v4398, 0.0
    %v4518 = vsel %vm4510, %v4399, 0.0
    %v4519 = vsel %vm4511, %v4400, 0.0
    %v4520 = vsel %vm4511, %v4401, 0.0
    %v4521 = vsel %vm4512, %v4402, 0.0
    %v4522 = vsel %vm4512, %v4403, 0.0
    %v4523 = vsel %vm4513, %v4404, 0.0
    %v4524 = vsel %vm4513, %v4405, 0.0
    %v4525 = vsel %vm4514, %v4406, 0.0
    %v4526 = vsel %vm4514, %v4407, 0.0
    %v4527 = vsel %vm4515, %v4408, 0.0
    %v4528 = vsel %vm4515, %v4409, 0.0
    %v4529 = vsel %vm4516, %v4410, 0.0
    %v4530 = vsel %vm4516, %v4411, 0.0
    %vm4531 = vcmask 1041408
    %vm4532 = vcmask 95236
    %vm4533 = vmor %vm4532, %vm4531
    %4534 = vst.msk [vmem:[#allocation2] sm:$0x33] %vm4533, 0
    %v4535 = vpack.c.bf16 %v4518, %v4517
    %v4536 = vpack.c.bf16 %v4520, %v4519
    %v4537 = vpack.c.bf16 %v4522, %v4521
    %v4538 = vpack.c.bf16 %v4524, %v4523
    %v4539 = vpack.c.bf16 %v4526, %v4525
    %v4540 = vpack.c.bf16 %v4528, %v4527
    %v4541 = vpack.c.bf16 %v4530, %v4529
    %vm4549 = vcmask 1041408
    %vm4550 = vcmask 1045508
    %vm4551 = vmor %vm4549, %vm4550
    %v4552 = vrot.slane %v4535, 6
    %v4553 = vrot.slane %v4552, 4
    %v4554 = vrot.slane %v4536, 6
    %v4555 = vsel %vm4551, %v4553, %v4554
    %v4556 = vrot.slane %v4554, 4
    %v4557 = vrot.slane %v4537, 6
    %v4558 = vsel %vm4551, %v4556, %v4557
    %v4559 = vrot.slane %v4557, 4
    %v4560 = vrot.slane %v4538, 6
    %v4561 = vsel %vm4551, %v4559, %v4560
    %v4562 = vrot.slane %v4560, 4
    %v4563 = vrot.slane %v4539, 6
    %v4564 = vsel %vm4551, %v4562, %v4563
    %v4565 = vrot.slane %v4563, 4
    %v4566 = vrot.slane %v4540, 6
    %v4567 = vsel %vm4551, %v4565, %v4566
    %v4568 = vrot.slane %v4566, 4
    %v4569 = vrot.slane %v4541, 6
    %v4570 = vsel %vm4551, %v4568, %v4569
    %v4571 = vrot.slane %v4569, 4
    %vm4580 = vcmask 1043458
    %vm4581 = vcmask 97286
    %vm4582 = vmor %vm4581, %vm4580
    %4583 = vst.msk [vmem:[#allocation2] sm:$0xcc] %vm4582, %v4552
    %vm4584 = vcmask 97284
    %vm4585 = vmor %vm4584, %vm1370
    %4586 = vst.msk [vmem:[#allocation2 + $0x8] sm:$0xff] %vm4585, %v4555
    %4587 = vst.msk [vmem:[#allocation2 + $0x10] sm:$0xff] %vm4585, %v4558
    %4588 = vst.msk [vmem:[#allocation2 + $0x18] sm:$0xff] %vm4585, %v4561
    %4589 = vst.msk [vmem:[#allocation2 + $0x20] sm:$0xff] %vm4585, %v4564
    %4590 = vst.msk [vmem:[#allocation2 + $0x28] sm:$0xff] %vm4585, %v4567
    %4591 = vst.msk [vmem:[#allocation2 + $0x30] sm:$0xff] %vm4585, %v4570
    %4592 = vst.msk [vmem:[#allocation2 + $0x38] sm:$0x33] %vm4533, %v4571
    %4593 = vst.msk [vmem:[#allocation2 + $0x38] sm:$0xcc] %vm4582, 0
    %v4594 = vld [vmem:[#allocation2] sm:$0xff]
    %v4595 = vld [vmem:[#allocation2 + $0x8] sm:$0xff]
    %v4596 = vld [vmem:[#allocation2 + $0x10] sm:$0xff]
    %v4597 = vld [vmem:[#allocation2 + $0x18] sm:$0xff]
    %v4598 = vld [vmem:[#allocation2 + $0x20] sm:$0xff]
    %v4599 = vld [vmem:[#allocation2 + $0x28] sm:$0xff]
    %v4600 = vld [vmem:[#allocation2 + $0x30] sm:$0xff]
    %v4601 = vld [vmem:[%s7] sm:$0xff]
    %v4602 = vld [vmem:[%s7 + $0x8] sm:$0xff]
    %v4603 = vld [vmem:[%s7 + $0x10] sm:$0xff]
    %v4604 = vld [vmem:[%s7 + $0x18] sm:$0xff]
    %v4605 = vld [vmem:[%s7 + $0x20] sm:$0xff]
    %v4606 = vld [vmem:[%s7 + $0x28] sm:$0xff]
    %v4607 = vld [vmem:[%s7 + $0x30] sm:$0xff]
    %v4608 = vld [vmem:[%s7 + $0x38] sm:$0xff]
    %v4609 = vld [vmem:[%s7 + $0x40] sm:$0xff]
    %v4610 = vld [vmem:[%s7 + $0x48] sm:$0xff]
    %v4611 = vld [vmem:[%s7 + $0x50] sm:$0xff]
    %v4612 = vld [vmem:[%s7 + $0x58] sm:$0xff]
    %v4613 = vld [vmem:[%s7 + $0x60] sm:$0xff]
    %v4614 = vld [vmem:[%s7 + $0x68] sm:$0xff]
    %v4615 = vld [vmem:[%s7 + $0x70] sm:$0xff]
    %v4616 = vld [vmem:[%s7 + $0x78] sm:$0xff]
    %v4617 = vld [vmem:[%s7 + $0x80] sm:$0xff]
    %v4618 = vld [vmem:[%s7 + $0x88] sm:$0x33]
    %v4619 = vld [vmem:[#allocation2] sm:$0xcc]
    %v4620 = vld [vmem:[#allocation2 + $0x38] sm:$0x33]
    %s4621 = scalar_lea.vmem %s7, 144
    %v4622 = vld [vmem:[%s4621] sm:$0xff]
    %v4623 = vld [vmem:[%s4621 + $0x8] sm:$0xff]
    %v4624 = vld [vmem:[%s4621 + $0x10] sm:$0xff]
    %v4625 = vld [vmem:[%s4621 + $0x18] sm:$0xff]
    %v4626 = vld [vmem:[%s4621 + $0x20] sm:$0xff]
    %v4627 = vld [vmem:[%s4621 + $0x28] sm:$0xff]
    %v4628 = vld [vmem:[%s4621 + $0x30] sm:$0xff]
    %v4629 = vld [vmem:[%s4621 + $0x38] sm:$0xff]
    %v4630 = vld [vmem:[%s4621 + $0x40] sm:$0xff]
    %v4631 = vld [vmem:[%s4621 + $0x48] sm:$0xff]
    %v4632 = vld [vmem:[%s4621 + $0x50] sm:$0xff]
    %v4633 = vld [vmem:[%s4621 + $0x58] sm:$0xff]
    %v4634 = vld [vmem:[%s4621 + $0x60] sm:$0xff]
    %v4635 = vld [vmem:[%s4621 + $0x68] sm:$0xff]
    %v4636 = vld [vmem:[%s4621 + $0x70] sm:$0xff]
    %v4637 = vld [vmem:[%s4621 + $0x78] sm:$0xff]
    %v4638 = vld [vmem:[%s4621 + $0x80] sm:$0xff]
    %v4639 = vld [vmem:[%s4621 + $0x88] sm:$0x33]
    %v4648 = vunpack.c.l.b16 %v4619
    %v4649 = vunpack.c.h.b16 %v4619
    %v4650 = vunpack.c.l.b16 %v4595
    %v4651 = vunpack.c.h.b16 %v4595
    %v4652 = vunpack.c.l.b16 %v4596
    %v4653 = vunpack.c.h.b16 %v4596
    %v4654 = vunpack.c.l.b16 %v4597
    %v4655 = vunpack.c.h.b16 %v4597
    %v4656 = vunpack.c.l.b16 %v4598
    %v4657 = vunpack.c.h.b16 %v4598
    %v4658 = vunpack.c.l.b16 %v4599
    %v4659 = vunpack.c.h.b16 %v4599
    %v4660 = vunpack.c.l.b16 %v4600
    %v4661 = vunpack.c.h.b16 %v4600
    %v4662 = vunpack.c.l.b16 %v4620
    %v4663 = vunpack.c.h.b16 %v4620
    %v4664 = vpack.c.b16 %v4650, %v4648
    %v4665 = vpack.c.b16 %v4651, %v4649
    %v4666 = vpack.c.b16 %v4654, %v4652
    %v4667 = vpack.c.b16 %v4655, %v4653
    %v4668 = vpack.c.b16 %v4658, %v4656
    %v4669 = vpack.c.b16 %v4659, %v4657
    %v4670 = vpack.c.b16 %v4662, %v4660
    %v4671 = vpack.c.b16 %v4663, %v4661
    %v4672 = vrot.slane %v4664, 2
    %v4673 = vrot.slane %v4666, 2
    %v4674 = vsel %vm590, %v4672, %v4673
    %v4675 = vrot.slane %v4665, 2
    %v4676 = vrot.slane %v4667, 2
    %v4677 = vsel %vm590, %v4675, %v4676
    %v4678 = vrot.slane %v4668, 2
    %v4679 = vsel %vm590, %v4673, %v4678
    %v4680 = vrot.slane %v4669, 2
    %v4681 = vsel %vm590, %v4676, %v4680
    %v4682 = vrot.slane %v4670, 2
    %v4683 = vsel %vm590, %v4678, %v4682
    %v4684 = vrot.slane %v4671, 2
    %v4685 = vsel %vm590, %v4680, %v4684
    %v4708 = vunpack.c.l.b16 %v4622
    %v4709 = vunpack.c.h.b16 %v4622
    %v4710 = vunpack.c.l.b16 %v4623
    %v4711 = vunpack.c.h.b16 %v4623
    %v4712 = vunpack.c.l.b16 %v4624
    %v4713 = vunpack.c.h.b16 %v4624
    %v4714 = vunpack.c.l.b16 %v4625
    %v4715 = vunpack.c.h.b16 %v4625
    %v4716 = vunpack.c.l.b16 %v4626
    %v4717 = vunpack.c.h.b16 %v4626
    %v4718 = vunpack.c.l.b16 %v4627
    %v4719 = vunpack.c.h.b16 %v4627
    %v4720 = vunpack.c.l.b16 %v4628
    %v4721 = vunpack.c.h.b16 %v4628
    %v4722 = vunpack.c.l.b16 %v4629
    %v4723 = vunpack.c.h.b16 %v4629
    %v4724 = vunpack.c.l.b16 %v4630
    %v4725 = vunpack.c.h.b16 %v4630
    %v4726 = vunpack.c.l.b16 %v4631
    %v4727 = vunpack.c.h.b16 %v4631
    %v4728 = vunpack.c.l.b16 %v4632
    %v4729 = vunpack.c.h.b16 %v4632
    %v4730 = vunpack.c.l.b16 %v4633
    %v4731 = vunpack.c.h.b16 %v4633
    %v4732 = vunpack.c.l.b16 %v4634
    %v4733 = vunpack.c.h.b16 %v4634
    %v4734 = vunpack.c.l.b16 %v4635
    %v4735 = vunpack.c.h.b16 %v4635
    %v4736 = vunpack.c.l.b16 %v4636
    %v4737 = vunpack.c.h.b16 %v4636
    %v4738 = vunpack.c.l.b16 %v4637
    %v4739 = vunpack.c.h.b16 %v4637
    %v4740 = vunpack.c.l.b16 %v4638
    %v4741 = vunpack.c.h.b16 %v4638
    %v4742 = vunpack.c.l.b16 %v4639
    %v4743 = vunpack.c.h.b16 %v4639
    %v4744 = vpack.c.b16 %v4710, %v4708
    %v4745 = vpack.c.b16 %v4711, %v4709
    %v4746 = vpack.c.b16 %v4714, %v4712
    %v4747 = vpack.c.b16 %v4715, %v4713
    %v4748 = vpack.c.b16 %v4718, %v4716
    %v4749 = vpack.c.b16 %v4719, %v4717
    %v4750 = vpack.c.b16 %v4722, %v4720
    %v4751 = vpack.c.b16 %v4723, %v4721
    %v4752 = vpack.c.b16 %v4726, %v4724
    %v4753 = vpack.c.b16 %v4727, %v4725
    %v4754 = vpack.c.b16 %v4730, %v4728
    %v4755 = vpack.c.b16 %v4731, %v4729
    %v4756 = vpack.c.b16 %v4734, %v4732
    %v4757 = vpack.c.b16 %v4735, %v4733
    %v4758 = vpack.c.b16 %v4738, %v4736
    %v4759 = vpack.c.b16 %v4739, %v4737
    %v4760 = vpack.c.b16 %v4742, %v4740
    %v4761 = vpack.c.b16 %v4743, %v4741
    %vm4778 = vcmask 97280
    %v4780 = vsel %vm4778, %v4677, 0
    %v4783 = vsel %vm4778, %v4681, 0
    %v4786 = vsel %vm4778, %v4685, 0
    %v4789 = vsel %vm4778, %v4684, 0
    %v4792 = vsel %vm164, %v4760, 0
    %v4795 = vsel %vm164, %v4761, 0
    %4797 = vmatpush.bf16.msra.mxu0 %v4758
    %4798 = vmatpush.bf16.msra.mxu0 %v4756
    %4799 = vmatpush.bf16.msra.mxu0 %v4754
    %4800 = vmatpush.bf16.msra.mxu0 %v4752
    %4801 = vmatpush.bf16.msra.mxu0 %v4750
    %4802 = vmatpush.bf16.msra.mxu0 %v4748
    %4803 = vmatpush.bf16.msra.mxu0 %v4746
    %4804 = vmatpush.bf16.msra.mxu0 %v4744
    %4805 = vmatmul.bf16.gmra.mxu0 %v4674
    %v4806 = vpop.f32.mrf.mxu0
    %v4807 = vadd.f32 0.0, %v4806
    %v4808 = vpop.f32.mrf.mxu0
    %v4809 = vadd.f32 0.0, %v4808
    %4810 = vmatmul.bf16.gmra.mxu0 %v4679
    %v4811 = vpop.f32.mrf.mxu0
    %v4812 = vadd.f32 0.0, %v4811
    %v4813 = vpop.f32.mrf.mxu0
    %v4814 = vadd.f32 0.0, %v4813
    %4815 = vmatmul.bf16.gmra.mxu0 %v4683
    %v4816 = vpop.f32.mrf.mxu0
    %v4817 = vadd.f32 0.0, %v4816
    %v4818 = vpop.f32.mrf.mxu0
    %v4819 = vadd.f32 0.0, %v4818
    %4820 = vmatmul.bf16.gmra.mxu0 %v4682
    %v4821 = vpop.f32.mrf.mxu0
    %v4822 = vadd.f32 0.0, %v4821
    %v4823 = vpop.f32.mrf.mxu0
    %4824 = vdwg.mxu0
    %4825 = vmatpush.bf16.msra.mxu0 0
    %4826 = vmatpush.bf16.msra.mxu0 0
    %4827 = vmatpush.bf16.msra.mxu0 0
    %4828 = vmatpush.bf16.msra.mxu0 0
    %4829 = vmatpush.bf16.msra.mxu0 0
    %4830 = vmatpush.bf16.msra.mxu0 0
    %4831 = vmatpush.bf16.msra.mxu0 0
    %4832 = vmatpush.bf16.msra.mxu0 %v4792
    %4833 = vmatmul.bf16.gmra.mxu0 %v4780
    %v4834 = vpop.f32.mrf.mxu0
    %v4835 = vadd.f32 %v4807, %v4834
    %v4836 = vpop.f32.mrf.mxu0
    %v4837 = vadd.f32 %v4809, %v4836
    %4838 = vmatmul.bf16.gmra.mxu0 %v4783
    %v4839 = vpop.f32.mrf.mxu0
    %v4840 = vadd.f32 %v4812, %v4839
    %v4841 = vpop.f32.mrf.mxu0
    %v4842 = vadd.f32 %v4814, %v4841
    %4843 = vmatmul.bf16.gmra.mxu0 %v4786
    %v4844 = vpop.f32.mrf.mxu0
    %v4845 = vadd.f32 %v4817, %v4844
    %v4846 = vpop.f32.mrf.mxu0
    %v4847 = vadd.f32 %v4819, %v4846
    %4848 = vmatmul.bf16.gmra.mxu0 %v4789
    %v4849 = vpop.f32.mrf.mxu0
    %v4850 = vadd.f32 %v4822, %v4849
    %v4851 = vpop.f32.mrf.mxu0
    %4852 = vdwg.mxu0
    %4853 = vmatpush.bf16.msra.mxu0 %v4759
    %4854 = vmatpush.bf16.msra.mxu0 %v4757
    %4855 = vmatpush.bf16.msra.mxu0 %v4755
    %4856 = vmatpush.bf16.msra.mxu0 %v4753
    %4857 = vmatpush.bf16.msra.mxu0 %v4751
    %4858 = vmatpush.bf16.msra.mxu0 %v4749
    %4859 = vmatpush.bf16.msra.mxu0 %v4747
    %4860 = vmatpush.bf16.msra.mxu0 %v4745
    %4861 = vmatmul.bf16.gmra.mxu0 %v4674
    %v4862 = vpop.f32.mrf.mxu0
    %v4863 = vadd.f32 0.0, %v4862
    %v4864 = vpop.f32.mrf.mxu0
    %v4865 = vadd.f32 0.0, %v4864
    %4866 = vmatmul.bf16.gmra.mxu0 %v4679
    %v4867 = vpop.f32.mrf.mxu0
    %v4868 = vadd.f32 0.0, %v4867
    %v4869 = vpop.f32.mrf.mxu0
    %v4870 = vadd.f32 0.0, %v4869
    %4871 = vmatmul.bf16.gmra.mxu0 %v4683
    %v4872 = vpop.f32.mrf.mxu0
    %v4873 = vadd.f32 0.0, %v4872
    %v4874 = vpop.f32.mrf.mxu0
    %v4875 = vadd.f32 0.0, %v4874
    %4876 = vmatmul.bf16.gmra.mxu0 %v4682
    %v4877 = vpop.f32.mrf.mxu0
    %v4878 = vadd.f32 0.0, %v4877
    %v4879 = vpop.f32.mrf.mxu0
    %4880 = vdwg.mxu0
    %4881 = vmatpush.bf16.msra.mxu0 0
    %4882 = vmatpush.bf16.msra.mxu0 0
    %4883 = vmatpush.bf16.msra.mxu0 0
    %4884 = vmatpush.bf16.msra.mxu0 0
    %4885 = vmatpush.bf16.msra.mxu0 0
    %4886 = vmatpush.bf16.msra.mxu0 0
    %4887 = vmatpush.bf16.msra.mxu0 0
    %4888 = vmatpush.bf16.msra.mxu0 %v4795
    %4889 = vmatmul.bf16.gmra.mxu0 %v4780
    %v4890 = vpop.f32.mrf.mxu0
    %v4891 = vadd.f32 %v4863, %v4890
    %v4892 = vpop.f32.mrf.mxu0
    %v4893 = vadd.f32 %v4865, %v4892
    %4894 = vmatmul.bf16.gmra.mxu0 %v4783
    %v4895 = vpop.f32.mrf.mxu0
    %v4896 = vadd.f32 %v4868, %v4895
    %v4897 = vpop.f32.mrf.mxu0
    %v4898 = vadd.f32 %v4870, %v4897
    %4899 = vmatmul.bf16.gmra.mxu0 %v4786
    %v4900 = vpop.f32.mrf.mxu0
    %v4901 = vadd.f32 %v4873, %v4900
    %v4902 = vpop.f32.mrf.mxu0
    %v4903 = vadd.f32 %v4875, %v4902
    %4904 = vmatmul.bf16.gmra.mxu0 %v4789
    %v4905 = vpop.f32.mrf.mxu0
    %v4906 = vadd.f32 %v4878, %v4905
    %v4907 = vpop.f32.mrf.mxu0
    %4908 = vdwg.mxu0
    %v4910 = vunpack.c.l.b16 %v4594
    %v4911 = vunpack.c.h.b16 %v4594
    %v4912 = vpack.c.b16 %v4650, %v4910
    %v4913 = vpack.c.b16 %v4651, %v4911
    %v4914 = vpack.c.b16 %v4660, %v4660
    %v4915 = vpack.c.b16 %v4661, %v4661
    %v4938 = vunpack.c.l.b16 %v4601
    %v4939 = vunpack.c.h.b16 %v4601
    %v4940 = vunpack.c.l.b16 %v4602
    %v4941 = vunpack.c.h.b16 %v4602
    %v4942 = vunpack.c.l.b16 %v4603
    %v4943 = vunpack.c.h.b16 %v4603
    %v4944 = vunpack.c.l.b16 %v4604
    %v4945 = vunpack.c.h.b16 %v4604
    %v4946 = vunpack.c.l.b16 %v4605
    %v4947 = vunpack.c.h.b16 %v4605
    %v4948 = vunpack.c.l.b16 %v4606
    %v4949 = vunpack.c.h.b16 %v4606
    %v4950 = vunpack.c.l.b16 %v4607
    %v4951 = vunpack.c.h.b16 %v4607
    %v4952 = vunpack.c.l.b16 %v4608
    %v4953 = vunpack.c.h.b16 %v4608
    %v4954 = vunpack.c.l.b16 %v4609
    %v4955 = vunpack.c.h.b16 %v4609
    %v4956 = vunpack.c.l.b16 %v4610
    %v4957 = vunpack.c.h.b16 %v4610
    %v4958 = vunpack.c.l.b16 %v4611
    %v4959 = vunpack.c.h.b16 %v4611
    %v4960 = vunpack.c.l.b16 %v4612
    %v4961 = vunpack.c.h.b16 %v4612
    %v4962 = vunpack.c.l.b16 %v4613
    %v4963 = vunpack.c.h.b16 %v4613
    %v4964 = vunpack.c.l.b16 %v4614
    %v4965 = vunpack.c.h.b16 %v4614
    %v4966 = vunpack.c.l.b16 %v4615
    %v4967 = vunpack.c.h.b16 %v4615
    %v4968 = vunpack.c.l.b16 %v4616
    %v4969 = vunpack.c.h.b16 %v4616
    %v4970 = vunpack.c.l.b16 %v4617
    %v4971 = vunpack.c.h.b16 %v4617
    %v4972 = vunpack.c.l.b16 %v4618
    %v4973 = vunpack.c.h.b16 %v4618
    %v4974 = vpack.c.b16 %v4940, %v4938
    %v4975 = vpack.c.b16 %v4941, %v4939
    %v4976 = vpack.c.b16 %v4944, %v4942
    %v4977 = vpack.c.b16 %v4945, %v4943
    %v4978 = vpack.c.b16 %v4948, %v4946
    %v4979 = vpack.c.b16 %v4949, %v4947
    %v4980 = vpack.c.b16 %v4952, %v4950
    %v4981 = vpack.c.b16 %v4953, %v4951
    %v4982 = vpack.c.b16 %v4956, %v4954
    %v4983 = vpack.c.b16 %v4957, %v4955
    %v4984 = vpack.c.b16 %v4960, %v4958
    %v4985 = vpack.c.b16 %v4961, %v4959
    %v4986 = vpack.c.b16 %v4964, %v4962
    %v4987 = vpack.c.b16 %v4965, %v4963
    %v4988 = vpack.c.b16 %v4968, %v4966
    %v4989 = vpack.c.b16 %v4969, %v4967
    %v4990 = vpack.c.b16 %v4972, %v4970
    %v4991 = vpack.c.b16 %v4973, %v4971
    %v5009 = vsel %vm4778, %v4913, 0
    %v5012 = vsel %vm4778, %v4667, 0
    %v5015 = vsel %vm4778, %v4669, 0
    %v5018 = vsel %vm4778, %v4915, 0
    %v5021 = vsel %vm164, %v4990, 0
    %v5024 = vsel %vm164, %v4991, 0
    %5026 = vmatpush.bf16.msra.mxu0 %v4988
    %5027 = vmatpush.bf16.msra.mxu0 %v4986
    %5028 = vmatpush.bf16.msra.mxu0 %v4984
    %5029 = vmatpush.bf16.msra.mxu0 %v4982
    %5030 = vmatpush.bf16.msra.mxu0 %v4980
    %5031 = vmatpush.bf16.msra.mxu0 %v4978
    %5032 = vmatpush.bf16.msra.mxu0 %v4976
    %5033 = vmatpush.bf16.msra.mxu0 %v4974
    %5034 = vmatmul.bf16.gmra.mxu0 %v4912
    %v5035 = vpop.f32.mrf.mxu0
    %v5036 = vadd.f32 %v4835, %v5035
    %v5037 = vpop.f32.mrf.mxu0
    %v5038 = vadd.f32 %v4837, %v5037
    %5039 = vmatmul.bf16.gmra.mxu0 %v4666
    %v5040 = vpop.f32.mrf.mxu0
    %v5041 = vadd.f32 %v4840, %v5040
    %v5042 = vpop.f32.mrf.mxu0
    %v5043 = vadd.f32 %v4842, %v5042
    %5044 = vmatmul.bf16.gmra.mxu0 %v4668
    %v5045 = vpop.f32.mrf.mxu0
    %v5046 = vadd.f32 %v4845, %v5045
    %v5047 = vpop.f32.mrf.mxu0
    %v5048 = vadd.f32 %v4847, %v5047
    %5049 = vmatmul.bf16.gmra.mxu0 %v4914
    %v5050 = vpop.f32.mrf.mxu0
    %v5051 = vadd.f32 %v4850, %v5050
    %v5052 = vpop.f32.mrf.mxu0
    %5053 = vdwg.mxu0
    %5054 = vmatpush.bf16.msra.mxu0 0
    %5055 = vmatpush.bf16.msra.mxu0 0
    %5056 = vmatpush.bf16.msra.mxu0 0
    %5057 = vmatpush.bf16.msra.mxu0 0
    %5058 = vmatpush.bf16.msra.mxu0 0
    %5059 = vmatpush.bf16.msra.mxu0 0
    %5060 = vmatpush.bf16.msra.mxu0 0
    %5061 = vmatpush.bf16.msra.mxu0 %v5021
    %5062 = vmatmul.bf16.gmra.mxu0 %v5009
    %v5063 = vpop.f32.mrf.mxu0
    %v5064 = vadd.f32 %v5036, %v5063
    %v5065 = vpop.f32.mrf.mxu0
    %v5066 = vadd.f32 %v5038, %v5065
    %5067 = vmatmul.bf16.gmra.mxu0 %v5012
    %v5068 = vpop.f32.mrf.mxu0
    %v5069 = vadd.f32 %v5041, %v5068
    %v5070 = vpop.f32.mrf.mxu0
    %v5071 = vadd.f32 %v5043, %v5070
    %5072 = vmatmul.bf16.gmra.mxu0 %v5015
    %v5073 = vpop.f32.mrf.mxu0
    %v5074 = vadd.f32 %v5046, %v5073
    %v5075 = vpop.f32.mrf.mxu0
    %v5076 = vadd.f32 %v5048, %v5075
    %5077 = vmatmul.bf16.gmra.mxu0 %v5018
    %v5078 = vpop.f32.mrf.mxu0
    %v5079 = vadd.f32 %v5051, %v5078
    %v5080 = vpop.f32.mrf.mxu0
    %5081 = vdwg.mxu0
    %5082 = vmatpush.bf16.msra.mxu0 %v4989
    %5083 = vmatpush.bf16.msra.mxu0 %v4987
    %5084 = vmatpush.bf16.msra.mxu0 %v4985
    %5085 = vmatpush.bf16.msra.mxu0 %v4983
    %5086 = vmatpush.bf16.msra.mxu0 %v4981
    %5087 = vmatpush.bf16.msra.mxu0 %v4979
    %5088 = vmatpush.bf16.msra.mxu0 %v4977
    %5089 = vmatpush.bf16.msra.mxu0 %v4975
    %5090 = vmatmul.bf16.gmra.mxu0 %v4912
    %v5091 = vpop.f32.mrf.mxu0
    %v5092 = vadd.f32 %v4891, %v5091
    %v5093 = vpop.f32.mrf.mxu0
    %v5094 = vadd.f32 %v4893, %v5093
    %5095 = vmatmul.bf16.gmra.mxu0 %v4666
    %v5096 = vpop.f32.mrf.mxu0
    %v5097 = vadd.f32 %v4896, %v5096
    %v5098 = vpop.f32.mrf.mxu0
    %v5099 = vadd.f32 %v4898, %v5098
    %5100 = vmatmul.bf16.gmra.mxu0 %v4668
    %v5101 = vpop.f32.mrf.mxu0
    %v5102 = vadd.f32 %v4901, %v5101
    %v5103 = vpop.f32.mrf.mxu0
    %v5104 = vadd.f32 %v4903, %v5103
    %5105 = vmatmul.bf16.gmra.mxu0 %v4914
    %v5106 = vpop.f32.mrf.mxu0
    %v5107 = vadd.f32 %v4906, %v5106
    %v5108 = vpop.f32.mrf.mxu0
    %5109 = vdwg.mxu0
    %5110 = vmatpush.bf16.msra.mxu0 0
    %5111 = vmatpush.bf16.msra.mxu0 0
    %5112 = vmatpush.bf16.msra.mxu0 0
    %5113 = vmatpush.bf16.msra.mxu0 0
    %5114 = vmatpush.bf16.msra.mxu0 0
    %5115 = vmatpush.bf16.msra.mxu0 0
    %5116 = vmatpush.bf16.msra.mxu0 0
    %5117 = vmatpush.bf16.msra.mxu0 %v5024
    %5118 = vmatmul.bf16.gmra.mxu0 %v5009
    %v5119 = vpop.f32.mrf.mxu0
    %v5120 = vadd.f32 %v5092, %v5119
    %v5121 = vpop.f32.mrf.mxu0
    %v5122 = vadd.f32 %v5094, %v5121
    %5123 = vmatmul.bf16.gmra.mxu0 %v5012
    %v5124 = vpop.f32.mrf.mxu0
    %v5125 = vadd.f32 %v5097, %v5124
    %v5126 = vpop.f32.mrf.mxu0
    %v5127 = vadd.f32 %v5099, %v5126
    %5128 = vmatmul.bf16.gmra.mxu0 %v5015
    %v5129 = vpop.f32.mrf.mxu0
    %v5130 = vadd.f32 %v5102, %v5129
    %v5131 = vpop.f32.mrf.mxu0
    %v5132 = vadd.f32 %v5104, %v5131
    %5133 = vmatmul.bf16.gmra.mxu0 %v5018
    %v5134 = vpop.f32.mrf.mxu0
    %v5135 = vadd.f32 %v5107, %v5134
    %v5136 = vpop.f32.mrf.mxu0
    %5137 = vdwg.mxu0
    %v5138 = vld [vmem:[#allocation2 + $0x38] sm:$0xff]
    %s5139 = scalar_lea.vmem %s7, 288
    %v5140 = vld [vmem:[%s5139] sm:$0xff]
    %v5141 = vld [vmem:[%s5139 + $0x8] sm:$0xff]
    %v5142 = vld [vmem:[%s5139 + $0x10] sm:$0xff]
    %v5143 = vld [vmem:[%s5139 + $0x18] sm:$0xff]
    %v5144 = vld [vmem:[%s5139 + $0x20] sm:$0xff]
    %v5145 = vld [vmem:[%s5139 + $0x28] sm:$0xff]
    %v5146 = vld [vmem:[%s5139 + $0x30] sm:$0xff]
    %v5147 = vld [vmem:[%s5139 + $0x38] sm:$0xff]
    %v5148 = vld [vmem:[%s5139 + $0x40] sm:$0xff]
    %v5149 = vld [vmem:[%s5139 + $0x48] sm:$0xff]
    %v5150 = vld [vmem:[%s5139 + $0x50] sm:$0xff]
    %v5151 = vld [vmem:[%s5139 + $0x58] sm:$0xff]
    %v5152 = vld [vmem:[%s5139 + $0x60] sm:$0xff]
    %v5153 = vld [vmem:[%s5139 + $0x68] sm:$0xff]
    %v5154 = vld [vmem:[%s5139 + $0x70] sm:$0xff]
    %v5155 = vld [vmem:[%s5139 + $0x78] sm:$0xff]
    %v5156 = vld [vmem:[%s5139 + $0x80] sm:$0xff]
    %v5157 = vld [vmem:[%s5139 + $0x88] sm:$0x33]
    %v5159 = vunpack.c.l.b16 %v5138
    %v5160 = vunpack.c.h.b16 %v5138
    %v5161 = vpack.c.b16 %v4652, %v4650
    %v5162 = vpack.c.b16 %v4653, %v4651
    %v5163 = vpack.c.b16 %v4656, %v4654
    %v5164 = vpack.c.b16 %v4657, %v4655
    %v5165 = vpack.c.b16 %v4660, %v4658
    %v5166 = vpack.c.b16 %v4661, %v4659
    %v5167 = vpack.c.b16 %v5159, %v5159
    %v5168 = vpack.c.b16 %v5160, %v5160
    %v5191 = vunpack.c.l.b16 %v5140
    %v5192 = vunpack.c.h.b16 %v5140
    %v5193 = vunpack.c.l.b16 %v5141
    %v5194 = vunpack.c.h.b16 %v5141
    %v5195 = vunpack.c.l.b16 %v5142
    %v5196 = vunpack.c.h.b16 %v5142
    %v5197 = vunpack.c.l.b16 %v5143
    %v5198 = vunpack.c.h.b16 %v5143
    %v5199 = vunpack.c.l.b16 %v5144
    %v5200 = vunpack.c.h.b16 %v5144
    %v5201 = vunpack.c.l.b16 %v5145
    %v5202 = vunpack.c.h.b16 %v5145
    %v5203 = vunpack.c.l.b16 %v5146
    %v5204 = vunpack.c.h.b16 %v5146
    %v5205 = vunpack.c.l.b16 %v5147
    %v5206 = vunpack.c.h.b16 %v5147
    %v5207 = vunpack.c.l.b16 %v5148
    %v5208 = vunpack.c.h.b16 %v5148
    %v5209 = vunpack.c.l.b16 %v5149
    %v5210 = vunpack.c.h.b16 %v5149
    %v5211 = vunpack.c.l.b16 %v5150
    %v5212 = vunpack.c.h.b16 %v5150
    %v5213 = vunpack.c.l.b16 %v5151
    %v5214 = vunpack.c.h.b16 %v5151
    %v5215 = vunpack.c.l.b16 %v5152
    %v5216 = vunpack.c.h.b16 %v5152
    %v5217 = vunpack.c.l.b16 %v5153
    %v5218 = vunpack.c.h.b16 %v5153
    %v5219 = vunpack.c.l.b16 %v5154
    %v5220 = vunpack.c.h.b16 %v5154
    %v5221 = vunpack.c.l.b16 %v5155
    %v5222 = vunpack.c.h.b16 %v5155
    %v5223 = vunpack.c.l.b16 %v5156
    %v5224 = vunpack.c.h.b16 %v5156
    %v5225 = vunpack.c.l.b16 %v5157
    %v5226 = vunpack.c.h.b16 %v5157
    %v5227 = vpack.c.b16 %v5193, %v5191
    %v5228 = vpack.c.b16 %v5194, %v5192
    %v5229 = vpack.c.b16 %v5197, %v5195
    %v5230 = vpack.c.b16 %v5198, %v5196
    %v5231 = vpack.c.b16 %v5201, %v5199
    %v5232 = vpack.c.b16 %v5202, %v5200
    %v5233 = vpack.c.b16 %v5205, %v5203
    %v5234 = vpack.c.b16 %v5206, %v5204
    %v5235 = vpack.c.b16 %v5209, %v5207
    %v5236 = vpack.c.b16 %v5210, %v5208
    %v5237 = vpack.c.b16 %v5213, %v5211
    %v5238 = vpack.c.b16 %v5214, %v5212
    %v5239 = vpack.c.b16 %v5217, %v5215
    %v5240 = vpack.c.b16 %v5218, %v5216
    %v5241 = vpack.c.b16 %v5221, %v5219
    %v5242 = vpack.c.b16 %v5222, %v5220
    %v5243 = vpack.c.b16 %v5225, %v5223
    %v5244 = vpack.c.b16 %v5226, %v5224
    %v5262 = vsel %vm4778, %v5162, 0
    %v5265 = vsel %vm4778, %v5164, 0
    %v5268 = vsel %vm4778, %v5166, 0
    %v5271 = vsel %vm4778, %v5168, 0
    %v5274 = vsel %vm164, %v5243, 0
    %v5277 = vsel %vm164, %v5244, 0
    %5279 = vmatpush.bf16.msra.mxu0 %v5241
    %5280 = vmatpush.bf16.msra.mxu0 %v5239
    %5281 = vmatpush.bf16.msra.mxu0 %v5237
    %5282 = vmatpush.bf16.msra.mxu0 %v5235
    %5283 = vmatpush.bf16.msra.mxu0 %v5233
    %5284 = vmatpush.bf16.msra.mxu0 %v5231
    %5285 = vmatpush.bf16.msra.mxu0 %v5229
    %5286 = vmatpush.bf16.msra.mxu0 %v5227
    %5287 = vmatmul.bf16.gmra.mxu0 %v5161
    %v5288 = vpop.f32.mrf.mxu0
    %v5289 = vadd.f32 0.0, %v5288
    %v5290 = vpop.f32.mrf.mxu0
    %v5291 = vadd.f32 0.0, %v5290
    %5292 = vmatmul.bf16.gmra.mxu0 %v5163
    %v5293 = vpop.f32.mrf.mxu0
    %v5294 = vadd.f32 0.0, %v5293
    %v5295 = vpop.f32.mrf.mxu0
    %v5296 = vadd.f32 0.0, %v5295
    %5297 = vmatmul.bf16.gmra.mxu0 %v5165
    %v5298 = vpop.f32.mrf.mxu0
    %v5299 = vadd.f32 0.0, %v5298
    %v5300 = vpop.f32.mrf.mxu0
    %v5301 = vadd.f32 0.0, %v5300
    %5302 = vmatmul.bf16.gmra.mxu0 %v5167
    %v5303 = vpop.f32.mrf.mxu0
    %v5304 = vadd.f32 0.0, %v5303
    %v5305 = vpop.f32.mrf.mxu0
    %5306 = vdwg.mxu0
    %5307 = vmatpush.bf16.msra.mxu0 0
    %5308 = vmatpush.bf16.msra.mxu0 0
    %5309 = vmatpush.bf16.msra.mxu0 0
    %5310 = vmatpush.bf16.msra.mxu0 0
    %5311 = vmatpush.bf16.msra.mxu0 0
    %5312 = vmatpush.bf16.msra.mxu0 0
    %5313 = vmatpush.bf16.msra.mxu0 0
    %5314 = vmatpush.bf16.msra.mxu0 %v5274
    %5315 = vmatmul.bf16.gmra.mxu0 %v5262
    %v5316 = vpop.f32.mrf.mxu0
    %v5317 = vadd.f32 %v5289, %v5316
    %v5318 = vpop.f32.mrf.mxu0
    %v5319 = vadd.f32 %v5291, %v5318
    %5320 = vmatmul.bf16.gmra.mxu0 %v5265
    %v5321 = vpop.f32.mrf.mxu0
    %v5322 = vadd.f32 %v5294, %v5321
    %v5323 = vpop.f32.mrf.mxu0
    %v5324 = vadd.f32 %v5296, %v5323
    %5325 = vmatmul.bf16.gmra.mxu0 %v5268
    %v5326 = vpop.f32.mrf.mxu0
    %v5327 = vadd.f32 %v5299, %v5326
    %v5328 = vpop.f32.mrf.mxu0
    %v5329 = vadd.f32 %v5301, %v5328
    %5330 = vmatmul.bf16.gmra.mxu0 %v5271
    %v5331 = vpop.f32.mrf.mxu0
    %v5332 = vadd.f32 %v5304, %v5331
    %v5333 = vpop.f32.mrf.mxu0
    %5334 = vdwg.mxu0
    %5335 = vmatpush.bf16.msra.mxu0 %v5242
    %5336 = vmatpush.bf16.msra.mxu0 %v5240
    %5337 = vmatpush.bf16.msra.mxu0 %v5238
    %5338 = vmatpush.bf16.msra.mxu0 %v5236
    %5339 = vmatpush.bf16.msra.mxu0 %v5234
    %5340 = vmatpush.bf16.msra.mxu0 %v5232
    %5341 = vmatpush.bf16.msra.mxu0 %v5230
    %5342 = vmatpush.bf16.msra.mxu0 %v5228
    %5343 = vmatmul.bf16.gmra.mxu0 %v5161
    %v5344 = vpop.f32.mrf.mxu0
    %v5345 = vadd.f32 0.0, %v5344
    %v5346 = vpop.f32.mrf.mxu0
    %v5347 = vadd.f32 0.0, %v5346
    %5348 = vmatmul.bf16.gmra.mxu0 %v5163
    %v5349 = vpop.f32.mrf.mxu0
    %v5350 = vadd.f32 0.0, %v5349
    %v5351 = vpop.f32.mrf.mxu0
    %v5352 = vadd.f32 0.0, %v5351
    %5353 = vmatmul.bf16.gmra.mxu0 %v5165
    %v5354 = vpop.f32.mrf.mxu0
    %v5355 = vadd.f32 0.0, %v5354
    %v5356 = vpop.f32.mrf.mxu0
    %v5357 = vadd.f32 0.0, %v5356
    %5358 = vmatmul.bf16.gmra.mxu0 %v5167
    %v5359 = vpop.f32.mrf.mxu0
    %v5360 = vadd.f32 0.0, %v5359
    %v5361 = vpop.f32.mrf.mxu0
    %5362 = vdwg.mxu0
    %5363 = vmatpush.bf16.msra.mxu0 0
    %5364 = vmatpush.bf16.msra.mxu0 0
    %5365 = vmatpush.bf16.msra.mxu0 0
    %5366 = vmatpush.bf16.msra.mxu0 0
    %5367 = vmatpush.bf16.msra.mxu0 0
    %5368 = vmatpush.bf16.msra.mxu0 0
    %5369 = vmatpush.bf16.msra.mxu0 0
    %5370 = vmatpush.bf16.msra.mxu0 %v5277
    %5371 = vmatmul.bf16.gmra.mxu0 %v5262
    %v5372 = vpop.f32.mrf.mxu0
    %v5373 = vadd.f32 %v5345, %v5372
    %v5374 = vpop.f32.mrf.mxu0
    %v5375 = vadd.f32 %v5347, %v5374
    %5376 = vmatmul.bf16.gmra.mxu0 %v5265
    %v5377 = vpop.f32.mrf.mxu0
    %v5378 = vadd.f32 %v5350, %v5377
    %v5379 = vpop.f32.mrf.mxu0
    %v5380 = vadd.f32 %v5352, %v5379
    %5381 = vmatmul.bf16.gmra.mxu0 %v5268
    %v5382 = vpop.f32.mrf.mxu0
    %v5383 = vadd.f32 %v5355, %v5382
    %v5384 = vpop.f32.mrf.mxu0
    %v5385 = vadd.f32 %v5357, %v5384
    %5386 = vmatmul.bf16.gmra.mxu0 %v5271
    %v5387 = vpop.f32.mrf.mxu0
    %v5388 = vadd.f32 %v5360, %v5387
    %v5389 = vpop.f32.mrf.mxu0
    %5390 = vdwg.mxu0
    %v5391 = vadd.f32 %v5064, %v5317
    %v5392 = vadd.f32 %v5120, %v5373
    %v5393 = vadd.f32 %v5066, %v5319
    %v5394 = vadd.f32 %v5122, %v5375
    %v5395 = vadd.f32 %v5069, %v5322
    %v5396 = vadd.f32 %v5125, %v5378
    %v5397 = vadd.f32 %v5071, %v5324
    %v5398 = vadd.f32 %v5127, %v5380
    %v5399 = vadd.f32 %v5074, %v5327
    %v5400 = vadd.f32 %v5130, %v5383
    %v5401 = vadd.f32 %v5076, %v5329
    %v5402 = vadd.f32 %v5132, %v5385
    %v5403 = vadd.f32 %v5079, %v5332
    %v5404 = vadd.f32 %v5135, %v5388
    %v5405 = vld [vmem:[%s8] sm:$0x3]
    %v5407 = vperm.slane %v5405, 0
    %v5408 = vperm.slane %v5405, 1
    %v5411 = vadd.f32 %v5391, %v5407
    %v5412 = vadd.f32 %v5392, %v5408
    %v5413 = vadd.f32 %v5393, %v5407
    %v5414 = vadd.f32 %v5394, %v5408
    %v5415 = vadd.f32 %v5395, %v5407
    %v5416 = vadd.f32 %v5396, %v5408
    %v5417 = vadd.f32 %v5397, %v5407
    %v5418 = vadd.f32 %v5398, %v5408
    %v5419 = vadd.f32 %v5399, %v5407
    %v5420 = vadd.f32 %v5400, %v5408
    %v5421 = vadd.f32 %v5401, %v5407
    %v5422 = vadd.f32 %v5402, %v5408
    %v5423 = vadd.f32 %v5403, %v5407
    %v5424 = vadd.f32 %v5404, %v5408
    %v5425 = vadd.f32 %v5411, %v4517
    %v5426 = vadd.f32 %v5412, %v4518
    %v5427 = vadd.f32 %v5413, %v4519
    %v5428 = vadd.f32 %v5414, %v4520
    %v5429 = vadd.f32 %v5415, %v4521
    %v5430 = vadd.f32 %v5416, %v4522
    %v5431 = vadd.f32 %v5417, %v4523
    %v5432 = vadd.f32 %v5418, %v4524
    %v5433 = vadd.f32 %v5419, %v4525
    %v5434 = vadd.f32 %v5420, %v4526
    %v5435 = vadd.f32 %v5421, %v4527
    %v5436 = vadd.f32 %v5422, %v4528
    %v5437 = vadd.f32 %v5423, %v4529
    %v5438 = vadd.f32 %v5424, %v4530
    %v5439 = vmax.f32 %v5425, 0.0
    %v5440 = vmax.f32 %v5426, 0.0
    %v5441 = vmax.f32 %v5427, 0.0
    %v5442 = vmax.f32 %v5428, 0.0
    %v5443 = vmax.f32 %v5429, 0.0
    %v5444 = vmax.f32 %v5430, 0.0
    %v5445 = vmax.f32 %v5431, 0.0
    %v5446 = vmax.f32 %v5432, 0.0
    %v5447 = vmax.f32 %v5433, 0.0
    %v5448 = vmax.f32 %v5434, 0.0
    %v5449 = vmax.f32 %v5435, 0.0
    %v5450 = vmax.f32 %v5436, 0.0
    %v5451 = vmax.f32 %v5437, 0.0
    %v5452 = vmax.f32 %v5438, 0.0
    %v5453 = vpack.c.bf16 %v5440, %v5439
    %v5454 = vpack.c.bf16 %v5442, %v5441
    %v5455 = vpack.c.bf16 %v5444, %v5443
    %v5456 = vpack.c.bf16 %v5446, %v5445
    %v5457 = vpack.c.bf16 %v5448, %v5447
    %v5458 = vpack.c.bf16 %v5450, %v5449
    %v5459 = vpack.c.bf16 %v5452, %v5451
    %5460 = vst.msk [vmem:[#allocation2] sm:$0xff] %vm4585, %v5453
    %5461 = vst.msk [vmem:[#allocation2 + $0x8] sm:$0xff] %vm4585, %v5454
    %5462 = vst.msk [vmem:[#allocation2 + $0x10] sm:$0xff] %vm4585, %v5455
    %5463 = vst.msk [vmem:[#allocation2 + $0x18] sm:$0xff] %vm4585, %v5456
    %5464 = vst.msk [vmem:[#allocation2 + $0x20] sm:$0xff] %vm4585, %v5457
    %5465 = vst.msk [vmem:[#allocation2 + $0x28] sm:$0xff] %vm4585, %v5458
    %5466 = vst.msk [vmem:[#allocation2 + $0x30] sm:$0xff] %vm4585, %v5459
    %5467 = vst.msk [vmem:[#allocation2 + $0x38] sm:$0xff] %vm4585, 0
    %5468 = vst.msk [vmem:[#allocation2 + $0x40] sm:$0x33] %vm4533, 0
    %v5469 = vld [vmem:[#allocation2] sm:$0xff]
    %v5470 = vld [vmem:[#allocation2 + $0x8] sm:$0xff]
    %v5471 = vld [vmem:[#allocation2 + $0x10] sm:$0xff]
    %v5472 = vld [vmem:[#allocation2 + $0x18] sm:$0xff]
    %v5473 = vld [vmem:[#allocation2 + $0x20] sm:$0xff]
    %v5474 = vld [vmem:[#allocation2 + $0x28] sm:$0xff]
    %v5475 = vld [vmem:[#allocation2 + $0x30] sm:$0xff]
    %v5476 = vld [vmem:[%s9] sm:$0xf]
    %v5477 = vld [vmem:[%s9 + $0x4] sm:$0xf]
    %v5478 = vld [vmem:[%s9 + $0x8] sm:$0xf]
    %v5479 = vld [vmem:[%s9 + $0xc] sm:$0xf]
    %v5480 = vld [vmem:[%s9 + $0x10] sm:$0xf]
    %v5481 = vld [vmem:[%s9 + $0x14] sm:$0xf]
    %v5482 = vld [vmem:[%s9 + $0x18] sm:$0xf]
    %v5483 = vld [vmem:[%s9 + $0x1c] sm:$0xf]
    %v5484 = vld [vmem:[%s9 + $0x20] sm:$0xf]
    %v5485 = vld [vmem:[%s9 + $0x24] sm:$0xf]
    %v5486 = vld [vmem:[%s9 + $0x28] sm:$0xf]
    %v5487 = vld [vmem:[%s9 + $0x2c] sm:$0xf]
    %v5488 = vld [vmem:[%s9 + $0x30] sm:$0xf]
    %v5489 = vld [vmem:[%s9 + $0x34] sm:$0xf]
    %v5490 = vld [vmem:[%s9 + $0x38] sm:$0xf]
    %v5491 = vld [vmem:[%s9 + $0x3c] sm:$0xf]
    %v5492 = vld [vmem:[%s9 + $0x40] sm:$0xf]
    %v5493 = vld [vmem:[%s9 + $0x44] sm:$0x3]
    %v5494 = vld [vmem:[#allocation2] sm:$0xcc]
    %v5495 = vld [vmem:[#allocation2 + $0x38] sm:$0x33]
    %s5496 = scalar_lea.vmem %s9, 72
    %v5497 = vld [vmem:[%s5496] sm:$0xf]
    %v5498 = vld [vmem:[%s5496 + $0x4] sm:$0xf]
    %v5499 = vld [vmem:[%s5496 + $0x8] sm:$0xf]
    %v5500 = vld [vmem:[%s5496 + $0xc] sm:$0xf]
    %v5501 = vld [vmem:[%s5496 + $0x10] sm:$0xf]
    %v5502 = vld [vmem:[%s5496 + $0x14] sm:$0xf]
    %v5503 = vld [vmem:[%s5496 + $0x18] sm:$0xf]
    %v5504 = vld [vmem:[%s5496 + $0x1c] sm:$0xf]
    %v5505 = vld [vmem:[%s5496 + $0x20] sm:$0xf]
    %v5506 = vld [vmem:[%s5496 + $0x24] sm:$0xf]
    %v5507 = vld [vmem:[%s5496 + $0x28] sm:$0xf]
    %v5508 = vld [vmem:[%s5496 + $0x2c] sm:$0xf]
    %v5509 = vld [vmem:[%s5496 + $0x30] sm:$0xf]
    %v5510 = vld [vmem:[%s5496 + $0x34] sm:$0xf]
    %v5511 = vld [vmem:[%s5496 + $0x38] sm:$0xf]
    %v5512 = vld [vmem:[%s5496 + $0x3c] sm:$0xf]
    %v5513 = vld [vmem:[%s5496 + $0x40] sm:$0xf]
    %v5514 = vld [vmem:[%s5496 + $0x44] sm:$0x3]
    %v5523 = vunpack.c.l.b16 %v5494
    %v5524 = vunpack.c.h.b16 %v5494
    %v5525 = vunpack.c.l.b16 %v5470
    %v5526 = vunpack.c.h.b16 %v5470
    %v5527 = vunpack.c.l.b16 %v5471
    %v5528 = vunpack.c.h.b16 %v5471
    %v5529 = vunpack.c.l.b16 %v5472
    %v5530 = vunpack.c.h.b16 %v5472
    %v5531 = vunpack.c.l.b16 %v5473
    %v5532 = vunpack.c.h.b16 %v5473
    %v5533 = vunpack.c.l.b16 %v5474
    %v5534 = vunpack.c.h.b16 %v5474
    %v5535 = vunpack.c.l.b16 %v5475
    %v5536 = vunpack.c.h.b16 %v5475
    %v5537 = vunpack.c.l.b16 %v5495
    %v5538 = vunpack.c.h.b16 %v5495
    %v5539 = vpack.c.b16 %v5525, %v5523
    %v5540 = vpack.c.b16 %v5526, %v5524
    %v5541 = vpack.c.b16 %v5529, %v5527
    %v5542 = vpack.c.b16 %v5530, %v5528
    %v5543 = vpack.c.b16 %v5533, %v5531
    %v5544 = vpack.c.b16 %v5534, %v5532
    %v5545 = vpack.c.b16 %v5537, %v5535
    %v5546 = vpack.c.b16 %v5538, %v5536
    %v5547 = vrot.slane %v5539, 2
    %v5548 = vrot.slane %v5541, 2
    %v5549 = vsel %vm590, %v5547, %v5548
    %v5550 = vrot.slane %v5540, 2
    %v5551 = vrot.slane %v5542, 2
    %v5552 = vsel %vm590, %v5550, %v5551
    %v5553 = vrot.slane %v5543, 2
    %v5554 = vsel %vm590, %v5548, %v5553
    %v5555 = vrot.slane %v5544, 2
    %v5556 = vsel %vm590, %v5551, %v5555
    %v5557 = vrot.slane %v5545, 2
    %v5558 = vsel %vm590, %v5553, %v5557
    %v5559 = vrot.slane %v5546, 2
    %v5560 = vsel %vm590, %v5555, %v5559
    %v5583 = vunpack.c.l.b16 %v5497
    %v5584 = vunpack.c.l.b16 %v5498
    %v5585 = vunpack.c.l.b16 %v5499
    %v5586 = vunpack.c.l.b16 %v5500
    %v5587 = vunpack.c.l.b16 %v5501
    %v5588 = vunpack.c.l.b16 %v5502
    %v5589 = vunpack.c.l.b16 %v5503
    %v5590 = vunpack.c.l.b16 %v5504
    %v5591 = vunpack.c.l.b16 %v5505
    %v5592 = vunpack.c.l.b16 %v5506
    %v5593 = vunpack.c.l.b16 %v5507
    %v5594 = vunpack.c.l.b16 %v5508
    %v5595 = vunpack.c.l.b16 %v5509
    %v5596 = vunpack.c.l.b16 %v5510
    %v5597 = vunpack.c.l.b16 %v5511
    %v5598 = vunpack.c.l.b16 %v5512
    %v5599 = vunpack.c.l.b16 %v5513
    %v5600 = vunpack.c.l.b16 %v5514
    %v5601 = vpack.c.b16 %v5584, %v5583
    %v5602 = vpack.c.b16 %v5586, %v5585
    %v5603 = vpack.c.b16 %v5588, %v5587
    %v5604 = vpack.c.b16 %v5590, %v5589
    %v5605 = vpack.c.b16 %v5592, %v5591
    %v5606 = vpack.c.b16 %v5594, %v5593
    %v5607 = vpack.c.b16 %v5596, %v5595
    %v5608 = vpack.c.b16 %v5598, %v5597
    %v5609 = vpack.c.b16 %v5600, %v5599
    %v5619 = vsel %vm4778, %v5552, 0
    %v5622 = vsel %vm4778, %v5556, 0
    %v5625 = vsel %vm4778, %v5560, 0
    %v5628 = vsel %vm4778, %v5559, 0
    %v5631 = vsel %vm164, %v5609, 0
    %5633 = vmatpush.bf16.msra.mxu0 %v5608
    %5634 = vmatpush.bf16.msra.mxu0 %v5607
    %5635 = vmatpush.bf16.msra.mxu0 %v5606
    %5636 = vmatpush.bf16.msra.mxu0 %v5605
    %5637 = vmatpush.bf16.msra.mxu0 %v5604
    %5638 = vmatpush.bf16.msra.mxu0 %v5603
    %5639 = vmatpush.bf16.msra.mxu0 %v5602
    %5640 = vmatpush.bf16.msra.mxu0 %v5601
    %5641 = vmatmul.bf16.gmra.mxu0 %v5549
    %v5642 = vpop.f32.mrf.mxu0
    %v5643 = vadd.f32 0.0, %v5642
    %v5644 = vpop.f32.mrf.mxu0
    %v5645 = vadd.f32 0.0, %v5644
    %5646 = vmatmul.bf16.gmra.mxu0 %v5554
    %v5647 = vpop.f32.mrf.mxu0
    %v5648 = vadd.f32 0.0, %v5647
    %v5649 = vpop.f32.mrf.mxu0
    %v5650 = vadd.f32 0.0, %v5649
    %5651 = vmatmul.bf16.gmra.mxu0 %v5558
    %v5652 = vpop.f32.mrf.mxu0
    %v5653 = vadd.f32 0.0, %v5652
    %v5654 = vpop.f32.mrf.mxu0
    %v5655 = vadd.f32 0.0, %v5654
    %5656 = vmatmul.bf16.gmra.mxu0 %v5557
    %v5657 = vpop.f32.mrf.mxu0
    %v5658 = vadd.f32 0.0, %v5657
    %v5659 = vpop.f32.mrf.mxu0
    %5660 = vdwg.mxu0
    %5661 = vmatpush.bf16.msra.mxu0 0
    %5662 = vmatpush.bf16.msra.mxu0 0
    %5663 = vmatpush.bf16.msra.mxu0 0
    %5664 = vmatpush.bf16.msra.mxu0 0
    %5665 = vmatpush.bf16.msra.mxu0 0
    %5666 = vmatpush.bf16.msra.mxu0 0
    %5667 = vmatpush.bf16.msra.mxu0 0
    %5668 = vmatpush.bf16.msra.mxu0 %v5631
    %5669 = vmatmul.bf16.gmra.mxu0 %v5619
    %v5670 = vpop.f32.mrf.mxu0
    %v5671 = vadd.f32 %v5643, %v5670
    %v5672 = vpop.f32.mrf.mxu0
    %v5673 = vadd.f32 %v5645, %v5672
    %5674 = vmatmul.bf16.gmra.mxu0 %v5622
    %v5675 = vpop.f32.mrf.mxu0
    %v5676 = vadd.f32 %v5648, %v5675
    %v5677 = vpop.f32.mrf.mxu0
    %v5678 = vadd.f32 %v5650, %v5677
    %5679 = vmatmul.bf16.gmra.mxu0 %v5625
    %v5680 = vpop.f32.mrf.mxu0
    %v5681 = vadd.f32 %v5653, %v5680
    %v5682 = vpop.f32.mrf.mxu0
    %v5683 = vadd.f32 %v5655, %v5682
    %5684 = vmatmul.bf16.gmra.mxu0 %v5628
    %v5685 = vpop.f32.mrf.mxu0
    %v5686 = vadd.f32 %v5658, %v5685
    %v5687 = vpop.f32.mrf.mxu0
    %5688 = vdwg.mxu0
    %v5690 = vunpack.c.l.b16 %v5469
    %v5691 = vunpack.c.h.b16 %v5469
    %v5692 = vpack.c.b16 %v5525, %v5690
    %v5693 = vpack.c.b16 %v5526, %v5691
    %v5694 = vpack.c.b16 %v5535, %v5535
    %v5695 = vpack.c.b16 %v5536, %v5536
    %v5718 = vunpack.c.l.b16 %v5476
    %v5719 = vunpack.c.l.b16 %v5477
    %v5720 = vunpack.c.l.b16 %v5478
    %v5721 = vunpack.c.l.b16 %v5479
    %v5722 = vunpack.c.l.b16 %v5480
    %v5723 = vunpack.c.l.b16 %v5481
    %v5724 = vunpack.c.l.b16 %v5482
    %v5725 = vunpack.c.l.b16 %v5483
    %v5726 = vunpack.c.l.b16 %v5484
    %v5727 = vunpack.c.l.b16 %v5485
    %v5728 = vunpack.c.l.b16 %v5486
    %v5729 = vunpack.c.l.b16 %v5487
    %v5730 = vunpack.c.l.b16 %v5488
    %v5731 = vunpack.c.l.b16 %v5489
    %v5732 = vunpack.c.l.b16 %v5490
    %v5733 = vunpack.c.l.b16 %v5491
    %v5734 = vunpack.c.l.b16 %v5492
    %v5735 = vunpack.c.l.b16 %v5493
    %v5736 = vpack.c.b16 %v5719, %v5718
    %v5737 = vpack.c.b16 %v5721, %v5720
    %v5738 = vpack.c.b16 %v5723, %v5722
    %v5739 = vpack.c.b16 %v5725, %v5724
    %v5740 = vpack.c.b16 %v5727, %v5726
    %v5741 = vpack.c.b16 %v5729, %v5728
    %v5742 = vpack.c.b16 %v5731, %v5730
    %v5743 = vpack.c.b16 %v5733, %v5732
    %v5744 = vpack.c.b16 %v5735, %v5734
    %v5754 = vsel %vm4778, %v5693, 0
    %v5757 = vsel %vm4778, %v5542, 0
    %v5760 = vsel %vm4778, %v5544, 0
    %v5763 = vsel %vm4778, %v5695, 0
    %v5766 = vsel %vm164, %v5744, 0
    %5768 = vmatpush.bf16.msra.mxu0 %v5743
    %5769 = vmatpush.bf16.msra.mxu0 %v5742
    %5770 = vmatpush.bf16.msra.mxu0 %v5741
    %5771 = vmatpush.bf16.msra.mxu0 %v5740
    %5772 = vmatpush.bf16.msra.mxu0 %v5739
    %5773 = vmatpush.bf16.msra.mxu0 %v5738
    %5774 = vmatpush.bf16.msra.mxu0 %v5737
    %5775 = vmatpush.bf16.msra.mxu0 %v5736
    %5776 = vmatmul.bf16.gmra.mxu0 %v5692
    %v5777 = vpop.f32.mrf.mxu0
    %v5778 = vadd.f32 %v5671, %v5777
    %v5779 = vpop.f32.mrf.mxu0
    %v5780 = vadd.f32 %v5673, %v5779
    %5781 = vmatmul.bf16.gmra.mxu0 %v5541
    %v5782 = vpop.f32.mrf.mxu0
    %v5783 = vadd.f32 %v5676, %v5782
    %v5784 = vpop.f32.mrf.mxu0
    %v5785 = vadd.f32 %v5678, %v5784
    %5786 = vmatmul.bf16.gmra.mxu0 %v5543
    %v5787 = vpop.f32.mrf.mxu0
    %v5788 = vadd.f32 %v5681, %v5787
    %v5789 = vpop.f32.mrf.mxu0
    %v5790 = vadd.f32 %v5683, %v5789
    %5791 = vmatmul.bf16.gmra.mxu0 %v5694
    %v5792 = vpop.f32.mrf.mxu0
    %v5793 = vadd.f32 %v5686, %v5792
    %v5794 = vpop.f32.mrf.mxu0
    %5795 = vdwg.mxu0
    %5796 = vmatpush.bf16.msra.mxu0 0
    %5797 = vmatpush.bf16.msra.mxu0 0
    %5798 = vmatpush.bf16.msra.mxu0 0
    %5799 = vmatpush.bf16.msra.mxu0 0
    %5800 = vmatpush.bf16.msra.mxu0 0
    %5801 = vmatpush.bf16.msra.mxu0 0
    %5802 = vmatpush.bf16.msra.mxu0 0
    %5803 = vmatpush.bf16.msra.mxu0 %v5766
    %5804 = vmatmul.bf16.gmra.mxu0 %v5754
    %v5805 = vpop.f32.mrf.mxu0
    %v5806 = vadd.f32 %v5778, %v5805
    %v5807 = vpop.f32.mrf.mxu0
    %v5808 = vadd.f32 %v5780, %v5807
    %5809 = vmatmul.bf16.gmra.mxu0 %v5757
    %v5810 = vpop.f32.mrf.mxu0
    %v5811 = vadd.f32 %v5783, %v5810
    %v5812 = vpop.f32.mrf.mxu0
    %v5813 = vadd.f32 %v5785, %v5812
    %5814 = vmatmul.bf16.gmra.mxu0 %v5760
    %v5815 = vpop.f32.mrf.mxu0
    %v5816 = vadd.f32 %v5788, %v5815
    %v5817 = vpop.f32.mrf.mxu0
    %v5818 = vadd.f32 %v5790, %v5817
    %5819 = vmatmul.bf16.gmra.mxu0 %v5763
    %v5820 = vpop.f32.mrf.mxu0
    %v5821 = vadd.f32 %v5793, %v5820
    %v5822 = vpop.f32.mrf.mxu0
    %5823 = vdwg.mxu0
    %v5824 = vld [vmem:[#allocation2 + $0x38] sm:$0xff]
    %s5825 = scalar_lea.vmem %s9, 144
    %v5826 = vld [vmem:[%s5825] sm:$0xf]
    %v5827 = vld [vmem:[%s5825 + $0x4] sm:$0xf]
    %v5828 = vld [vmem:[%s5825 + $0x8] sm:$0xf]
    %v5829 = vld [vmem:[%s5825 + $0xc] sm:$0xf]
    %v5830 = vld [vmem:[%s5825 + $0x10] sm:$0xf]
    %v5831 = vld [vmem:[%s5825 + $0x14] sm:$0xf]
    %v5832 = vld [vmem:[%s5825 + $0x18] sm:$0xf]
    %v5833 = vld [vmem:[%s5825 + $0x1c] sm:$0xf]
    %v5834 = vld [vmem:[%s5825 + $0x20] sm:$0xf]
    %v5835 = vld [vmem:[%s5825 + $0x24] sm:$0xf]
    %v5836 = vld [vmem:[%s5825 + $0x28] sm:$0xf]
    %v5837 = vld [vmem:[%s5825 + $0x2c] sm:$0xf]
    %v5838 = vld [vmem:[%s5825 + $0x30] sm:$0xf]
    %v5839 = vld [vmem:[%s5825 + $0x34] sm:$0xf]
    %v5840 = vld [vmem:[%s5825 + $0x38] sm:$0xf]
    %v5841 = vld [vmem:[%s5825 + $0x3c] sm:$0xf]
    %v5842 = vld [vmem:[%s5825 + $0x40] sm:$0xf]
    %v5843 = vld [vmem:[%s5825 + $0x44] sm:$0x3]
    %v5845 = vunpack.c.l.b16 %v5824
    %v5846 = vunpack.c.h.b16 %v5824
    %v5847 = vpack.c.b16 %v5527, %v5525
    %v5848 = vpack.c.b16 %v5528, %v5526
    %v5849 = vpack.c.b16 %v5531, %v5529
    %v5850 = vpack.c.b16 %v5532, %v5530
    %v5851 = vpack.c.b16 %v5535, %v5533
    %v5852 = vpack.c.b16 %v5536, %v5534
    %v5853 = vpack.c.b16 %v5845, %v5845
    %v5854 = vpack.c.b16 %v5846, %v5846
    %v5877 = vunpack.c.l.b16 %v5826
    %v5878 = vunpack.c.l.b16 %v5827
    %v5879 = vunpack.c.l.b16 %v5828
    %v5880 = vunpack.c.l.b16 %v5829
    %v5881 = vunpack.c.l.b16 %v5830
    %v5882 = vunpack.c.l.b16 %v5831
    %v5883 = vunpack.c.l.b16 %v5832
    %v5884 = vunpack.c.l.b16 %v5833
    %v5885 = vunpack.c.l.b16 %v5834
    %v5886 = vunpack.c.l.b16 %v5835
    %v5887 = vunpack.c.l.b16 %v5836
    %v5888 = vunpack.c.l.b16 %v5837
    %v5889 = vunpack.c.l.b16 %v5838
    %v5890 = vunpack.c.l.b16 %v5839
    %v5891 = vunpack.c.l.b16 %v5840
    %v5892 = vunpack.c.l.b16 %v5841
    %v5893 = vunpack.c.l.b16 %v5842
    %v5894 = vunpack.c.l.b16 %v5843
    %v5895 = vpack.c.b16 %v5878, %v5877
    %v5896 = vpack.c.b16 %v5880, %v5879
    %v5897 = vpack.c.b16 %v5882, %v5881
    %v5898 = vpack.c.b16 %v5884, %v5883
    %v5899 = vpack.c.b16 %v5886, %v5885
    %v5900 = vpack.c.b16 %v5888, %v5887
    %v5901 = vpack.c.b16 %v5890, %v5889
    %v5902 = vpack.c.b16 %v5892, %v5891
    %v5903 = vpack.c.b16 %v5894, %v5893
    %v5913 = vsel %vm4778, %v5848, 0
    %v5916 = vsel %vm4778, %v5850, 0
    %v5919 = vsel %vm4778, %v5852, 0
    %v5922 = vsel %vm4778, %v5854, 0
    %v5925 = vsel %vm164, %v5903, 0
    %5927 = vmatpush.bf16.msra.mxu0 %v5902
    %5928 = vmatpush.bf16.msra.mxu0 %v5901
    %5929 = vmatpush.bf16.msra.mxu0 %v5900
    %5930 = vmatpush.bf16.msra.mxu0 %v5899
    %5931 = vmatpush.bf16.msra.mxu0 %v5898
    %5932 = vmatpush.bf16.msra.mxu0 %v5897
    %5933 = vmatpush.bf16.msra.mxu0 %v5896
    %5934 = vmatpush.bf16.msra.mxu0 %v5895
    %5935 = vmatmul.bf16.gmra.mxu0 %v5847
    %v5936 = vpop.f32.mrf.mxu0
    %v5937 = vadd.f32 0.0, %v5936
    %v5938 = vpop.f32.mrf.mxu0
    %v5939 = vadd.f32 0.0, %v5938
    %5940 = vmatmul.bf16.gmra.mxu0 %v5849
    %v5941 = vpop.f32.mrf.mxu0
    %v5942 = vadd.f32 0.0, %v5941
    %v5943 = vpop.f32.mrf.mxu0
    %v5944 = vadd.f32 0.0, %v5943
    %5945 = vmatmul.bf16.gmra.mxu0 %v5851
    %v5946 = vpop.f32.mrf.mxu0
    %v5947 = vadd.f32 0.0, %v5946
    %v5948 = vpop.f32.mrf.mxu0
    %v5949 = vadd.f32 0.0, %v5948
    %5950 = vmatmul.bf16.gmra.mxu0 %v5853
    %v5951 = vpop.f32.mrf.mxu0
    %v5952 = vadd.f32 0.0, %v5951
    %v5953 = vpop.f32.mrf.mxu0
    %5954 = vdwg.mxu0
    %5955 = vmatpush.bf16.msra.mxu0 0
    %5956 = vmatpush.bf16.msra.mxu0 0
    %5957 = vmatpush.bf16.msra.mxu0 0
    %5958 = vmatpush.bf16.msra.mxu0 0
    %5959 = vmatpush.bf16.msra.mxu0 0
    %5960 = vmatpush.bf16.msra.mxu0 0
    %5961 = vmatpush.bf16.msra.mxu0 0
    %5962 = vmatpush.bf16.msra.mxu0 %v5925
    %5963 = vmatmul.bf16.gmra.mxu0 %v5913
    %v5964 = vpop.f32.mrf.mxu0
    %v5965 = vadd.f32 %v5937, %v5964
    %v5966 = vpop.f32.mrf.mxu0
    %v5967 = vadd.f32 %v5939, %v5966
    %5968 = vmatmul.bf16.gmra.mxu0 %v5916
    %v5969 = vpop.f32.mrf.mxu0
    %v5970 = vadd.f32 %v5942, %v5969
    %v5971 = vpop.f32.mrf.mxu0
    %v5972 = vadd.f32 %v5944, %v5971
    %5973 = vmatmul.bf16.gmra.mxu0 %v5919
    %v5974 = vpop.f32.mrf.mxu0
    %v5975 = vadd.f32 %v5947, %v5974
    %v5976 = vpop.f32.mrf.mxu0
    %v5977 = vadd.f32 %v5949, %v5976
    %5978 = vmatmul.bf16.gmra.mxu0 %v5922
    %v5979 = vpop.f32.mrf.mxu0
    %v5980 = vadd.f32 %v5952, %v5979
    %v5981 = vpop.f32.mrf.mxu0
    %5982 = vdwg.mxu0
    %v5983 = vadd.f32 %v5806, %v5965
    %v5984 = vadd.f32 %v5808, %v5967
    %v5985 = vadd.f32 %v5811, %v5970
    %v5986 = vadd.f32 %v5813, %v5972
    %v5987 = vadd.f32 %v5816, %v5975
    %v5988 = vadd.f32 %v5818, %v5977
    %v5989 = vadd.f32 %v5821, %v5980
    %v5990 = vld [vmem:[#allocation2 + $0x8] sm:$0xcc]
    %v5991 = vld [vmem:[#allocation2 + $0x10] sm:$0xff]
    %v5992 = vld [vmem:[#allocation2 + $0x18] sm:$0xff]
    %v5993 = vld [vmem:[#allocation2 + $0x20] sm:$0xff]
    %v5994 = vld [vmem:[#allocation2 + $0x28] sm:$0xff]
    %v5995 = vld [vmem:[#allocation2 + $0x30] sm:$0xff]
    %v5996 = vld [vmem:[#allocation2 + $0x38] sm:$0xff]
    %v5997 = vld [vmem:[#allocation2 + $0x40] sm:$0x33]
    %s5998 = scalar_lea.vmem %s9, 216
    %v5999 = vld [vmem:[%s5998] sm:$0xf]
    %v6000 = vld [vmem:[%s5998 + $0x4] sm:$0xf]
    %v6001 = vld [vmem:[%s5998 + $0x8] sm:$0xf]
    %v6002 = vld [vmem:[%s5998 + $0xc] sm:$0xf]
    %v6003 = vld [vmem:[%s5998 + $0x10] sm:$0xf]
    %v6004 = vld [vmem:[%s5998 + $0x14] sm:$0xf]
    %v6005 = vld [vmem:[%s5998 + $0x18] sm:$0xf]
    %v6006 = vld [vmem:[%s5998 + $0x1c] sm:$0xf]
    %v6007 = vld [vmem:[%s5998 + $0x20] sm:$0xf]
    %v6008 = vld [vmem:[%s5998 + $0x24] sm:$0xf]
    %v6009 = vld [vmem:[%s5998 + $0x28] sm:$0xf]
    %v6010 = vld [vmem:[%s5998 + $0x2c] sm:$0xf]
    %v6011 = vld [vmem:[%s5998 + $0x30] sm:$0xf]
    %v6012 = vld [vmem:[%s5998 + $0x34] sm:$0xf]
    %v6013 = vld [vmem:[%s5998 + $0x38] sm:$0xf]
    %v6014 = vld [vmem:[%s5998 + $0x3c] sm:$0xf]
    %v6015 = vld [vmem:[%s5998 + $0x40] sm:$0xf]
    %v6016 = vld [vmem:[%s5998 + $0x44] sm:$0x3]
    %v6025 = vunpack.c.l.b16 %v5990
    %v6026 = vunpack.c.h.b16 %v5990
    %v6027 = vunpack.c.l.b16 %v5991
    %v6028 = vunpack.c.h.b16 %v5991
    %v6029 = vunpack.c.l.b16 %v5992
    %v6030 = vunpack.c.h.b16 %v5992
    %v6031 = vunpack.c.l.b16 %v5993
    %v6032 = vunpack.c.h.b16 %v5993
    %v6033 = vunpack.c.l.b16 %v5994
    %v6034 = vunpack.c.h.b16 %v5994
    %v6035 = vunpack.c.l.b16 %v5995
    %v6036 = vunpack.c.h.b16 %v5995
    %v6037 = vunpack.c.l.b16 %v5996
    %v6038 = vunpack.c.h.b16 %v5996
    %v6039 = vunpack.c.l.b16 %v5997
    %v6040 = vunpack.c.h.b16 %v5997
    %v6041 = vpack.c.b16 %v6027, %v6025
    %v6042 = vpack.c.b16 %v6028, %v6026
    %v6043 = vpack.c.b16 %v6031, %v6029
    %v6044 = vpack.c.b16 %v6032, %v6030
    %v6045 = vpack.c.b16 %v6035, %v6033
    %v6046 = vpack.c.b16 %v6036, %v6034
    %v6047 = vpack.c.b16 %v6039, %v6037
    %v6048 = vpack.c.b16 %v6040, %v6038
    %v6049 = vrot.slane %v6041, 2
    %v6050 = vrot.slane %v6043, 2
    %v6051 = vsel %vm590, %v6049, %v6050
    %v6052 = vrot.slane %v6042, 2
    %v6053 = vrot.slane %v6044, 2
    %v6054 = vsel %vm590, %v6052, %v6053
    %v6055 = vrot.slane %v6045, 2
    %v6056 = vsel %vm590, %v6050, %v6055
    %v6057 = vrot.slane %v6046, 2
    %v6058 = vsel %vm590, %v6053, %v6057
    %v6059 = vrot.slane %v6047, 2
    %v6060 = vsel %vm590, %v6055, %v6059
    %v6061 = vrot.slane %v6048, 2
    %v6062 = vsel %vm590, %v6057, %v6061
    %v6085 = vunpack.c.l.b16 %v5999
    %v6086 = vunpack.c.l.b16 %v6000
    %v6087 = vunpack.c.l.b16 %v6001
    %v6088 = vunpack.c.l.b16 %v6002
    %v6089 = vunpack.c.l.b16 %v6003
    %v6090 = vunpack.c.l.b16 %v6004
    %v6091 = vunpack.c.l.b16 %v6005
    %v6092 = vunpack.c.l.b16 %v6006
    %v6093 = vunpack.c.l.b16 %v6007
    %v6094 = vunpack.c.l.b16 %v6008
    %v6095 = vunpack.c.l.b16 %v6009
    %v6096 = vunpack.c.l.b16 %v6010
    %v6097 = vunpack.c.l.b16 %v6011
    %v6098 = vunpack.c.l.b16 %v6012
    %v6099 = vunpack.c.l.b16 %v6013
    %v6100 = vunpack.c.l.b16 %v6014
    %v6101 = vunpack.c.l.b16 %v6015
    %v6102 = vunpack.c.l.b16 %v6016
    %v6103 = vpack.c.b16 %v6086, %v6085
    %v6104 = vpack.c.b16 %v6088, %v6087
    %v6105 = vpack.c.b16 %v6090, %v6089
    %v6106 = vpack.c.b16 %v6092, %v6091
    %v6107 = vpack.c.b16 %v6094, %v6093
    %v6108 = vpack.c.b16 %v6096, %v6095
    %v6109 = vpack.c.b16 %v6098, %v6097
    %v6110 = vpack.c.b16 %v6100, %v6099
    %v6111 = vpack.c.b16 %v6102, %v6101
    %v6121 = vsel %vm4778, %v6054, 0
    %v6124 = vsel %vm4778, %v6058, 0
    %v6127 = vsel %vm4778, %v6062, 0
    %v6130 = vsel %vm4778, %v6061, 0
    %v6133 = vsel %vm164, %v6111, 0
    %6135 = vmatpush.bf16.msra.mxu0 %v6110
    %6136 = vmatpush.bf16.msra.mxu0 %v6109
    %6137 = vmatpush.bf16.msra.mxu0 %v6108
    %6138 = vmatpush.bf16.msra.mxu0 %v6107
    %6139 = vmatpush.bf16.msra.mxu0 %v6106
    %6140 = vmatpush.bf16.msra.mxu0 %v6105
    %6141 = vmatpush.bf16.msra.mxu0 %v6104
    %6142 = vmatpush.bf16.msra.mxu0 %v6103
    %6143 = vmatmul.bf16.gmra.mxu0 %v6051
    %v6144 = vpop.f32.mrf.mxu0
    %v6145 = vadd.f32 0.0, %v6144
    %v6146 = vpop.f32.mrf.mxu0
    %v6147 = vadd.f32 0.0, %v6146
    %6148 = vmatmul.bf16.gmra.mxu0 %v6056
    %v6149 = vpop.f32.mrf.mxu0
    %v6150 = vadd.f32 0.0, %v6149
    %v6151 = vpop.f32.mrf.mxu0
    %v6152 = vadd.f32 0.0, %v6151
    %6153 = vmatmul.bf16.gmra.mxu0 %v6060
    %v6154 = vpop.f32.mrf.mxu0
    %v6155 = vadd.f32 0.0, %v6154
    %v6156 = vpop.f32.mrf.mxu0
    %v6157 = vadd.f32 0.0, %v6156
    %6158 = vmatmul.bf16.gmra.mxu0 %v6059
    %v6159 = vpop.f32.mrf.mxu0
    %v6160 = vadd.f32 0.0, %v6159
    %v6161 = vpop.f32.mrf.mxu0
    %6162 = vdwg.mxu0
    %6163 = vmatpush.bf16.msra.mxu0 0
    %6164 = vmatpush.bf16.msra.mxu0 0
    %6165 = vmatpush.bf16.msra.mxu0 0
    %6166 = vmatpush.bf16.msra.mxu0 0
    %6167 = vmatpush.bf16.msra.mxu0 0
    %6168 = vmatpush.bf16.msra.mxu0 0
    %6169 = vmatpush.bf16.msra.mxu0 0
    %6170 = vmatpush.bf16.msra.mxu0 %v6133
    %6171 = vmatmul.bf16.gmra.mxu0 %v6121
    %v6172 = vpop.f32.mrf.mxu0
    %v6173 = vadd.f32 %v6145, %v6172
    %v6174 = vpop.f32.mrf.mxu0
    %v6175 = vadd.f32 %v6147, %v6174
    %6176 = vmatmul.bf16.gmra.mxu0 %v6124
    %v6177 = vpop.f32.mrf.mxu0
    %v6178 = vadd.f32 %v6150, %v6177
    %v6179 = vpop.f32.mrf.mxu0
    %v6180 = vadd.f32 %v6152, %v6179
    %6181 = vmatmul.bf16.gmra.mxu0 %v6127
    %v6182 = vpop.f32.mrf.mxu0
    %v6183 = vadd.f32 %v6155, %v6182
    %v6184 = vpop.f32.mrf.mxu0
    %v6185 = vadd.f32 %v6157, %v6184
    %6186 = vmatmul.bf16.gmra.mxu0 %v6130
    %v6187 = vpop.f32.mrf.mxu0
    %v6188 = vadd.f32 %v6160, %v6187
    %v6189 = vpop.f32.mrf.mxu0
    %6190 = vdwg.mxu0
    %v6191 = vadd.f32 %v5983, %v6173
    %v6192 = vadd.f32 %v5984, %v6175
    %v6193 = vadd.f32 %v5985, %v6178
    %v6194 = vadd.f32 %v5986, %v6180
    %v6195 = vadd.f32 %v5987, %v6183
    %v6196 = vadd.f32 %v5988, %v6185
    %v6197 = vadd.f32 %v5989, %v6188
    %v6198 = vlaneseq
    %v6199 = vand.u32 %v6198, 127
    %v6200 = vmul.u32 %v932, 28
    %vm6201 = vcmp.eq.s32.totalorder %v6199, %v6200
    %v6202 = vsel %vm6201, 1, 0
    %v6203 = vcvt.s32.f32 %v6202
    %v6204 = vld [vmem:[%s10] sm:$0x1]
    %v6206 = vperm.slane %v6204, 0
    %vm6208 = vcmask 457728
    %v6210 = vsel %vm6208, %v6203, 0
    %6212 = vmatpush.msra.mxu0 0.0
    %6213 = vmatpush.msra.mxu0 0.0
    %6214 = vmatpush.msra.mxu0 0.0
    %6215 = vmatpush.msra.mxu0 0.0
    %6216 = vmatpush.msra.mxu0 0.0
    %6217 = vmatpush.msra.mxu0 0.0
    %6218 = vmatpush.msra.mxu0 0.0
    %6219 = vmatpush.msra.mxu0 0.0
    %6220 = vmatpush.msra.mxu0 0.0
    %6221 = vmatpush.msra.mxu0 %v6197
    %6222 = vmatpush.msra.mxu0 %v6196
    %6223 = vmatpush.msra.mxu0 %v6195
    %6224 = vmatpush.msra.mxu0 %v6194
    %6225 = vmatpush.msra.mxu0 %v6193
    %6226 = vmatpush.msra.mxu0 %v6192
    %6227 = vmatpush.msra.mxu0 %v6191
    %6228 = vmatmul.f32.gmra.mxu0 %v6210
    %v6229 = vpop.f32.mrf.mxu0
    %v6230 = vadd.f32 %v6206, %v6229
    %6231 = vdwg.mxu0
    %vm6232 = vcmask 74752
    %6233 = vst.msk [vmem:[#allocation4] sm:$0x3] %vm6232, %v6230
    // Predicated region
    $region46: #{net_forward.1} parent=1 // pred_check
      _
    $region47: #{net_forward.1} parent=1 // pred_check_branch
      %6235 = sbr.rel (0) target = $region49
    $region48: #{net_forward.1} parent=1 // pred_region
      %6237 = vsyncadd [#allocation5], 0
      %s6239 = sshll.u32 [#allocation4], 4
      %s6240 = int_to_ptr.vmem [resolvable:$true] %s6239
      %s6241 = sshll.u32 %s11, 4
      %s6242 = int_to_ptr.hbm [resolvable:$true] %s6241
      %6244 = dma.vmem_to_hbm [thread:$0]  %s6240, 32, %s6242, [#allocation5]
    $region49: #{net_forward.1} parent=1 // pred_fallthru
      _
    // Predicated region
    $region50: #{net_forward.1} parent=1 // pred_check
      _
    $region51: #{net_forward.1} parent=1 // pred_check_branch
      %6246 = sbr.rel (0) target = $region53
    $region52: #{net_forward.1} parent=1 // pred_region
      %6248 = dma.done [#allocation5], 32
    $region53: #{net_forward.1} parent=1 // pred_fallthru
      _
    %6249 = vsyncpa [#allocation5], 1

</llo_original>
